<compile_context>
chip_gen: v7x
topology: tpu7x:2x2x1
jax: 0.10.0
libtpu: 0.0.40
codegen_flags: <defaults>
</compile_context>

<pallas_src>
import functools

import jax
import jax.numpy as jnp
from jax.experimental import pallas as pl
from jax.experimental.pallas import tpu as pltpu


def _round_up(a, m):
    return (a + m - 1) // m * m


# ------------------------------- Pallas kernel --------------------------------
def _double_conv_kernel(mask_ref, x_ref, w1_ref, w2_ref, o_ref, k_ref, *,
                        r1, r2, k1, k2, pp_pad, hw_p, w_p, inv_count):
    """Fused Conv3d->InstanceNorm->ReLU (x2) for one batch element.

    mask_ref : (1, pp_pad)        f32   1.0 on valid (interior) voxels, 0.0 on halo + tail
    x_ref    : (1, r1, pp_pad)    f32   zero-padded input, spatial flattened (d,h,w)-major,
                                        channels zero-padded to r1
    w1_ref   : (r2, 27*r1)        bf16  tap-major, channel-minor columns, zero-padded
    w2_ref   : (r2, 27*r2)        bf16
    o_ref    : (1, r2, pp_pad)    f32   output on the padded lattice (halo/tail = 0)
    k_ref    : (max(k1,k2), pp_pad) bf16 VMEM scratch holding the K-stacked shifted taps
    """
    mask = mask_ref[...]                                       # (1, pp_pad) f32

    # Tap lane-shifts in the same (kd, kh, kw) order as the weight columns.
    shifts = [od * hw_p + oh * w_p + ow
              for od in (-1, 0, 1) for oh in (-1, 0, 1) for ow in (-1, 0, 1)]

    def fill_taps(x, rows):
        # x: (rows, pp_pad) f32.  One XLU roll + one aligned 8k-row store per tap.
        # Circular wrap only touches halo / tail lanes, which are masked downstream.
        for tap, s in enumerate(shifts):
            amt = (-s) % pp_pad                                # roll(x, a)[j] = x[j - a]
            xs = pltpu.roll(x, amt, 1) if amt else x
            k_ref[tap * rows:(tap + 1) * rows, :] = xs.astype(jnp.bfloat16)

    def inorm_relu(acc):
        # InstanceNorm3d (affine=False, biased var, eps=1e-5) over valid voxels only.
        am = acc * mask                                        # masked acc, computed once
        mean = jnp.sum(am, axis=1, keepdims=True) * inv_count
        ex2 = jnp.sum(am * acc, axis=1, keepdims=True) * inv_count
        var = jnp.maximum(ex2 - mean * mean, 0.0)              # clamp cancellation noise
        y = (acc - mean) * jax.lax.rsqrt(var + 1e-5)
        # ReLU; mask re-zeroes halo + tail so the result is already zero-padded.
        return jnp.maximum(y, 0.0) * mask

    # ---- Stage 1: stack 27 shifted taps, one big-K matmul, norm + relu ----
    fill_taps(x_ref[0], r1)
    acc1 = jnp.dot(w1_ref[...], k_ref[0:k1, :], preferred_element_type=jnp.float32)
    y1 = inorm_relu(acc1)                                      # (r2, pp_pad) f32, in VMEM

    # ---- Stage 2: intermediate never leaves VMEM ----
    fill_taps(y1, r2)
    acc2 = jnp.dot(w2_ref[...], k_ref[0:k2, :], preferred_element_type=jnp.float32)
    o_ref[0] = inorm_relu(acc2)


# --------------------------------- wrapper ------------------------------------
def double_conv3d_pallas(x, w1, b1, w2, b2):
    """Forward pass of DoubleConv3D.  x: (N, Cin, D, H, W); weights in PyTorch layout."""
    del b1, b2  # InstanceNorm's per-channel mean subtraction cancels the conv bias exactly.
    n, cin, d, h, w = x.shape
    cout = w1.shape[0]
    dp, hp, wp = d + 2, h + 2, w + 2
    pp = dp * hp * wp                       # padded-lattice voxel count
    pp_pad = _round_up(pp, 128)             # lane-dense spatial axis
    hw_p = hp * wp
    ci_p = _round_up(cin, 8)                # aligned 8-row tap blocks in the K scratch
    co_p = _round_up(cout, 8)
    k1, k2 = 27 * ci_p, 27 * co_p
    k_rows = max(k1, k2)

    # ---- host-side layout plumbing (no compute): pad, flatten, reorder weights ----
    x_pad = jnp.pad(x.astype(jnp.float32),
                    ((0, 0), (0, ci_p - cin), (1, 1), (1, 1), (1, 1)))
    x_flat = jnp.pad(x_pad.reshape(n, ci_p, pp),
                     ((0, 0), (0, 0), (0, pp_pad - pp)))

    def pack_w(wt, c_in, c_in_p):
        # (Co, Ci, 3,3,3) -> (co_p, 27*c_in_p): tap-major, channel-minor, zero-padded.
        co = wt.shape[0]
        wt = jnp.transpose(wt, (0, 2, 3, 4, 1))                      # (co, kd, kh, kw, ci)
        wt = jnp.pad(wt, ((0, co_p - co), (0, 0), (0, 0), (0, 0), (0, c_in_p - c_in)))
        return wt.reshape(co_p, 27 * c_in_p).astype(jnp.bfloat16)

    w1_mat = pack_w(w1, cin, ci_p)
    w2_mat = pack_w(w2, cout, co_p)

    mask = jnp.pad(jnp.ones((d, h, w), jnp.float32), ((1, 1), (1, 1), (1, 1)))
    mask = jnp.pad(mask.reshape(1, pp), ((0, 0), (0, pp_pad - pp)))

    kernel = functools.partial(
        _double_conv_kernel, r1=ci_p, r2=co_p, k1=k1, k2=k2, pp_pad=pp_pad,
        hw_p=hw_p, w_p=wp, inv_count=1.0 / float(d * h * w))

    out_pad = pl.pallas_call(
        kernel,
        out_shape=jax.ShapeDtypeStruct((n, co_p, pp_pad), jnp.float32),
        grid_spec=pltpu.PrefetchScalarGridSpec(
            num_scalar_prefetch=0,
            grid=(n,),
            in_specs=[
                pl.BlockSpec((1, pp_pad), lambda i: (0, 0)),          # mask
                pl.BlockSpec((1, ci_p, pp_pad), lambda i: (i, 0, 0)),  # x (padded, flat)
                pl.BlockSpec((co_p, k1), lambda i: (0, 0)),            # w1 (resident)
                pl.BlockSpec((co_p, k2), lambda i: (0, 0)),            # w2 (resident)
            ],
            out_specs=pl.BlockSpec((1, co_p, pp_pad), lambda i: (i, 0, 0)),
            scratch_shapes=[
                pltpu.VMEM((k_rows, pp_pad), jnp.bfloat16),            # K-stacked taps
            ],
        ),
        compiler_params=pltpu.CompilerParams(
            dimension_semantics=("parallel",),       # batch shards across v7x TensorCores
            vmem_limit_bytes=32 * 1024 * 1024,       # whole kernel needs < 2 MiB here
        ),
    )(mask, x_flat, w1_mat, w2_mat)

    # Output is NCDHW on the padded lattice; drop channel/lane padding and the halo ring.
    # (At this size the crop is one tiny XLA op; at larger sizes emit interior slabs or
    #  bf16 from the kernel instead.)
    out = out_pad[:, :cout, :pp].reshape(n, cout, dp, hp, wp)[:, :, 1:1 + d, 1:1 + h, 1:1 + w]
    return out


# ----------------------------- pure-JAX reference -----------------------------
def _ref_double_conv(x, w1, b1, w2, b2, cast=None):
    """f32 reference (cast=None) or bf16-matmul-matched reference (cast=jnp.bfloat16)."""
    def conv(v, wgt, b):
        vc = v.astype(cast) if cast is not None else v
        wc = wgt.astype(cast) if cast is not None else wgt
        y = jax.lax.conv_general_dilated(
            vc, wc, (1, 1, 1), padding=((1, 1), (1, 1), (1, 1)),
            dimension_numbers=("NCDHW", "OIDHW", "NCDHW"),
            preferred_element_type=jnp.float32)
        return y + b[None, :, None, None, None]

    def inorm_relu(y):
        mean = y.mean(axis=(2, 3, 4), keepdims=True)
        var = y.var(axis=(2, 3, 4), keepdims=True)
        return jnp.maximum((y - mean) * jax.lax.rsqrt(var + 1e-5), 0.0)

    return inorm_relu(conv(inorm_relu(conv(x, w1, b1)), w2, b2))


# ------------------------------------ main -------------------------------------
if __name__ == "__main__":
    N, Cin, Cout, D, H, W = 2, 4, 8, 8, 8, 8

    key = jax.random.PRNGKey(0)
    k1_, k2_, k3_, k4_, kx_ = jax.random.split(key, 5)
    x = jax.random.normal(kx_, (N, Cin, D, H, W), jnp.float32)        # PyTorch NCDHW
    w1 = jax.random.normal(k1_, (Cout, Cin, 3, 3, 3), jnp.float32) * 0.1
    b1 = jax.random.normal(k2_, (Cout,), jnp.float32) * 0.1
    w2 = jax.random.normal(k3_, (Cout, Cout, 3, 3, 3), jnp.float32) * 0.1
    b2 = jax.random.normal(k4_, (Cout,), jnp.float32) * 0.1

    out = jax.block_until_ready(jax.jit(double_conv3d_pallas)(x, w1, b1, w2, b2))
    assert out.shape == (N, Cout, D, H, W), out.shape

    # Tight check against a reference with the same bf16 matmul precision...
    ref_bf16 = _ref_double_conv(x, w1, b1, w2, b2, cast=jnp.bfloat16)
    err_bf16 = float(jnp.max(jnp.abs(out - ref_bf16)))
    assert err_bf16 < 2.5e-2, f"bf16-matched max abs err = {err_bf16}"
    # ...and a sanity check against the exact f32 module semantics (bf16 quantization only).
    ref_f32 = _ref_double_conv(x, w1, b1, w2, b2, cast=None)
    err_f32 = float(jnp.max(jnp.abs(out - ref_f32)))
    assert err_f32 < 1.5e-1, f"f32 max abs err = {err_f32}"

    print("KERNEL_OK")
</pallas_src>

<mosaic_0001>
module attributes {stable_mosaic.version = 11 : i64} {
  func.func @_double_conv_kernel(%arg0: i32, %arg1: memref<1x1024xf32, #tpu.memory_space<vmem>>, %arg2: memref<1x8x1024xf32, #tpu.memory_space<vmem>>, %arg3: memref<8x216xbf16, #tpu.memory_space<vmem>>, %arg4: memref<8x216xbf16, #tpu.memory_space<vmem>>, %arg5: memref<1x8x1024xf32, #tpu.memory_space<vmem>>, %arg6: memref<216x1024xbf16, #tpu.memory_space<vmem>>) attributes {dimension_semantics = [#tpu.dimension_semantics<parallel>], iteration_bounds = array<i64: 2>, scalar_prefetch = 0 : i64, scratch_operands = 1 : i64, tpu.core_type = #tpu.core_type<tc>, window_params = [{pipeline_mode = #tpu.pipeline_mode<synchronous>, transform_indices = @transform_0, window_bounds = array<i64: 1, 1024>}, {transform_indices = @transform_1, window_bounds = array<i64: 1, 8, 1024>}, {pipeline_mode = #tpu.pipeline_mode<synchronous>, transform_indices = @transform_2, window_bounds = array<i64: 8, 216>}, {pipeline_mode = #tpu.pipeline_mode<synchronous>, transform_indices = @transform_3, window_bounds = array<i64: 8, 216>}, {transform_indices = @transform_4, window_bounds = array<i64: 1, 8, 1024>}]} {
    %c0 = arith.constant 0 : index
    %c0_0 = arith.constant 0 : index
    %0 = vector.load %arg1[%c0, %c0_0] : memref<1x1024xf32, #tpu.memory_space<vmem>>, vector<1x1024xf32>
    %c0_1 = arith.constant 0 : index
    %c0_2 = arith.constant 0 : index
    %c0_3 = arith.constant 0 : index
    %1 = vector.load %arg2[%c0_1, %c0_2, %c0_3] : memref<1x8x1024xf32, #tpu.memory_space<vmem>>, vector<1x8x1024xf32>
    %2 = vector.shape_cast %1 : vector<1x8x1024xf32> to vector<8x1024xf32>
    %c111_i32 = arith.constant 111 : i32
    %3 = tpu.dynamic_rotate %2 by %c111_i32 dim 1 : vector<8x1024xf32>, i32 -> vector<8x1024xf32>
    %4 = arith.truncf %3 : vector<8x1024xf32> to vector<8x1024xbf16>
    %c0_4 = arith.constant 0 : index
    %c0_5 = arith.constant 0 : index
    %5 = vector.load %arg6[%c0_4, %c0_5] : memref<216x1024xbf16, #tpu.memory_space<vmem>>, vector<8x1024xbf16>
    tpu.vector_store %arg6[%c0_4, %c0_5], %4 {strides = array<i32>} : memref<216x1024xbf16, #tpu.memory_space<vmem>>, vector<8x1024xbf16>,
    %c110_i32 = arith.constant 110 : i32
    %6 = tpu.dynamic_rotate %2 by %c110_i32 dim 1 : vector<8x1024xf32>, i32 -> vector<8x1024xf32>
    %7 = arith.truncf %6 : vector<8x1024xf32> to vector<8x1024xbf16>
    %c8 = arith.constant 8 : index
    %c0_6 = arith.constant 0 : index
    %8 = vector.load %arg6[%c8, %c0_6] : memref<216x1024xbf16, #tpu.memory_space<vmem>>, vector<8x1024xbf16>
    tpu.vector_store %arg6[%c8, %c0_6], %7 {strides = array<i32>} : memref<216x1024xbf16, #tpu.memory_space<vmem>>, vector<8x1024xbf16>,
    %c109_i32 = arith.constant 109 : i32
    %9 = tpu.dynamic_rotate %2 by %c109_i32 dim 1 : vector<8x1024xf32>, i32 -> vector<8x1024xf32>
    %10 = arith.truncf %9 : vector<8x1024xf32> to vector<8x1024xbf16>
    %c16 = arith.constant 16 : index
    %c0_7 = arith.constant 0 : index
    %11 = vector.load %arg6[%c16, %c0_7] : memref<216x1024xbf16, #tpu.memory_space<vmem>>, vector<8x1024xbf16>
    tpu.vector_store %arg6[%c16, %c0_7], %10 {strides = array<i32>} : memref<216x1024xbf16, #tpu.memory_space<vmem>>, vector<8x1024xbf16>,
    %c101_i32 = arith.constant 101 : i32
    %12 = tpu.dynamic_rotate %2 by %c101_i32 dim 1 : vector<8x1024xf32>, i32 -> vector<8x1024xf32>
    %13 = arith.truncf %12 : vector<8x1024xf32> to vector<8x1024xbf16>
    %c24 = arith.constant 24 : index
    %c0_8 = arith.constant 0 : index
    %14 = vector.load %arg6[%c24, %c0_8] : memref<216x1024xbf16, #tpu.memory_space<vmem>>, vector<8x1024xbf16>
    tpu.vector_store %arg6[%c24, %c0_8], %13 {strides = array<i32>} : memref<216x1024xbf16, #tpu.memory_space<vmem>>, vector<8x1024xbf16>,
    %c100_i32 = arith.constant 100 : i32
    %15 = tpu.dynamic_rotate %2 by %c100_i32 dim 1 : vector<8x1024xf32>, i32 -> vector<8x1024xf32>
    %16 = arith.truncf %15 : vector<8x1024xf32> to vector<8x1024xbf16>
    %c32 = arith.constant 32 : index
    %c0_9 = arith.constant 0 : index
    %17 = vector.load %arg6[%c32, %c0_9] : memref<216x1024xbf16, #tpu.memory_space<vmem>>, vector<8x1024xbf16>
    tpu.vector_store %arg6[%c32, %c0_9], %16 {strides = array<i32>} : memref<216x1024xbf16, #tpu.memory_space<vmem>>, vector<8x1024xbf16>,
    %c99_i32 = arith.constant 99 : i32
    %18 = tpu.dynamic_rotate %2 by %c99_i32 dim 1 : vector<8x1024xf32>, i32 -> vector<8x1024xf32>
    %19 = arith.truncf %18 : vector<8x1024xf32> to vector<8x1024xbf16>
    %c40 = arith.constant 40 : index
    %c0_10 = arith.constant 0 : index
    %20 = vector.load %arg6[%c40, %c0_10] : memref<216x1024xbf16, #tpu.memory_space<vmem>>, vector<8x1024xbf16>
    tpu.vector_store %arg6[%c40, %c0_10], %19 {strides = array<i32>} : memref<216x1024xbf16, #tpu.memory_space<vmem>>, vector<8x1024xbf16>,
    %c91_i32 = arith.constant 91 : i32
    %21 = tpu.dynamic_rotate %2 by %c91_i32 dim 1 : vector<8x1024xf32>, i32 -> vector<8x1024xf32>
    %22 = arith.truncf %21 : vector<8x1024xf32> to vector<8x1024xbf16>
    %c48 = arith.constant 48 : index
    %c0_11 = arith.constant 0 : index
    %23 = vector.load %arg6[%c48, %c0_11] : memref<216x1024xbf16, #tpu.memory_space<vmem>>, vector<8x1024xbf16>
    tpu.vector_store %arg6[%c48, %c0_11], %22 {strides = array<i32>} : memref<216x1024xbf16, #tpu.memory_space<vmem>>, vector<8x1024xbf16>,
    %c90_i32 = arith.constant 90 : i32
    %24 = tpu.dynamic_rotate %2 by %c90_i32 dim 1 : vector<8x1024xf32>, i32 -> vector<8x1024xf32>
    %25 = arith.truncf %24 : vector<8x1024xf32> to vector<8x1024xbf16>
    %c56 = arith.constant 56 : index
    %c0_12 = arith.constant 0 : index
    %26 = vector.load %arg6[%c56, %c0_12] : memref<216x1024xbf16, #tpu.memory_space<vmem>>, vector<8x1024xbf16>
    tpu.vector_store %arg6[%c56, %c0_12], %25 {strides = array<i32>} : memref<216x1024xbf16, #tpu.memory_space<vmem>>, vector<8x1024xbf16>,
    %c89_i32 = arith.constant 89 : i32
    %27 = tpu.dynamic_rotate %2 by %c89_i32 dim 1 : vector<8x1024xf32>, i32 -> vector<8x1024xf32>
    %28 = arith.truncf %27 : vector<8x1024xf32> to vector<8x1024xbf16>
    %c64 = arith.constant 64 : index
    %c0_13 = arith.constant 0 : index
    %29 = vector.load %arg6[%c64, %c0_13] : memref<216x1024xbf16, #tpu.memory_space<vmem>>, vector<8x1024xbf16>
    tpu.vector_store %arg6[%c64, %c0_13], %28 {strides = array<i32>} : memref<216x1024xbf16, #tpu.memory_space<vmem>>, vector<8x1024xbf16>,
    %c11_i32 = arith.constant 11 : i32
    %30 = tpu.dynamic_rotate %2 by %c11_i32 dim 1 : vector<8x1024xf32>, i32 -> vector<8x1024xf32>
    %31 = arith.truncf %30 : vector<8x1024xf32> to vector<8x1024xbf16>
    %c72 = arith.constant 72 : index
    %c0_14 = arith.constant 0 : index
    %32 = vector.load %arg6[%c72, %c0_14] : memref<216x1024xbf16, #tpu.memory_space<vmem>>, vector<8x1024xbf16>
    tpu.vector_store %arg6[%c72, %c0_14], %31 {strides = array<i32>} : memref<216x1024xbf16, #tpu.memory_space<vmem>>, vector<8x1024xbf16>,
    %c10_i32 = arith.constant 10 : i32
    %33 = tpu.dynamic_rotate %2 by %c10_i32 dim 1 : vector<8x1024xf32>, i32 -> vector<8x1024xf32>
    %34 = arith.truncf %33 : vector<8x1024xf32> to vector<8x1024xbf16>
    %c80 = arith.constant 80 : index
    %c0_15 = arith.constant 0 : index
    %35 = vector.load %arg6[%c80, %c0_15] : memref<216x1024xbf16, #tpu.memory_space<vmem>>, vector<8x1024xbf16>
    tpu.vector_store %arg6[%c80, %c0_15], %34 {strides = array<i32>} : memref<216x1024xbf16, #tpu.memory_space<vmem>>, vector<8x1024xbf16>,
    %c9_i32 = arith.constant 9 : i32
    %36 = tpu.dynamic_rotate %2 by %c9_i32 dim 1 : vector<8x1024xf32>, i32 -> vector<8x1024xf32>
    %37 = arith.truncf %36 : vector<8x1024xf32> to vector<8x1024xbf16>
    %c88 = arith.constant 88 : index
    %c0_16 = arith.constant 0 : index
    %38 = vector.load %arg6[%c88, %c0_16] : memref<216x1024xbf16, #tpu.memory_space<vmem>>, vector<8x1024xbf16>
    tpu.vector_store %arg6[%c88, %c0_16], %37 {strides = array<i32>} : memref<216x1024xbf16, #tpu.memory_space<vmem>>, vector<8x1024xbf16>,
    %c1_i32 = arith.constant 1 : i32
    %39 = tpu.dynamic_rotate %2 by %c1_i32 dim 1 : vector<8x1024xf32>, i32 -> vector<8x1024xf32>
    %40 = arith.truncf %39 : vector<8x1024xf32> to vector<8x1024xbf16>
    %c96 = arith.constant 96 : index
    %c0_17 = arith.constant 0 : index
    %41 = vector.load %arg6[%c96, %c0_17] : memref<216x1024xbf16, #tpu.memory_space<vmem>>, vector<8x1024xbf16>
    tpu.vector_store %arg6[%c96, %c0_17], %40 {strides = array<i32>} : memref<216x1024xbf16, #tpu.memory_space<vmem>>, vector<8x1024xbf16>,
    %42 = arith.truncf %2 : vector<8x1024xf32> to vector<8x1024xbf16>
    %c104 = arith.constant 104 : index
    %c0_18 = arith.constant 0 : index
    %43 = vector.load %arg6[%c104, %c0_18] : memref<216x1024xbf16, #tpu.memory_space<vmem>>, vector<8x1024xbf16>
    tpu.vector_store %arg6[%c104, %c0_18], %42 {strides = array<i32>} : memref<216x1024xbf16, #tpu.memory_space<vmem>>, vector<8x1024xbf16>,
    %c1023_i32 = arith.constant 1023 : i32
    %44 = tpu.dynamic_rotate %2 by %c1023_i32 dim 1 : vector<8x1024xf32>, i32 -> vector<8x1024xf32>
    %45 = arith.truncf %44 : vector<8x1024xf32> to vector<8x1024xbf16>
    %c112 = arith.constant 112 : index
    %c0_19 = arith.constant 0 : index
    %46 = vector.load %arg6[%c112, %c0_19] : memref<216x1024xbf16, #tpu.memory_space<vmem>>, vector<8x1024xbf16>
    tpu.vector_store %arg6[%c112, %c0_19], %45 {strides = array<i32>} : memref<216x1024xbf16, #tpu.memory_space<vmem>>, vector<8x1024xbf16>,
    %c1015_i32 = arith.constant 1015 : i32
    %47 = tpu.dynamic_rotate %2 by %c1015_i32 dim 1 : vector<8x1024xf32>, i32 -> vector<8x1024xf32>
    %48 = arith.truncf %47 : vector<8x1024xf32> to vector<8x1024xbf16>
    %c120 = arith.constant 120 : index
    %c0_20 = arith.constant 0 : index
    %49 = vector.load %arg6[%c120, %c0_20] : memref<216x1024xbf16, #tpu.memory_space<vmem>>, vector<8x1024xbf16>
    tpu.vector_store %arg6[%c120, %c0_20], %48 {strides = array<i32>} : memref<216x1024xbf16, #tpu.memory_space<vmem>>, vector<8x1024xbf16>,
    %c1014_i32 = arith.constant 1014 : i32
    %50 = tpu.dynamic_rotate %2 by %c1014_i32 dim 1 : vector<8x1024xf32>, i32 -> vector<8x1024xf32>
    %51 = arith.truncf %50 : vector<8x1024xf32> to vector<8x1024xbf16>
    %c128 = arith.constant 128 : index
    %c0_21 = arith.constant 0 : index
    %52 = vector.load %arg6[%c128, %c0_21] : memref<216x1024xbf16, #tpu.memory_space<vmem>>, vector<8x1024xbf16>
    tpu.vector_store %arg6[%c128, %c0_21], %51 {strides = array<i32>} : memref<216x1024xbf16, #tpu.memory_space<vmem>>, vector<8x1024xbf16>,
    %c1013_i32 = arith.constant 1013 : i32
    %53 = tpu.dynamic_rotate %2 by %c1013_i32 dim 1 : vector<8x1024xf32>, i32 -> vector<8x1024xf32>
    %54 = arith.truncf %53 : vector<8x1024xf32> to vector<8x1024xbf16>
    %c136 = arith.constant 136 : index
    %c0_22 = arith.constant 0 : index
    %55 = vector.load %arg6[%c136, %c0_22] : memref<216x1024xbf16, #tpu.memory_space<vmem>>, vector<8x1024xbf16>
    tpu.vector_store %arg6[%c136, %c0_22], %54 {strides = array<i32>} : memref<216x1024xbf16, #tpu.memory_space<vmem>>, vector<8x1024xbf16>,
    %c935_i32 = arith.constant 935 : i32
    %56 = tpu.dynamic_rotate %2 by %c935_i32 dim 1 : vector<8x1024xf32>, i32 -> vector<8x1024xf32>
    %57 = arith.truncf %56 : vector<8x1024xf32> to vector<8x1024xbf16>
    %c144 = arith.constant 144 : index
    %c0_23 = arith.constant 0 : index
    %58 = vector.load %arg6[%c144, %c0_23] : memref<216x1024xbf16, #tpu.memory_space<vmem>>, vector<8x1024xbf16>
    tpu.vector_store %arg6[%c144, %c0_23], %57 {strides = array<i32>} : memref<216x1024xbf16, #tpu.memory_space<vmem>>, vector<8x1024xbf16>,
    %c934_i32 = arith.constant 934 : i32
    %59 = tpu.dynamic_rotate %2 by %c934_i32 dim 1 : vector<8x1024xf32>, i32 -> vector<8x1024xf32>
    %60 = arith.truncf %59 : vector<8x1024xf32> to vector<8x1024xbf16>
    %c152 = arith.constant 152 : index
    %c0_24 = arith.constant 0 : index
    %61 = vector.load %arg6[%c152, %c0_24] : memref<216x1024xbf16, #tpu.memory_space<vmem>>, vector<8x1024xbf16>
    tpu.vector_store %arg6[%c152, %c0_24], %60 {strides = array<i32>} : memref<216x1024xbf16, #tpu.memory_space<vmem>>, vector<8x1024xbf16>,
    %c933_i32 = arith.constant 933 : i32
    %62 = tpu.dynamic_rotate %2 by %c933_i32 dim 1 : vector<8x1024xf32>, i32 -> vector<8x1024xf32>
    %63 = arith.truncf %62 : vector<8x1024xf32> to vector<8x1024xbf16>
    %c160 = arith.constant 160 : index
    %c0_25 = arith.constant 0 : index
    %64 = vector.load %arg6[%c160, %c0_25] : memref<216x1024xbf16, #tpu.memory_space<vmem>>, vector<8x1024xbf16>
    tpu.vector_store %arg6[%c160, %c0_25], %63 {strides = array<i32>} : memref<216x1024xbf16, #tpu.memory_space<vmem>>, vector<8x1024xbf16>,
    %c925_i32 = arith.constant 925 : i32
    %65 = tpu.dynamic_rotate %2 by %c925_i32 dim 1 : vector<8x1024xf32>, i32 -> vector<8x1024xf32>
    %66 = arith.truncf %65 : vector<8x1024xf32> to vector<8x1024xbf16>
    %c168 = arith.constant 168 : index
    %c0_26 = arith.constant 0 : index
    %67 = vector.load %arg6[%c168, %c0_26] : memref<216x1024xbf16, #tpu.memory_space<vmem>>, vector<8x1024xbf16>
    tpu.vector_store %arg6[%c168, %c0_26], %66 {strides = array<i32>} : memref<216x1024xbf16, #tpu.memory_space<vmem>>, vector<8x1024xbf16>,
    %c924_i32 = arith.constant 924 : i32
    %68 = tpu.dynamic_rotate %2 by %c924_i32 dim 1 : vector<8x1024xf32>, i32 -> vector<8x1024xf32>
    %69 = arith.truncf %68 : vector<8x1024xf32> to vector<8x1024xbf16>
    %c176 = arith.constant 176 : index
    %c0_27 = arith.constant 0 : index
    %70 = vector.load %arg6[%c176, %c0_27] : memref<216x1024xbf16, #tpu.memory_space<vmem>>, vector<8x1024xbf16>
    tpu.vector_store %arg6[%c176, %c0_27], %69 {strides = array<i32>} : memref<216x1024xbf16, #tpu.memory_space<vmem>>, vector<8x1024xbf16>,
    %c923_i32 = arith.constant 923 : i32
    %71 = tpu.dynamic_rotate %2 by %c923_i32 dim 1 : vector<8x1024xf32>, i32 -> vector<8x1024xf32>
    %72 = arith.truncf %71 : vector<8x1024xf32> to vector<8x1024xbf16>
    %c184 = arith.constant 184 : index
    %c0_28 = arith.constant 0 : index
    %73 = vector.load %arg6[%c184, %c0_28] : memref<216x1024xbf16, #tpu.memory_space<vmem>>, vector<8x1024xbf16>
    tpu.vector_store %arg6[%c184, %c0_28], %72 {strides = array<i32>} : memref<216x1024xbf16, #tpu.memory_space<vmem>>, vector<8x1024xbf16>,
    %c915_i32 = arith.constant 915 : i32
    %74 = tpu.dynamic_rotate %2 by %c915_i32 dim 1 : vector<8x1024xf32>, i32 -> vector<8x1024xf32>
    %75 = arith.truncf %74 : vector<8x1024xf32> to vector<8x1024xbf16>
    %c192 = arith.constant 192 : index
    %c0_29 = arith.constant 0 : index
    %76 = vector.load %arg6[%c192, %c0_29] : memref<216x1024xbf16, #tpu.memory_space<vmem>>, vector<8x1024xbf16>
    tpu.vector_store %arg6[%c192, %c0_29], %75 {strides = array<i32>} : memref<216x1024xbf16, #tpu.memory_space<vmem>>, vector<8x1024xbf16>,
    %c914_i32 = arith.constant 914 : i32
    %77 = tpu.dynamic_rotate %2 by %c914_i32 dim 1 : vector<8x1024xf32>, i32 -> vector<8x1024xf32>
    %78 = arith.truncf %77 : vector<8x1024xf32> to vector<8x1024xbf16>
    %c200 = arith.constant 200 : index
    %c0_30 = arith.constant 0 : index
    %79 = vector.load %arg6[%c200, %c0_30] : memref<216x1024xbf16, #tpu.memory_space<vmem>>, vector<8x1024xbf16>
    tpu.vector_store %arg6[%c200, %c0_30], %78 {strides = array<i32>} : memref<216x1024xbf16, #tpu.memory_space<vmem>>, vector<8x1024xbf16>,
    %c913_i32 = arith.constant 913 : i32
    %80 = tpu.dynamic_rotate %2 by %c913_i32 dim 1 : vector<8x1024xf32>, i32 -> vector<8x1024xf32>
    %81 = arith.truncf %80 : vector<8x1024xf32> to vector<8x1024xbf16>
    %c208 = arith.constant 208 : index
    %c0_31 = arith.constant 0 : index
    %82 = vector.load %arg6[%c208, %c0_31] : memref<216x1024xbf16, #tpu.memory_space<vmem>>, vector<8x1024xbf16>
    tpu.vector_store %arg6[%c208, %c0_31], %81 {strides = array<i32>} : memref<216x1024xbf16, #tpu.memory_space<vmem>>, vector<8x1024xbf16>,
    %c0_32 = arith.constant 0 : index
    %c0_33 = arith.constant 0 : index
    %83 = vector.load %arg3[%c0_32, %c0_33] : memref<8x216xbf16, #tpu.memory_space<vmem>>, vector<8x216xbf16>
    %c0_34 = arith.constant 0 : index
    %c0_35 = arith.constant 0 : index
    %84 = vector.load %arg6[%c0_34, %c0_35] : memref<216x1024xbf16, #tpu.memory_space<vmem>>, vector<216x1024xbf16>
    %cst = arith.constant dense<0.000000e+00> : vector<8x1024xf32>
    %85 = tpu.matmul %83, %84, %cst {dimension_numbers = #tpu.dot_dimension_numbers<[1], [0], [0], [1], [0, 0, 1, 1], [], []>} : vector<8x216xbf16>, vector<216x1024xbf16>, vector<8x1024xf32> -> vector<8x1024xf32>
    %86 = vector.broadcast %0 : vector<1x1024xf32> to vector<8x1024xf32>
    %87 = arith.mulf %85, %86 : vector<8x1024xf32>
    %cst_36 = arith.constant dense<0.000000e+00> : vector<8xf32>
    %88 = vector.multi_reduction <add>, %87, %cst_36 [1] : vector<8x1024xf32> to vector<8xf32>
    %89 = vector.shape_cast %88 : vector<8xf32> to vector<8x1xf32>
    %cst_37 = arith.constant 0.001953125 : f32
    %90 = vector.broadcast %cst_37 : f32 to vector<8x1xf32>
    %91 = arith.mulf %89, %90 : vector<8x1xf32>
    %92 = arith.mulf %87, %85 : vector<8x1024xf32>
    %cst_38 = arith.constant dense<0.000000e+00> : vector<8xf32>
    %93 = vector.multi_reduction <add>, %92, %cst_38 [1] : vector<8x1024xf32> to vector<8xf32>
    %94 = vector.shape_cast %93 : vector<8xf32> to vector<8x1xf32>
    %cst_39 = arith.constant 0.001953125 : f32
    %95 = vector.broadcast %cst_39 : f32 to vector<8x1xf32>
    %96 = arith.mulf %94, %95 : vector<8x1xf32>
    %97 = arith.mulf %91, %91 : vector<8x1xf32>
    %98 = arith.subf %96, %97 : vector<8x1xf32>
    %cst_40 = arith.constant 0.000000e+00 : f32
    %99 = vector.broadcast %cst_40 : f32 to vector<8x1xf32>
    %100 = arith.maximumf %98, %99 : vector<8x1xf32>
    %101 = vector.broadcast %91 : vector<8x1xf32> to vector<8x1024xf32>
    %102 = arith.subf %85, %101 : vector<8x1024xf32>
    %cst_41 = arith.constant 9.99999974E-6 : f32
    %103 = vector.broadcast %cst_41 : f32 to vector<8x1xf32>
    %104 = arith.addf %100, %103 : vector<8x1xf32>
    %105 = math.rsqrt %104 : vector<8x1xf32>
    %106 = vector.broadcast %105 : vector<8x1xf32> to vector<8x1024xf32>
    %107 = arith.mulf %102, %106 : vector<8x1024xf32>
    %cst_42 = arith.constant 0.000000e+00 : f32
    %108 = vector.broadcast %cst_42 : f32 to vector<8x1024xf32>
    %109 = arith.maximumf %107, %108 : vector<8x1024xf32>
    %110 = vector.broadcast %0 : vector<1x1024xf32> to vector<8x1024xf32>
    %111 = arith.mulf %109, %110 : vector<8x1024xf32>
    %c111_i32_43 = arith.constant 111 : i32
    %112 = tpu.dynamic_rotate %111 by %c111_i32_43 dim 1 : vector<8x1024xf32>, i32 -> vector<8x1024xf32>
    %113 = arith.truncf %112 : vector<8x1024xf32> to vector<8x1024xbf16>
    %c0_44 = arith.constant 0 : index
    %c0_45 = arith.constant 0 : index
    %114 = vector.load %arg6[%c0_44, %c0_45] : memref<216x1024xbf16, #tpu.memory_space<vmem>>, vector<8x1024xbf16>
    tpu.vector_store %arg6[%c0_44, %c0_45], %113 {strides = array<i32>} : memref<216x1024xbf16, #tpu.memory_space<vmem>>, vector<8x1024xbf16>,
    %c110_i32_46 = arith.constant 110 : i32
    %115 = tpu.dynamic_rotate %111 by %c110_i32_46 dim 1 : vector<8x1024xf32>, i32 -> vector<8x1024xf32>
    %116 = arith.truncf %115 : vector<8x1024xf32> to vector<8x1024xbf16>
    %c8_47 = arith.constant 8 : index
    %c0_48 = arith.constant 0 : index
    %117 = vector.load %arg6[%c8_47, %c0_48] : memref<216x1024xbf16, #tpu.memory_space<vmem>>, vector<8x1024xbf16>
    tpu.vector_store %arg6[%c8_47, %c0_48], %116 {strides = array<i32>} : memref<216x1024xbf16, #tpu.memory_space<vmem>>, vector<8x1024xbf16>,
    %c109_i32_49 = arith.constant 109 : i32
    %118 = tpu.dynamic_rotate %111 by %c109_i32_49 dim 1 : vector<8x1024xf32>, i32 -> vector<8x1024xf32>
    %119 = arith.truncf %118 : vector<8x1024xf32> to vector<8x1024xbf16>
    %c16_50 = arith.constant 16 : index
    %c0_51 = arith.constant 0 : index
    %120 = vector.load %arg6[%c16_50, %c0_51] : memref<216x1024xbf16, #tpu.memory_space<vmem>>, vector<8x1024xbf16>
    tpu.vector_store %arg6[%c16_50, %c0_51], %119 {strides = array<i32>} : memref<216x1024xbf16, #tpu.memory_space<vmem>>, vector<8x1024xbf16>,
    %c101_i32_52 = arith.constant 101 : i32
    %121 = tpu.dynamic_rotate %111 by %c101_i32_52 dim 1 : vector<8x1024xf32>, i32 -> vector<8x1024xf32>
    %122 = arith.truncf %121 : vector<8x1024xf32> to vector<8x1024xbf16>
    %c24_53 = arith.constant 24 : index
    %c0_54 = arith.constant 0 : index
    %123 = vector.load %arg6[%c24_53, %c0_54] : memref<216x1024xbf16, #tpu.memory_space<vmem>>, vector<8x1024xbf16>
    tpu.vector_store %arg6[%c24_53, %c0_54], %122 {strides = array<i32>} : memref<216x1024xbf16, #tpu.memory_space<vmem>>, vector<8x1024xbf16>,
    %c100_i32_55 = arith.constant 100 : i32
    %124 = tpu.dynamic_rotate %111 by %c100_i32_55 dim 1 : vector<8x1024xf32>, i32 -> vector<8x1024xf32>
    %125 = arith.truncf %124 : vector<8x1024xf32> to vector<8x1024xbf16>
    %c32_56 = arith.constant 32 : index
    %c0_57 = arith.constant 0 : index
    %126 = vector.load %arg6[%c32_56, %c0_57] : memref<216x1024xbf16, #tpu.memory_space<vmem>>, vector<8x1024xbf16>
    tpu.vector_store %arg6[%c32_56, %c0_57], %125 {strides = array<i32>} : memref<216x1024xbf16, #tpu.memory_space<vmem>>, vector<8x1024xbf16>,
    %c99_i32_58 = arith.constant 99 : i32
    %127 = tpu.dynamic_rotate %111 by %c99_i32_58 dim 1 : vector<8x1024xf32>, i32 -> vector<8x1024xf32>
    %128 = arith.truncf %127 : vector<8x1024xf32> to vector<8x1024xbf16>
    %c40_59 = arith.constant 40 : index
    %c0_60 = arith.constant 0 : index
    %129 = vector.load %arg6[%c40_59, %c0_60] : memref<216x1024xbf16, #tpu.memory_space<vmem>>, vector<8x1024xbf16>
    tpu.vector_store %arg6[%c40_59, %c0_60], %128 {strides = array<i32>} : memref<216x1024xbf16, #tpu.memory_space<vmem>>, vector<8x1024xbf16>,
    %c91_i32_61 = arith.constant 91 : i32
    %130 = tpu.dynamic_rotate %111 by %c91_i32_61 dim 1 : vector<8x1024xf32>, i32 -> vector<8x1024xf32>
    %131 = arith.truncf %130 : vector<8x1024xf32> to vector<8x1024xbf16>
    %c48_62 = arith.constant 48 : index
    %c0_63 = arith.constant 0 : index
    %132 = vector.load %arg6[%c48_62, %c0_63] : memref<216x1024xbf16, #tpu.memory_space<vmem>>, vector<8x1024xbf16>
    tpu.vector_store %arg6[%c48_62, %c0_63], %131 {strides = array<i32>} : memref<216x1024xbf16, #tpu.memory_space<vmem>>, vector<8x1024xbf16>,
    %c90_i32_64 = arith.constant 90 : i32
    %133 = tpu.dynamic_rotate %111 by %c90_i32_64 dim 1 : vector<8x1024xf32>, i32 -> vector<8x1024xf32>
    %134 = arith.truncf %133 : vector<8x1024xf32> to vector<8x1024xbf16>
    %c56_65 = arith.constant 56 : index
    %c0_66 = arith.constant 0 : index
    %135 = vector.load %arg6[%c56_65, %c0_66] : memref<216x1024xbf16, #tpu.memory_space<vmem>>, vector<8x1024xbf16>
    tpu.vector_store %arg6[%c56_65, %c0_66], %134 {strides = array<i32>} : memref<216x1024xbf16, #tpu.memory_space<vmem>>, vector<8x1024xbf16>,
    %c89_i32_67 = arith.constant 89 : i32
    %136 = tpu.dynamic_rotate %111 by %c89_i32_67 dim 1 : vector<8x1024xf32>, i32 -> vector<8x1024xf32>
    %137 = arith.truncf %136 : vector<8x1024xf32> to vector<8x1024xbf16>
    %c64_68 = arith.constant 64 : index
    %c0_69 = arith.constant 0 : index
    %138 = vector.load %arg6[%c64_68, %c0_69] : memref<216x1024xbf16, #tpu.memory_space<vmem>>, vector<8x1024xbf16>
    tpu.vector_store %arg6[%c64_68, %c0_69], %137 {strides = array<i32>} : memref<216x1024xbf16, #tpu.memory_space<vmem>>, vector<8x1024xbf16>,
    %c11_i32_70 = arith.constant 11 : i32
    %139 = tpu.dynamic_rotate %111 by %c11_i32_70 dim 1 : vector<8x1024xf32>, i32 -> vector<8x1024xf32>
    %140 = arith.truncf %139 : vector<8x1024xf32> to vector<8x1024xbf16>
    %c72_71 = arith.constant 72 : index
    %c0_72 = arith.constant 0 : index
    %141 = vector.load %arg6[%c72_71, %c0_72] : memref<216x1024xbf16, #tpu.memory_space<vmem>>, vector<8x1024xbf16>
    tpu.vector_store %arg6[%c72_71, %c0_72], %140 {strides = array<i32>} : memref<216x1024xbf16, #tpu.memory_space<vmem>>, vector<8x1024xbf16>,
    %c10_i32_73 = arith.constant 10 : i32
    %142 = tpu.dynamic_rotate %111 by %c10_i32_73 dim 1 : vector<8x1024xf32>, i32 -> vector<8x1024xf32>
    %143 = arith.truncf %142 : vector<8x1024xf32> to vector<8x1024xbf16>
    %c80_74 = arith.constant 80 : index
    %c0_75 = arith.constant 0 : index
    %144 = vector.load %arg6[%c80_74, %c0_75] : memref<216x1024xbf16, #tpu.memory_space<vmem>>, vector<8x1024xbf16>
    tpu.vector_store %arg6[%c80_74, %c0_75], %143 {strides = array<i32>} : memref<216x1024xbf16, #tpu.memory_space<vmem>>, vector<8x1024xbf16>,
    %c9_i32_76 = arith.constant 9 : i32
    %145 = tpu.dynamic_rotate %111 by %c9_i32_76 dim 1 : vector<8x1024xf32>, i32 -> vector<8x1024xf32>
    %146 = arith.truncf %145 : vector<8x1024xf32> to vector<8x1024xbf16>
    %c88_77 = arith.constant 88 : index
    %c0_78 = arith.constant 0 : index
    %147 = vector.load %arg6[%c88_77, %c0_78] : memref<216x1024xbf16, #tpu.memory_space<vmem>>, vector<8x1024xbf16>
    tpu.vector_store %arg6[%c88_77, %c0_78], %146 {strides = array<i32>} : memref<216x1024xbf16, #tpu.memory_space<vmem>>, vector<8x1024xbf16>,
    %c1_i32_79 = arith.constant 1 : i32
    %148 = tpu.dynamic_rotate %111 by %c1_i32_79 dim 1 : vector<8x1024xf32>, i32 -> vector<8x1024xf32>
    %149 = arith.truncf %148 : vector<8x1024xf32> to vector<8x1024xbf16>
    %c96_80 = arith.constant 96 : index
    %c0_81 = arith.constant 0 : index
    %150 = vector.load %arg6[%c96_80, %c0_81] : memref<216x1024xbf16, #tpu.memory_space<vmem>>, vector<8x1024xbf16>
    tpu.vector_store %arg6[%c96_80, %c0_81], %149 {strides = array<i32>} : memref<216x1024xbf16, #tpu.memory_space<vmem>>, vector<8x1024xbf16>,
    %151 = arith.truncf %111 : vector<8x1024xf32> to vector<8x1024xbf16>
    %c104_82 = arith.constant 104 : index
    %c0_83 = arith.constant 0 : index
    %152 = vector.load %arg6[%c104_82, %c0_83] : memref<216x1024xbf16, #tpu.memory_space<vmem>>, vector<8x1024xbf16>
    tpu.vector_store %arg6[%c104_82, %c0_83], %151 {strides = array<i32>} : memref<216x1024xbf16, #tpu.memory_space<vmem>>, vector<8x1024xbf16>,
    %c1023_i32_84 = arith.constant 1023 : i32
    %153 = tpu.dynamic_rotate %111 by %c1023_i32_84 dim 1 : vector<8x1024xf32>, i32 -> vector<8x1024xf32>
    %154 = arith.truncf %153 : vector<8x1024xf32> to vector<8x1024xbf16>
    %c112_85 = arith.constant 112 : index
    %c0_86 = arith.constant 0 : index
    %155 = vector.load %arg6[%c112_85, %c0_86] : memref<216x1024xbf16, #tpu.memory_space<vmem>>, vector<8x1024xbf16>
    tpu.vector_store %arg6[%c112_85, %c0_86], %154 {strides = array<i32>} : memref<216x1024xbf16, #tpu.memory_space<vmem>>, vector<8x1024xbf16>,
    %c1015_i32_87 = arith.constant 1015 : i32
    %156 = tpu.dynamic_rotate %111 by %c1015_i32_87 dim 1 : vector<8x1024xf32>, i32 -> vector<8x1024xf32>
    %157 = arith.truncf %156 : vector<8x1024xf32> to vector<8x1024xbf16>
    %c120_88 = arith.constant 120 : index
    %c0_89 = arith.constant 0 : index
    %158 = vector.load %arg6[%c120_88, %c0_89] : memref<216x1024xbf16, #tpu.memory_space<vmem>>, vector<8x1024xbf16>
    tpu.vector_store %arg6[%c120_88, %c0_89], %157 {strides = array<i32>} : memref<216x1024xbf16, #tpu.memory_space<vmem>>, vector<8x1024xbf16>,
    %c1014_i32_90 = arith.constant 1014 : i32
    %159 = tpu.dynamic_rotate %111 by %c1014_i32_90 dim 1 : vector<8x1024xf32>, i32 -> vector<8x1024xf32>
    %160 = arith.truncf %159 : vector<8x1024xf32> to vector<8x1024xbf16>
    %c128_91 = arith.constant 128 : index
    %c0_92 = arith.constant 0 : index
    %161 = vector.load %arg6[%c128_91, %c0_92] : memref<216x1024xbf16, #tpu.memory_space<vmem>>, vector<8x1024xbf16>
    tpu.vector_store %arg6[%c128_91, %c0_92], %160 {strides = array<i32>} : memref<216x1024xbf16, #tpu.memory_space<vmem>>, vector<8x1024xbf16>,
    %c1013_i32_93 = arith.constant 1013 : i32
    %162 = tpu.dynamic_rotate %111 by %c1013_i32_93 dim 1 : vector<8x1024xf32>, i32 -> vector<8x1024xf32>
    %163 = arith.truncf %162 : vector<8x1024xf32> to vector<8x1024xbf16>
    %c136_94 = arith.constant 136 : index
    %c0_95 = arith.constant 0 : index
    %164 = vector.load %arg6[%c136_94, %c0_95] : memref<216x1024xbf16, #tpu.memory_space<vmem>>, vector<8x1024xbf16>
    tpu.vector_store %arg6[%c136_94, %c0_95], %163 {strides = array<i32>} : memref<216x1024xbf16, #tpu.memory_space<vmem>>, vector<8x1024xbf16>,
    %c935_i32_96 = arith.constant 935 : i32
    %165 = tpu.dynamic_rotate %111 by %c935_i32_96 dim 1 : vector<8x1024xf32>, i32 -> vector<8x1024xf32>
    %166 = arith.truncf %165 : vector<8x1024xf32> to vector<8x1024xbf16>
    %c144_97 = arith.constant 144 : index
    %c0_98 = arith.constant 0 : index
    %167 = vector.load %arg6[%c144_97, %c0_98] : memref<216x1024xbf16, #tpu.memory_space<vmem>>, vector<8x1024xbf16>
    tpu.vector_store %arg6[%c144_97, %c0_98], %166 {strides = array<i32>} : memref<216x1024xbf16, #tpu.memory_space<vmem>>, vector<8x1024xbf16>,
    %c934_i32_99 = arith.constant 934 : i32
    %168 = tpu.dynamic_rotate %111 by %c934_i32_99 dim 1 : vector<8x1024xf32>, i32 -> vector<8x1024xf32>
    %169 = arith.truncf %168 : vector<8x1024xf32> to vector<8x1024xbf16>
    %c152_100 = arith.constant 152 : index
    %c0_101 = arith.constant 0 : index
    %170 = vector.load %arg6[%c152_100, %c0_101] : memref<216x1024xbf16, #tpu.memory_space<vmem>>, vector<8x1024xbf16>
    tpu.vector_store %arg6[%c152_100, %c0_101], %169 {strides = array<i32>} : memref<216x1024xbf16, #tpu.memory_space<vmem>>, vector<8x1024xbf16>,
    %c933_i32_102 = arith.constant 933 : i32
    %171 = tpu.dynamic_rotate %111 by %c933_i32_102 dim 1 : vector<8x1024xf32>, i32 -> vector<8x1024xf32>
    %172 = arith.truncf %171 : vector<8x1024xf32> to vector<8x1024xbf16>
    %c160_103 = arith.constant 160 : index
    %c0_104 = arith.constant 0 : index
    %173 = vector.load %arg6[%c160_103, %c0_104] : memref<216x1024xbf16, #tpu.memory_space<vmem>>, vector<8x1024xbf16>
    tpu.vector_store %arg6[%c160_103, %c0_104], %172 {strides = array<i32>} : memref<216x1024xbf16, #tpu.memory_space<vmem>>, vector<8x1024xbf16>,
    %c925_i32_105 = arith.constant 925 : i32
    %174 = tpu.dynamic_rotate %111 by %c925_i32_105 dim 1 : vector<8x1024xf32>, i32 -> vector<8x1024xf32>
    %175 = arith.truncf %174 : vector<8x1024xf32> to vector<8x1024xbf16>
    %c168_106 = arith.constant 168 : index
    %c0_107 = arith.constant 0 : index
    %176 = vector.load %arg6[%c168_106, %c0_107] : memref<216x1024xbf16, #tpu.memory_space<vmem>>, vector<8x1024xbf16>
    tpu.vector_store %arg6[%c168_106, %c0_107], %175 {strides = array<i32>} : memref<216x1024xbf16, #tpu.memory_space<vmem>>, vector<8x1024xbf16>,
    %c924_i32_108 = arith.constant 924 : i32
    %177 = tpu.dynamic_rotate %111 by %c924_i32_108 dim 1 : vector<8x1024xf32>, i32 -> vector<8x1024xf32>
    %178 = arith.truncf %177 : vector<8x1024xf32> to vector<8x1024xbf16>
    %c176_109 = arith.constant 176 : index
    %c0_110 = arith.constant 0 : index
    %179 = vector.load %arg6[%c176_109, %c0_110] : memref<216x1024xbf16, #tpu.memory_space<vmem>>, vector<8x1024xbf16>
    tpu.vector_store %arg6[%c176_109, %c0_110], %178 {strides = array<i32>} : memref<216x1024xbf16, #tpu.memory_space<vmem>>, vector<8x1024xbf16>,
    %c923_i32_111 = arith.constant 923 : i32
    %180 = tpu.dynamic_rotate %111 by %c923_i32_111 dim 1 : vector<8x1024xf32>, i32 -> vector<8x1024xf32>
    %181 = arith.truncf %180 : vector<8x1024xf32> to vector<8x1024xbf16>
    %c184_112 = arith.constant 184 : index
    %c0_113 = arith.constant 0 : index
    %182 = vector.load %arg6[%c184_112, %c0_113] : memref<216x1024xbf16, #tpu.memory_space<vmem>>, vector<8x1024xbf16>
    tpu.vector_store %arg6[%c184_112, %c0_113], %181 {strides = array<i32>} : memref<216x1024xbf16, #tpu.memory_space<vmem>>, vector<8x1024xbf16>,
    %c915_i32_114 = arith.constant 915 : i32
    %183 = tpu.dynamic_rotate %111 by %c915_i32_114 dim 1 : vector<8x1024xf32>, i32 -> vector<8x1024xf32>
    %184 = arith.truncf %183 : vector<8x1024xf32> to vector<8x1024xbf16>
    %c192_115 = arith.constant 192 : index
    %c0_116 = arith.constant 0 : index
    %185 = vector.load %arg6[%c192_115, %c0_116] : memref<216x1024xbf16, #tpu.memory_space<vmem>>, vector<8x1024xbf16>
    tpu.vector_store %arg6[%c192_115, %c0_116], %184 {strides = array<i32>} : memref<216x1024xbf16, #tpu.memory_space<vmem>>, vector<8x1024xbf16>,
    %c914_i32_117 = arith.constant 914 : i32
    %186 = tpu.dynamic_rotate %111 by %c914_i32_117 dim 1 : vector<8x1024xf32>, i32 -> vector<8x1024xf32>
    %187 = arith.truncf %186 : vector<8x1024xf32> to vector<8x1024xbf16>
    %c200_118 = arith.constant 200 : index
    %c0_119 = arith.constant 0 : index
    %188 = vector.load %arg6[%c200_118, %c0_119] : memref<216x1024xbf16, #tpu.memory_space<vmem>>, vector<8x1024xbf16>
    tpu.vector_store %arg6[%c200_118, %c0_119], %187 {strides = array<i32>} : memref<216x1024xbf16, #tpu.memory_space<vmem>>, vector<8x1024xbf16>,
    %c913_i32_120 = arith.constant 913 : i32
    %189 = tpu.dynamic_rotate %111 by %c913_i32_120 dim 1 : vector<8x1024xf32>, i32 -> vector<8x1024xf32>
    %190 = arith.truncf %189 : vector<8x1024xf32> to vector<8x1024xbf16>
    %c208_121 = arith.constant 208 : index
    %c0_122 = arith.constant 0 : index
    %191 = vector.load %arg6[%c208_121, %c0_122] : memref<216x1024xbf16, #tpu.memory_space<vmem>>, vector<8x1024xbf16>
    tpu.vector_store %arg6[%c208_121, %c0_122], %190 {strides = array<i32>} : memref<216x1024xbf16, #tpu.memory_space<vmem>>, vector<8x1024xbf16>,
    %c0_123 = arith.constant 0 : index
    %c0_124 = arith.constant 0 : index
    %192 = vector.load %arg4[%c0_123, %c0_124] : memref<8x216xbf16, #tpu.memory_space<vmem>>, vector<8x216xbf16>
    %c0_125 = arith.constant 0 : index
    %c0_126 = arith.constant 0 : index
    %193 = vector.load %arg6[%c0_125, %c0_126] : memref<216x1024xbf16, #tpu.memory_space<vmem>>, vector<216x1024xbf16>
    %cst_127 = arith.constant dense<0.000000e+00> : vector<8x1024xf32>
    %194 = tpu.matmul %192, %193, %cst_127 {dimension_numbers = #tpu.dot_dimension_numbers<[1], [0], [0], [1], [0, 0, 1, 1], [], []>} : vector<8x216xbf16>, vector<216x1024xbf16>, vector<8x1024xf32> -> vector<8x1024xf32>
    %195 = vector.broadcast %0 : vector<1x1024xf32> to vector<8x1024xf32>
    %196 = arith.mulf %194, %195 : vector<8x1024xf32>
    %cst_128 = arith.constant dense<0.000000e+00> : vector<8xf32>
    %197 = vector.multi_reduction <add>, %196, %cst_128 [1] : vector<8x1024xf32> to vector<8xf32>
    %198 = vector.shape_cast %197 : vector<8xf32> to vector<8x1xf32>
    %cst_129 = arith.constant 0.001953125 : f32
    %199 = vector.broadcast %cst_129 : f32 to vector<8x1xf32>
    %200 = arith.mulf %198, %199 : vector<8x1xf32>
    %201 = arith.mulf %196, %194 : vector<8x1024xf32>
    %cst_130 = arith.constant dense<0.000000e+00> : vector<8xf32>
    %202 = vector.multi_reduction <add>, %201, %cst_130 [1] : vector<8x1024xf32> to vector<8xf32>
    %203 = vector.shape_cast %202 : vector<8xf32> to vector<8x1xf32>
    %cst_131 = arith.constant 0.001953125 : f32
    %204 = vector.broadcast %cst_131 : f32 to vector<8x1xf32>
    %205 = arith.mulf %203, %204 : vector<8x1xf32>
    %206 = arith.mulf %200, %200 : vector<8x1xf32>
    %207 = arith.subf %205, %206 : vector<8x1xf32>
    %cst_132 = arith.constant 0.000000e+00 : f32
    %208 = vector.broadcast %cst_132 : f32 to vector<8x1xf32>
    %209 = arith.maximumf %207, %208 : vector<8x1xf32>
    %210 = vector.broadcast %200 : vector<8x1xf32> to vector<8x1024xf32>
    %211 = arith.subf %194, %210 : vector<8x1024xf32>
    %cst_133 = arith.constant 9.99999974E-6 : f32
    %212 = vector.broadcast %cst_133 : f32 to vector<8x1xf32>
    %213 = arith.addf %209, %212 : vector<8x1xf32>
    %214 = math.rsqrt %213 : vector<8x1xf32>
    %215 = vector.broadcast %214 : vector<8x1xf32> to vector<8x1024xf32>
    %216 = arith.mulf %211, %215 : vector<8x1024xf32>
    %cst_134 = arith.constant 0.000000e+00 : f32
    %217 = vector.broadcast %cst_134 : f32 to vector<8x1024xf32>
    %218 = arith.maximumf %216, %217 : vector<8x1024xf32>
    %219 = vector.broadcast %0 : vector<1x1024xf32> to vector<8x1024xf32>
    %220 = arith.mulf %218, %219 : vector<8x1024xf32>
    %c0_135 = arith.constant 0 : index
    %c0_136 = arith.constant 0 : index
    %c0_137 = arith.constant 0 : index
    %221 = vector.load %arg5[%c0_135, %c0_136, %c0_137] : memref<1x8x1024xf32, #tpu.memory_space<vmem>>, vector<1x8x1024xf32>
    %222 = vector.shape_cast %221 : vector<1x8x1024xf32> to vector<8x1024xf32>
    %223 = vector.shape_cast %220 : vector<8x1024xf32> to vector<1x8x1024xf32>
    tpu.vector_store %arg5[%c0_135, %c0_136, %c0_137], %223 {strides = array<i32>} : memref<1x8x1024xf32, #tpu.memory_space<vmem>>, vector<1x8x1024xf32>,
    return
  }
  func.func @transform_0(%arg0: i32) -> (i32, i32) {
    %c0_i32 = arith.constant 0 : i32
    %c0_i32_0 = arith.constant 0 : i32
    %c0_i32_1 = arith.constant 0 : i32
    return %c0_i32, %c0_i32_0 : i32, i32
  }
  func.func @transform_1(%arg0: i32) -> (i32, i32, i32) {
    %c0_i32 = arith.constant 0 : i32
    %c0_i32_0 = arith.constant 0 : i32
    %c0_i32_1 = arith.constant 0 : i32
    return %arg0, %c0_i32, %c0_i32_0 : i32, i32, i32
  }
  func.func @transform_2(%arg0: i32) -> (i32, i32) {
    %c0_i32 = arith.constant 0 : i32
    %c0_i32_0 = arith.constant 0 : i32
    %c0_i32_1 = arith.constant 0 : i32
    return %c0_i32, %c0_i32_0 : i32, i32
  }
  func.func @transform_3(%arg0: i32) -> (i32, i32) {
    %c0_i32 = arith.constant 0 : i32
    %c0_i32_0 = arith.constant 0 : i32
    %c0_i32_1 = arith.constant 0 : i32
    return %c0_i32, %c0_i32_0 : i32, i32
  }
  func.func @transform_4(%arg0: i32) -> (i32, i32, i32) {
    %c0_i32 = arith.constant 0 : i32
    %c0_i32_0 = arith.constant 0 : i32
    %c0_i32_1 = arith.constant 0 : i32
    return %arg0, %c0_i32, %c0_i32_0 : i32, i32, i32
  }
}

</mosaic_0001>

<llo_original>
// kernel: double_conv3d_pallas.1
$region0: #{double_conv3d_pallas.1}
  #allocation0 [shape = 'u32[]', space=smem, size = 0x4, offset = 0x4, fixed_abs, tag = 'smem constant byte address 0x4 - core index']
  #allocation1 [shape = 'u32[144,128]{1,0:T(1,128)}', space=vmem, size = 0x12000, scoped, tag = 'internal scratch']
  #allocation2 [shape = 'bf16[216,1024]{1,0:T(8,128)(2,1)}', space=vmem, size = 0x6c000, scoped, tag = 'scratch operand']
  %s0 = inlined_call_operand.vmem [shape: f32[1,1024], index: 0, kind: input, shape index: {}]
  %s1 = inlined_call_operand.vmem [shape: f32[2,8,1024], index: 1, kind: input, shape index: {}]
  %s2 = inlined_call_operand.vmem [shape: bf16[8,216], index: 2, kind: input, shape index: {}]
  %s3 = inlined_call_operand.vmem [shape: bf16[8,216], index: 3, kind: input, shape index: {}]
  %s4 = inlined_call_operand.vmem [shape: f32[2,8,1024], index: 4, kind: output, shape index: {}]
  %s5 = sld [smem:[#allocation0]]
  $region49: #{double_conv3d_pallas.1} parent=0
    _
  %s7 = ssub.s32 1, %s5
  %s8 = scalar_select 0, %s7, %s5
  loop: start=0, step=1, limit=4
  $region2: #{double_conv3d_pallas.1} parent=0 // loop_pre_header
    _
  $region3: #{double_conv3d_pallas.1} parent=0 // loop_header
    %s10 = sphi 0, %s14
    %p11 = scmp.ge.s32.totalorder %s10, 4
    %s18 = sphi 0, %s18
    %s20 = sphi 0, %s18
    %s21 = sphi 0, %s20
    %s35 = sphi 0, %s21
    %s41 = sphi 0, %s43
    %s44 = sphi 0, %s41
    %s45 = sphi 0, %s44
    %s61 = sphi 0, %s45
    %s65 = sphi 0, %s65
    %s67 = sphi 0, %s65
    %s68 = sphi 0, %s67
    %s82 = sphi 0, %s68
    %s86 = sphi 0, %s86
    %s88 = sphi 0, %s86
    %s89 = sphi 0, %s88
    %s103 = sphi 0, %s89
    %s109 = sphi 0, %s111
    %s112 = sphi 0, %s109
    %s113 = sphi 0, %s112
    %s129 = sphi 0, %s113
  $region4: #{double_conv3d_pallas.1} parent=0 // loop_header_branch
    %13 = sbr.rel (%p11) target = $region8
  $region5: #{double_conv3d_pallas.1} parent=0 // loop_body
    %s15 = ssub.s32 %s10, 1
    %s16 = ssub.s32 %s10, 2
    %s17 = sadd.s32 %s10, 1
    %s19 = sadd.s32 %s18, 1
    %p22 = scmp.eq.s32.totalorder %s10, 1
    %p23 = scmp.ne.s32.totalorder %s18, %s20
    %p24 = scmp.eq.s32.totalorder %s10, 0
    %p25 = por %p23, %p24
    %p26 = scmp.ne.s32.totalorder %s18, %s20
    %p27 = scmp.eq.s32.totalorder %s15, 1
    %p28 = por %p26, %p27
    %p29 = scmp.ne.s32.totalorder %s20, %s21
    %p30 = scmp.eq.s32.totalorder %s15, 0
    %p31 = por %p29, %p30
    %p32 = scmp.ne.s32.totalorder %s20, %s21
    %p33 = scmp.eq.s32.totalorder %s16, 1
    %p34 = por %p32, %p33
    %p36 = scmp.ne.s32.totalorder %s21, %s35
    %p37 = scmp.eq.s32.totalorder %s16, 0
    %p38 = por %p36, %p37
    %s39 = ssub.s32 %s10, %s17
    %p40 = scmp.eq.s32.totalorder %s39, 0
    %s42 = sadd.s32 %s41, 1
    %s43 = scalar_select %p40, %s41, %s42
    %p46 = pneg %p40
    %p47 = scmp.eq.s32.totalorder %s10, 1
    %p48 = por %p46, %p47
    %p49 = scmp.ne.s32.totalorder %s41, %s44
    %p50 = scmp.eq.s32.totalorder %s10, 0
    %p51 = por %p49, %p50
    %p52 = scmp.ne.s32.totalorder %s41, %s44
    %p53 = scmp.eq.s32.totalorder %s15, 1
    %p54 = por %p52, %p53
    %p55 = scmp.ne.s32.totalorder %s44, %s45
    %p56 = scmp.eq.s32.totalorder %s15, 0
    %p57 = por %p55, %p56
    %p58 = scmp.ne.s32.totalorder %s44, %s45
    %p59 = scmp.eq.s32.totalorder %s16, 1
    %p60 = por %p58, %p59
    %p62 = scmp.ne.s32.totalorder %s45, %s61
    %p63 = scmp.eq.s32.totalorder %s16, 0
    %p64 = por %p62, %p63
    %s66 = sadd.s32 %s65, 1
    %p69 = scmp.eq.s32.totalorder %s10, 1
    %p70 = scmp.ne.s32.totalorder %s65, %s67
    %p71 = scmp.eq.s32.totalorder %s10, 0
    %p72 = por %p70, %p71
    %p73 = scmp.ne.s32.totalorder %s65, %s67
    %p74 = scmp.eq.s32.totalorder %s15, 1
    %p75 = por %p73, %p74
    %p76 = scmp.ne.s32.totalorder %s67, %s68
    %p77 = scmp.eq.s32.totalorder %s15, 0
    %p78 = por %p76, %p77
    %p79 = scmp.ne.s32.totalorder %s67, %s68
    %p80 = scmp.eq.s32.totalorder %s16, 1
    %p81 = por %p79, %p80
    %p83 = scmp.ne.s32.totalorder %s68, %s82
    %p84 = scmp.eq.s32.totalorder %s16, 0
    %p85 = por %p83, %p84
    %s87 = sadd.s32 %s86, 1
    %p90 = scmp.eq.s32.totalorder %s10, 1
    %p91 = scmp.ne.s32.totalorder %s86, %s88
    %p92 = scmp.eq.s32.totalorder %s10, 0
    %p93 = por %p91, %p92
    %p94 = scmp.ne.s32.totalorder %s86, %s88
    %p95 = scmp.eq.s32.totalorder %s15, 1
    %p96 = por %p94, %p95
    %p97 = scmp.ne.s32.totalorder %s88, %s89
    %p98 = scmp.eq.s32.totalorder %s15, 0
    %p99 = por %p97, %p98
    %p100 = scmp.ne.s32.totalorder %s88, %s89
    %p101 = scmp.eq.s32.totalorder %s16, 1
    %p102 = por %p100, %p101
    %p104 = scmp.ne.s32.totalorder %s89, %s103
    %p105 = scmp.eq.s32.totalorder %s16, 0
    %p106 = por %p104, %p105
    %s107 = ssub.s32 %s10, %s17
    %p108 = scmp.eq.s32.totalorder %s107, 0
    %s110 = sadd.s32 %s109, 1
    %s111 = scalar_select %p108, %s109, %s110
    %p114 = pneg %p108
    %p115 = scmp.eq.s32.totalorder %s10, 1
    %p116 = por %p114, %p115
    %p117 = scmp.ne.s32.totalorder %s109, %s112
    %p118 = scmp.eq.s32.totalorder %s10, 0
    %p119 = por %p117, %p118
    %p120 = scmp.ne.s32.totalorder %s109, %s112
    %p121 = scmp.eq.s32.totalorder %s15, 1
    %p122 = por %p120, %p121
    %p123 = scmp.ne.s32.totalorder %s112, %s113
    %p124 = scmp.eq.s32.totalorder %s15, 0
    %p125 = por %p123, %p124
    %p126 = scmp.ne.s32.totalorder %s112, %s113
    %p127 = scmp.eq.s32.totalorder %s16, 1
    %p128 = por %p126, %p127
    %p130 = scmp.ne.s32.totalorder %s113, %s129
    %p131 = scmp.eq.s32.totalorder %s16, 0
    %p132 = por %p130, %p131
    %p133 = scmp.le.s32.totalorder 1, %s10
    %p134 = scmp.lt.s32.totalorder %s10, 3
    %p135 = pnand %p133, %p134
    %p136 = pneg %p135
    // Predicated region
    $region9: #{double_conv3d_pallas.1} parent=5 // pred_check
      _
    $region10: #{double_conv3d_pallas.1} parent=5 // pred_check_branch
      %138 = sbr.rel (%p135) target = $region12
    $region11: #{double_conv3d_pallas.1} parent=5 // pred_region
      %s139 = ssub.s32 %s10, 1
      // Predicated region
      $region13: #{double_conv3d_pallas.1} parent=11 // pred_check
        %p140 = pneg %p31
      $region14: #{double_conv3d_pallas.1} parent=11 // pred_check_branch
        %142 = sbr.rel (%p140) target = $region16
      $region15: #{double_conv3d_pallas.1} parent=11 // pred_region
        _
      $region16: #{double_conv3d_pallas.1} parent=11 // pred_fallthru
        _
      // Predicated region
      $region17: #{double_conv3d_pallas.1} parent=11 // pred_check
        %p143 = pneg %p78
      $region18: #{double_conv3d_pallas.1} parent=11 // pred_check_branch
        %145 = sbr.rel (%p143) target = $region20
      $region19: #{double_conv3d_pallas.1} parent=11 // pred_region
        _
      $region20: #{double_conv3d_pallas.1} parent=11 // pred_fallthru
        _
      // Predicated region
      $region21: #{double_conv3d_pallas.1} parent=11 // pred_check
        %p146 = pneg %p99
      $region22: #{double_conv3d_pallas.1} parent=11 // pred_check_branch
        %148 = sbr.rel (%p146) target = $region24
      $region23: #{double_conv3d_pallas.1} parent=11 // pred_region
        _
      $region24: #{double_conv3d_pallas.1} parent=11 // pred_fallthru
        _
    $region12: #{double_conv3d_pallas.1} parent=5 // pred_fallthru
      _
    %p149 = scmp.lt.s32.totalorder %s10, 2
    // Predicated region
    $region25: #{double_conv3d_pallas.1} parent=5 // pred_check
      %p150 = pneg %p149
    $region26: #{double_conv3d_pallas.1} parent=5 // pred_check_branch
      %152 = sbr.rel (%p150) target = $region28
    $region27: #{double_conv3d_pallas.1} parent=5 // pred_region
      // Predicated region
      $region29: #{double_conv3d_pallas.1} parent=27 // pred_check
        %p153 = pneg %p51
      $region30: #{double_conv3d_pallas.1} parent=27 // pred_check_branch
        %155 = sbr.rel (%p153) target = $region32
      $region31: #{double_conv3d_pallas.1} parent=27 // pred_region
        %p156 = scmp.lt.s32.totalorder %s10, 1
        %s157 = scalar_select %p156, %s10, 1
        %s158 = smul.addr %s157, 8
        %s159 = smul.addr %s158, 8
        %s160 = scalar_lea.vmem %s1, %s159
      $region32: #{double_conv3d_pallas.1} parent=27 // pred_fallthru
        _
    $region28: #{double_conv3d_pallas.1} parent=5 // pred_fallthru
      _
    %p161 = scmp.le.s32.totalorder 1, %s10
    %p162 = scmp.lt.s32.totalorder %s10, 3
    %p163 = pnand %p161, %p162
    %p164 = pneg %p163
    // Predicated region
    $region33: #{double_conv3d_pallas.1} parent=5 // pred_check
      _
    $region34: #{double_conv3d_pallas.1} parent=5 // pred_check_branch
      %166 = sbr.rel (%p163) target = $region36
    $region35: #{double_conv3d_pallas.1} parent=5 // pred_region
      %s167 = ssub.s32 %s10, 1
      %p168 = pneg %p31
      %p169 = pneg %p28
      %p170 = scmp.lt.s32.totalorder %s15, 1
      %s171 = scalar_select %p170, %s15, 1
      %s172 = smul.addr %s171, 8
      %s173 = smul.addr %s172, 8
      %s174 = scalar_lea.vmem %s1, %s173
      %p175 = pneg %p57
      %p176 = pneg %p54
      %p177 = pneg %p78
      %p178 = pneg %p75
      %p179 = pneg %p99
      %p180 = pneg %p96
      %p181 = pneg %p125
      %p182 = pneg %p122
      %p183 = scmp.lt.s32.totalorder %s15, 1
      %s184 = scalar_select %p183, %s15, 1
      %s185 = smul.addr %s184, 8
      %s186 = smul.addr %s185, 8
      %s187 = scalar_lea.vmem %s4, %s186
      %p188 = scmp.lt.s32.totalorder %s15, 1
      %s189 = scalar_select %p188, %s15, 1
      %s190 = smul.addr %s189, 8
      %s191 = smul.addr %s190, 8
      %s192 = scalar_lea.vmem %s1, %s191
      %p193 = scmp.lt.s32.totalorder %s15, 1
      %s194 = scalar_select %p193, %s15, 1
      %s195 = smul.addr %s194, 8
      %s196 = smul.addr %s195, 8
      %s197 = scalar_lea.vmem %s4, %s196
      %v199 = vld [vmem:[%s0] sm:$0xff]
      %v200 = vld [vmem:[%s192] sm:$0xff]
      %v201 = vld [vmem:[%s192 + $0x8] sm:$0xff]
      %v202 = vld [vmem:[%s192 + $0x10] sm:$0xff]
      %v203 = vld [vmem:[%s192 + $0x18] sm:$0xff]
      %v204 = vld [vmem:[%s192 + $0x20] sm:$0xff]
      %v205 = vld [vmem:[%s192 + $0x28] sm:$0xff]
      %v206 = vld [vmem:[%s192 + $0x30] sm:$0xff]
      %v207 = vld [vmem:[%s192 + $0x38] sm:$0xff]
      %208 = vrot.lane.b32.xlu0 %v200, 111
      %v209 = vpop.permute.xlu0 %208
      %210 = vrot.lane.b32.xlu0 %v201, 111
      %v211 = vpop.permute.xlu0 %210
      %212 = vrot.lane.b32.xlu0 %v202, 111
      %v213 = vpop.permute.xlu0 %212
      %214 = vrot.lane.b32.xlu0 %v203, 111
      %v215 = vpop.permute.xlu0 %214
      %216 = vrot.lane.b32.xlu0 %v204, 111
      %v217 = vpop.permute.xlu0 %216
      %218 = vrot.lane.b32.xlu0 %v205, 111
      %v219 = vpop.permute.xlu0 %218
      %220 = vrot.lane.b32.xlu0 %v206, 111
      %v221 = vpop.permute.xlu0 %220
      %222 = vrot.lane.b32.xlu0 %v207, 111
      %v223 = vpop.permute.xlu0 %222
      %v224 = vlaneseq
      %v225 = vand.u32 %v224, 127
      %vm226 = vcmp.lt.s32.totalorder %v225, 111
      %v227 = vsel %vm226, %v221, %v223
      %v228 = vsel %vm226, %v219, %v221
      %v229 = vsel %vm226, %v217, %v219
      %v230 = vsel %vm226, %v215, %v217
      %v231 = vsel %vm226, %v213, %v215
      %v232 = vsel %vm226, %v211, %v213
      %v233 = vsel %vm226, %v209, %v211
      %v234 = vsel %vm226, %v223, %v209
      %v235 = vpack.c.bf16 %v234, %v234
      %v236 = vpack.c.bf16 %v233, %v233
      %v237 = vpack.c.bf16 %v232, %v232
      %v238 = vpack.c.bf16 %v231, %v231
      %v239 = vpack.c.bf16 %v230, %v230
      %v240 = vpack.c.bf16 %v229, %v229
      %v241 = vpack.c.bf16 %v228, %v228
      %v242 = vpack.c.bf16 %v227, %v227
      %v251 = vunpack.c.l.b16 %v235
      %v252 = vunpack.c.l.b16 %v236
      %v253 = vunpack.c.l.b16 %v237
      %v254 = vunpack.c.l.b16 %v238
      %v255 = vunpack.c.l.b16 %v239
      %v256 = vunpack.c.l.b16 %v240
      %v257 = vunpack.c.l.b16 %v241
      %v258 = vunpack.c.l.b16 %v242
      %v259 = vpack.c.b16 %v252, %v251
      %v260 = vpack.c.b16 %v254, %v253
      %v261 = vpack.c.b16 %v256, %v255
      %v262 = vpack.c.b16 %v258, %v257
      %267 = vst [vmem:[#allocation2] sm:$0xff] %v259
      %268 = vst [vmem:[#allocation2 + $0x8] sm:$0xff] %v260
      %269 = vst [vmem:[#allocation2 + $0x10] sm:$0xff] %v261
      %270 = vst [vmem:[#allocation2 + $0x18] sm:$0xff] %v262
      %271 = vrot.lane.b32.xlu0 %v200, 110
      %v272 = vpop.permute.xlu0 %271
      %273 = vrot.lane.b32.xlu0 %v201, 110
      %v274 = vpop.permute.xlu0 %273
      %275 = vrot.lane.b32.xlu0 %v202, 110
      %v276 = vpop.permute.xlu0 %275
      %277 = vrot.lane.b32.xlu0 %v203, 110
      %v278 = vpop.permute.xlu0 %277
      %279 = vrot.lane.b32.xlu0 %v204, 110
      %v280 = vpop.permute.xlu0 %279
      %281 = vrot.lane.b32.xlu0 %v205, 110
      %v282 = vpop.permute.xlu0 %281
      %283 = vrot.lane.b32.xlu0 %v206, 110
      %v284 = vpop.permute.xlu0 %283
      %285 = vrot.lane.b32.xlu0 %v207, 110
      %v286 = vpop.permute.xlu0 %285
      %vm287 = vcmp.lt.s32.totalorder %v225, 110
      %v288 = vsel %vm287, %v284, %v286
      %v289 = vsel %vm287, %v282, %v284
      %v290 = vsel %vm287, %v280, %v282
      %v291 = vsel %vm287, %v278, %v280
      %v292 = vsel %vm287, %v276, %v278
      %v293 = vsel %vm287, %v274, %v276
      %v294 = vsel %vm287, %v272, %v274
      %v295 = vsel %vm287, %v286, %v272
      %v296 = vpack.c.bf16 %v295, %v295
      %v297 = vpack.c.bf16 %v294, %v294
      %v298 = vpack.c.bf16 %v293, %v293
      %v299 = vpack.c.bf16 %v292, %v292
      %v300 = vpack.c.bf16 %v291, %v291
      %v301 = vpack.c.bf16 %v290, %v290
      %v302 = vpack.c.bf16 %v289, %v289
      %v303 = vpack.c.bf16 %v288, %v288
      %v312 = vunpack.c.l.b16 %v296
      %v313 = vunpack.c.l.b16 %v297
      %v314 = vunpack.c.l.b16 %v298
      %v315 = vunpack.c.l.b16 %v299
      %v316 = vunpack.c.l.b16 %v300
      %v317 = vunpack.c.l.b16 %v301
      %v318 = vunpack.c.l.b16 %v302
      %v319 = vunpack.c.l.b16 %v303
      %v320 = vpack.c.b16 %v313, %v312
      %v321 = vpack.c.b16 %v315, %v314
      %v322 = vpack.c.b16 %v317, %v316
      %v323 = vpack.c.b16 %v319, %v318
      %328 = vst [vmem:[#allocation2 + $0x20] sm:$0xff] %v320
      %329 = vst [vmem:[#allocation2 + $0x28] sm:$0xff] %v321
      %330 = vst [vmem:[#allocation2 + $0x30] sm:$0xff] %v322
      %331 = vst [vmem:[#allocation2 + $0x38] sm:$0xff] %v323
      %332 = vrot.lane.b32.xlu0 %v200, 109
      %v333 = vpop.permute.xlu0 %332
      %334 = vrot.lane.b32.xlu0 %v201, 109
      %v335 = vpop.permute.xlu0 %334
      %336 = vrot.lane.b32.xlu0 %v202, 109
      %v337 = vpop.permute.xlu0 %336
      %338 = vrot.lane.b32.xlu0 %v203, 109
      %v339 = vpop.permute.xlu0 %338
      %340 = vrot.lane.b32.xlu0 %v204, 109
      %v341 = vpop.permute.xlu0 %340
      %342 = vrot.lane.b32.xlu0 %v205, 109
      %v343 = vpop.permute.xlu0 %342
      %344 = vrot.lane.b32.xlu0 %v206, 109
      %v345 = vpop.permute.xlu0 %344
      %346 = vrot.lane.b32.xlu0 %v207, 109
      %v347 = vpop.permute.xlu0 %346
      %vm348 = vcmp.lt.s32.totalorder %v225, 109
      %v349 = vsel %vm348, %v345, %v347
      %v350 = vsel %vm348, %v343, %v345
      %v351 = vsel %vm348, %v341, %v343
      %v352 = vsel %vm348, %v339, %v341
      %v353 = vsel %vm348, %v337, %v339
      %v354 = vsel %vm348, %v335, %v337
      %v355 = vsel %vm348, %v333, %v335
      %v356 = vsel %vm348, %v347, %v333
      %v357 = vpack.c.bf16 %v356, %v356
      %v358 = vpack.c.bf16 %v355, %v355
      %v359 = vpack.c.bf16 %v354, %v354
      %v360 = vpack.c.bf16 %v353, %v353
      %v361 = vpack.c.bf16 %v352, %v352
      %v362 = vpack.c.bf16 %v351, %v351
      %v363 = vpack.c.bf16 %v350, %v350
      %v364 = vpack.c.bf16 %v349, %v349
      %v373 = vunpack.c.l.b16 %v357
      %v374 = vunpack.c.l.b16 %v358
      %v375 = vunpack.c.l.b16 %v359
      %v376 = vunpack.c.l.b16 %v360
      %v377 = vunpack.c.l.b16 %v361
      %v378 = vunpack.c.l.b16 %v362
      %v379 = vunpack.c.l.b16 %v363
      %v380 = vunpack.c.l.b16 %v364
      %v381 = vpack.c.b16 %v374, %v373
      %v382 = vpack.c.b16 %v376, %v375
      %v383 = vpack.c.b16 %v378, %v377
      %v384 = vpack.c.b16 %v380, %v379
      %389 = vst [vmem:[#allocation2 + $0x40] sm:$0xff] %v381
      %390 = vst [vmem:[#allocation2 + $0x48] sm:$0xff] %v382
      %391 = vst [vmem:[#allocation2 + $0x50] sm:$0xff] %v383
      %392 = vst [vmem:[#allocation2 + $0x58] sm:$0xff] %v384
      %393 = vrot.lane.b32.xlu0 %v200, 101
      %v394 = vpop.permute.xlu0 %393
      %395 = vrot.lane.b32.xlu0 %v201, 101
      %v396 = vpop.permute.xlu0 %395
      %397 = vrot.lane.b32.xlu0 %v202, 101
      %v398 = vpop.permute.xlu0 %397
      %399 = vrot.lane.b32.xlu0 %v203, 101
      %v400 = vpop.permute.xlu0 %399
      %401 = vrot.lane.b32.xlu0 %v204, 101
      %v402 = vpop.permute.xlu0 %401
      %403 = vrot.lane.b32.xlu0 %v205, 101
      %v404 = vpop.permute.xlu0 %403
      %405 = vrot.lane.b32.xlu0 %v206, 101
      %v406 = vpop.permute.xlu0 %405
      %407 = vrot.lane.b32.xlu0 %v207, 101
      %v408 = vpop.permute.xlu0 %407
      %vm409 = vcmp.lt.s32.totalorder %v225, 101
      %v410 = vsel %vm409, %v406, %v408
      %v411 = vsel %vm409, %v404, %v406
      %v412 = vsel %vm409, %v402, %v404
      %v413 = vsel %vm409, %v400, %v402
      %v414 = vsel %vm409, %v398, %v400
      %v415 = vsel %vm409, %v396, %v398
      %v416 = vsel %vm409, %v394, %v396
      %v417 = vsel %vm409, %v408, %v394
      %v418 = vpack.c.bf16 %v417, %v417
      %v419 = vpack.c.bf16 %v416, %v416
      %v420 = vpack.c.bf16 %v415, %v415
      %v421 = vpack.c.bf16 %v414, %v414
      %v422 = vpack.c.bf16 %v413, %v413
      %v423 = vpack.c.bf16 %v412, %v412
      %v424 = vpack.c.bf16 %v411, %v411
      %v425 = vpack.c.bf16 %v410, %v410
      %v434 = vunpack.c.l.b16 %v418
      %v435 = vunpack.c.l.b16 %v419
      %v436 = vunpack.c.l.b16 %v420
      %v437 = vunpack.c.l.b16 %v421
      %v438 = vunpack.c.l.b16 %v422
      %v439 = vunpack.c.l.b16 %v423
      %v440 = vunpack.c.l.b16 %v424
      %v441 = vunpack.c.l.b16 %v425
      %v442 = vpack.c.b16 %v435, %v434
      %v443 = vpack.c.b16 %v437, %v436
      %v444 = vpack.c.b16 %v439, %v438
      %v445 = vpack.c.b16 %v441, %v440
      %450 = vst [vmem:[#allocation2 + $0x60] sm:$0xff] %v442
      %451 = vst [vmem:[#allocation2 + $0x68] sm:$0xff] %v443
      %452 = vst [vmem:[#allocation2 + $0x70] sm:$0xff] %v444
      %453 = vst [vmem:[#allocation2 + $0x78] sm:$0xff] %v445
      %454 = vrot.lane.b32.xlu0 %v200, 100
      %v455 = vpop.permute.xlu0 %454
      %456 = vrot.lane.b32.xlu0 %v201, 100
      %v457 = vpop.permute.xlu0 %456
      %458 = vrot.lane.b32.xlu0 %v202, 100
      %v459 = vpop.permute.xlu0 %458
      %460 = vrot.lane.b32.xlu0 %v203, 100
      %v461 = vpop.permute.xlu0 %460
      %462 = vrot.lane.b32.xlu0 %v204, 100
      %v463 = vpop.permute.xlu0 %462
      %464 = vrot.lane.b32.xlu0 %v205, 100
      %v465 = vpop.permute.xlu0 %464
      %466 = vrot.lane.b32.xlu0 %v206, 100
      %v467 = vpop.permute.xlu0 %466
      %468 = vrot.lane.b32.xlu0 %v207, 100
      %v469 = vpop.permute.xlu0 %468
      %vm470 = vcmp.lt.s32.totalorder %v225, 100
      %v471 = vsel %vm470, %v467, %v469
      %v472 = vsel %vm470, %v465, %v467
      %v473 = vsel %vm470, %v463, %v465
      %v474 = vsel %vm470, %v461, %v463
      %v475 = vsel %vm470, %v459, %v461
      %v476 = vsel %vm470, %v457, %v459
      %v477 = vsel %vm470, %v455, %v457
      %v478 = vsel %vm470, %v469, %v455
      %v479 = vpack.c.bf16 %v478, %v478
      %v480 = vpack.c.bf16 %v477, %v477
      %v481 = vpack.c.bf16 %v476, %v476
      %v482 = vpack.c.bf16 %v475, %v475
      %v483 = vpack.c.bf16 %v474, %v474
      %v484 = vpack.c.bf16 %v473, %v473
      %v485 = vpack.c.bf16 %v472, %v472
      %v486 = vpack.c.bf16 %v471, %v471
      %v495 = vunpack.c.l.b16 %v479
      %v496 = vunpack.c.l.b16 %v480
      %v497 = vunpack.c.l.b16 %v481
      %v498 = vunpack.c.l.b16 %v482
      %v499 = vunpack.c.l.b16 %v483
      %v500 = vunpack.c.l.b16 %v484
      %v501 = vunpack.c.l.b16 %v485
      %v502 = vunpack.c.l.b16 %v486
      %v503 = vpack.c.b16 %v496, %v495
      %v504 = vpack.c.b16 %v498, %v497
      %v505 = vpack.c.b16 %v500, %v499
      %v506 = vpack.c.b16 %v502, %v501
      %511 = vst [vmem:[#allocation2 + $0x80] sm:$0xff] %v503
      %512 = vst [vmem:[#allocation2 + $0x88] sm:$0xff] %v504
      %513 = vst [vmem:[#allocation2 + $0x90] sm:$0xff] %v505
      %514 = vst [vmem:[#allocation2 + $0x98] sm:$0xff] %v506
      %515 = vrot.lane.b32.xlu0 %v200, 99
      %v516 = vpop.permute.xlu0 %515
      %517 = vrot.lane.b32.xlu0 %v201, 99
      %v518 = vpop.permute.xlu0 %517
      %519 = vrot.lane.b32.xlu0 %v202, 99
      %v520 = vpop.permute.xlu0 %519
      %521 = vrot.lane.b32.xlu0 %v203, 99
      %v522 = vpop.permute.xlu0 %521
      %523 = vrot.lane.b32.xlu0 %v204, 99
      %v524 = vpop.permute.xlu0 %523
      %525 = vrot.lane.b32.xlu0 %v205, 99
      %v526 = vpop.permute.xlu0 %525
      %527 = vrot.lane.b32.xlu0 %v206, 99
      %v528 = vpop.permute.xlu0 %527
      %529 = vrot.lane.b32.xlu0 %v207, 99
      %v530 = vpop.permute.xlu0 %529
      %vm531 = vcmp.lt.s32.totalorder %v225, 99
      %v532 = vsel %vm531, %v528, %v530
      %v533 = vsel %vm531, %v526, %v528
      %v534 = vsel %vm531, %v524, %v526
      %v535 = vsel %vm531, %v522, %v524
      %v536 = vsel %vm531, %v520, %v522
      %v537 = vsel %vm531, %v518, %v520
      %v538 = vsel %vm531, %v516, %v518
      %v539 = vsel %vm531, %v530, %v516
      %v540 = vpack.c.bf16 %v539, %v539
      %v541 = vpack.c.bf16 %v538, %v538
      %v542 = vpack.c.bf16 %v537, %v537
      %v543 = vpack.c.bf16 %v536, %v536
      %v544 = vpack.c.bf16 %v535, %v535
      %v545 = vpack.c.bf16 %v534, %v534
      %v546 = vpack.c.bf16 %v533, %v533
      %v547 = vpack.c.bf16 %v532, %v532
      %v556 = vunpack.c.l.b16 %v540
      %v557 = vunpack.c.l.b16 %v541
      %v558 = vunpack.c.l.b16 %v542
      %v559 = vunpack.c.l.b16 %v543
      %v560 = vunpack.c.l.b16 %v544
      %v561 = vunpack.c.l.b16 %v545
      %v562 = vunpack.c.l.b16 %v546
      %v563 = vunpack.c.l.b16 %v547
      %v564 = vpack.c.b16 %v557, %v556
      %v565 = vpack.c.b16 %v559, %v558
      %v566 = vpack.c.b16 %v561, %v560
      %v567 = vpack.c.b16 %v563, %v562
      %572 = vst [vmem:[#allocation2 + $0xa0] sm:$0xff] %v564
      %573 = vst [vmem:[#allocation2 + $0xa8] sm:$0xff] %v565
      %574 = vst [vmem:[#allocation2 + $0xb0] sm:$0xff] %v566
      %575 = vst [vmem:[#allocation2 + $0xb8] sm:$0xff] %v567
      %576 = vrot.lane.b32.xlu0 %v200, 91
      %v577 = vpop.permute.xlu0 %576
      %578 = vrot.lane.b32.xlu0 %v201, 91
      %v579 = vpop.permute.xlu0 %578
      %580 = vrot.lane.b32.xlu0 %v202, 91
      %v581 = vpop.permute.xlu0 %580
      %582 = vrot.lane.b32.xlu0 %v203, 91
      %v583 = vpop.permute.xlu0 %582
      %584 = vrot.lane.b32.xlu0 %v204, 91
      %v585 = vpop.permute.xlu0 %584
      %586 = vrot.lane.b32.xlu0 %v205, 91
      %v587 = vpop.permute.xlu0 %586
      %588 = vrot.lane.b32.xlu0 %v206, 91
      %v589 = vpop.permute.xlu0 %588
      %590 = vrot.lane.b32.xlu0 %v207, 91
      %v591 = vpop.permute.xlu0 %590
      %vm592 = vcmp.lt.s32.totalorder %v225, 91
      %v593 = vsel %vm592, %v589, %v591
      %v594 = vsel %vm592, %v587, %v589
      %v595 = vsel %vm592, %v585, %v587
      %v596 = vsel %vm592, %v583, %v585
      %v597 = vsel %vm592, %v581, %v583
      %v598 = vsel %vm592, %v579, %v581
      %v599 = vsel %vm592, %v577, %v579
      %v600 = vsel %vm592, %v591, %v577
      %v601 = vpack.c.bf16 %v600, %v600
      %v602 = vpack.c.bf16 %v599, %v599
      %v603 = vpack.c.bf16 %v598, %v598
      %v604 = vpack.c.bf16 %v597, %v597
      %v605 = vpack.c.bf16 %v596, %v596
      %v606 = vpack.c.bf16 %v595, %v595
      %v607 = vpack.c.bf16 %v594, %v594
      %v608 = vpack.c.bf16 %v593, %v593
      %v617 = vunpack.c.l.b16 %v601
      %v618 = vunpack.c.l.b16 %v602
      %v619 = vunpack.c.l.b16 %v603
      %v620 = vunpack.c.l.b16 %v604
      %v621 = vunpack.c.l.b16 %v605
      %v622 = vunpack.c.l.b16 %v606
      %v623 = vunpack.c.l.b16 %v607
      %v624 = vunpack.c.l.b16 %v608
      %v625 = vpack.c.b16 %v618, %v617
      %v626 = vpack.c.b16 %v620, %v619
      %v627 = vpack.c.b16 %v622, %v621
      %v628 = vpack.c.b16 %v624, %v623
      %633 = vst [vmem:[#allocation2 + $0xc0] sm:$0xff] %v625
      %634 = vst [vmem:[#allocation2 + $0xc8] sm:$0xff] %v626
      %635 = vst [vmem:[#allocation2 + $0xd0] sm:$0xff] %v627
      %636 = vst [vmem:[#allocation2 + $0xd8] sm:$0xff] %v628
      %637 = vrot.lane.b32.xlu0 %v200, 90
      %v638 = vpop.permute.xlu0 %637
      %639 = vrot.lane.b32.xlu0 %v201, 90
      %v640 = vpop.permute.xlu0 %639
      %641 = vrot.lane.b32.xlu0 %v202, 90
      %v642 = vpop.permute.xlu0 %641
      %643 = vrot.lane.b32.xlu0 %v203, 90
      %v644 = vpop.permute.xlu0 %643
      %645 = vrot.lane.b32.xlu0 %v204, 90
      %v646 = vpop.permute.xlu0 %645
      %647 = vrot.lane.b32.xlu0 %v205, 90
      %v648 = vpop.permute.xlu0 %647
      %649 = vrot.lane.b32.xlu0 %v206, 90
      %v650 = vpop.permute.xlu0 %649
      %651 = vrot.lane.b32.xlu0 %v207, 90
      %v652 = vpop.permute.xlu0 %651
      %vm653 = vcmp.lt.s32.totalorder %v225, 90
      %v654 = vsel %vm653, %v650, %v652
      %v655 = vsel %vm653, %v648, %v650
      %v656 = vsel %vm653, %v646, %v648
      %v657 = vsel %vm653, %v644, %v646
      %v658 = vsel %vm653, %v642, %v644
      %v659 = vsel %vm653, %v640, %v642
      %v660 = vsel %vm653, %v638, %v640
      %v661 = vsel %vm653, %v652, %v638
      %v662 = vpack.c.bf16 %v661, %v661
      %v663 = vpack.c.bf16 %v660, %v660
      %v664 = vpack.c.bf16 %v659, %v659
      %v665 = vpack.c.bf16 %v658, %v658
      %v666 = vpack.c.bf16 %v657, %v657
      %v667 = vpack.c.bf16 %v656, %v656
      %v668 = vpack.c.bf16 %v655, %v655
      %v669 = vpack.c.bf16 %v654, %v654
      %v678 = vunpack.c.l.b16 %v662
      %v679 = vunpack.c.l.b16 %v663
      %v680 = vunpack.c.l.b16 %v664
      %v681 = vunpack.c.l.b16 %v665
      %v682 = vunpack.c.l.b16 %v666
      %v683 = vunpack.c.l.b16 %v667
      %v684 = vunpack.c.l.b16 %v668
      %v685 = vunpack.c.l.b16 %v669
      %v686 = vpack.c.b16 %v679, %v678
      %v687 = vpack.c.b16 %v681, %v680
      %v688 = vpack.c.b16 %v683, %v682
      %v689 = vpack.c.b16 %v685, %v684
      %694 = vst [vmem:[#allocation2 + $0xe0] sm:$0xff] %v686
      %695 = vst [vmem:[#allocation2 + $0xe8] sm:$0xff] %v687
      %696 = vst [vmem:[#allocation2 + $0xf0] sm:$0xff] %v688
      %697 = vst [vmem:[#allocation2 + $0xf8] sm:$0xff] %v689
      %698 = vrot.lane.b32.xlu0 %v200, 89
      %v699 = vpop.permute.xlu0 %698
      %700 = vrot.lane.b32.xlu0 %v201, 89
      %v701 = vpop.permute.xlu0 %700
      %702 = vrot.lane.b32.xlu0 %v202, 89
      %v703 = vpop.permute.xlu0 %702
      %704 = vrot.lane.b32.xlu0 %v203, 89
      %v705 = vpop.permute.xlu0 %704
      %706 = vrot.lane.b32.xlu0 %v204, 89
      %v707 = vpop.permute.xlu0 %706
      %708 = vrot.lane.b32.xlu0 %v205, 89
      %v709 = vpop.permute.xlu0 %708
      %710 = vrot.lane.b32.xlu0 %v206, 89
      %v711 = vpop.permute.xlu0 %710
      %712 = vrot.lane.b32.xlu0 %v207, 89
      %v713 = vpop.permute.xlu0 %712
      %vm714 = vcmp.lt.s32.totalorder %v225, 89
      %v715 = vsel %vm714, %v711, %v713
      %v716 = vsel %vm714, %v709, %v711
      %v717 = vsel %vm714, %v707, %v709
      %v718 = vsel %vm714, %v705, %v707
      %v719 = vsel %vm714, %v703, %v705
      %v720 = vsel %vm714, %v701, %v703
      %v721 = vsel %vm714, %v699, %v701
      %v722 = vsel %vm714, %v713, %v699
      %v723 = vpack.c.bf16 %v722, %v722
      %v724 = vpack.c.bf16 %v721, %v721
      %v725 = vpack.c.bf16 %v720, %v720
      %v726 = vpack.c.bf16 %v719, %v719
      %v727 = vpack.c.bf16 %v718, %v718
      %v728 = vpack.c.bf16 %v717, %v717
      %v729 = vpack.c.bf16 %v716, %v716
      %v730 = vpack.c.bf16 %v715, %v715
      %v739 = vunpack.c.l.b16 %v723
      %v740 = vunpack.c.l.b16 %v724
      %v741 = vunpack.c.l.b16 %v725
      %v742 = vunpack.c.l.b16 %v726
      %v743 = vunpack.c.l.b16 %v727
      %v744 = vunpack.c.l.b16 %v728
      %v745 = vunpack.c.l.b16 %v729
      %v746 = vunpack.c.l.b16 %v730
      %v747 = vpack.c.b16 %v740, %v739
      %v748 = vpack.c.b16 %v742, %v741
      %v749 = vpack.c.b16 %v744, %v743
      %v750 = vpack.c.b16 %v746, %v745
      %755 = vst [vmem:[#allocation2 + $0x100] sm:$0xff] %v747
      %756 = vst [vmem:[#allocation2 + $0x108] sm:$0xff] %v748
      %757 = vst [vmem:[#allocation2 + $0x110] sm:$0xff] %v749
      %758 = vst [vmem:[#allocation2 + $0x118] sm:$0xff] %v750
      %759 = vrot.lane.b32.xlu0 %v200, 11
      %v760 = vpop.permute.xlu0 %759
      %761 = vrot.lane.b32.xlu0 %v201, 11
      %v762 = vpop.permute.xlu0 %761
      %763 = vrot.lane.b32.xlu0 %v202, 11
      %v764 = vpop.permute.xlu0 %763
      %765 = vrot.lane.b32.xlu0 %v203, 11
      %v766 = vpop.permute.xlu0 %765
      %767 = vrot.lane.b32.xlu0 %v204, 11
      %v768 = vpop.permute.xlu0 %767
      %769 = vrot.lane.b32.xlu0 %v205, 11
      %v770 = vpop.permute.xlu0 %769
      %771 = vrot.lane.b32.xlu0 %v206, 11
      %v772 = vpop.permute.xlu0 %771
      %773 = vrot.lane.b32.xlu0 %v207, 11
      %v774 = vpop.permute.xlu0 %773
      %vm775 = vcmp.lt.s32.totalorder %v225, 11
      %v776 = vsel %vm775, %v772, %v774
      %v777 = vsel %vm775, %v770, %v772
      %v778 = vsel %vm775, %v768, %v770
      %v779 = vsel %vm775, %v766, %v768
      %v780 = vsel %vm775, %v764, %v766
      %v781 = vsel %vm775, %v762, %v764
      %v782 = vsel %vm775, %v760, %v762
      %v783 = vsel %vm775, %v774, %v760
      %v784 = vpack.c.bf16 %v783, %v783
      %v785 = vpack.c.bf16 %v782, %v782
      %v786 = vpack.c.bf16 %v781, %v781
      %v787 = vpack.c.bf16 %v780, %v780
      %v788 = vpack.c.bf16 %v779, %v779
      %v789 = vpack.c.bf16 %v778, %v778
      %v790 = vpack.c.bf16 %v777, %v777
      %v791 = vpack.c.bf16 %v776, %v776
      %v800 = vunpack.c.l.b16 %v784
      %v801 = vunpack.c.l.b16 %v785
      %v802 = vunpack.c.l.b16 %v786
      %v803 = vunpack.c.l.b16 %v787
      %v804 = vunpack.c.l.b16 %v788
      %v805 = vunpack.c.l.b16 %v789
      %v806 = vunpack.c.l.b16 %v790
      %v807 = vunpack.c.l.b16 %v791
      %v808 = vpack.c.b16 %v801, %v800
      %v809 = vpack.c.b16 %v803, %v802
      %v810 = vpack.c.b16 %v805, %v804
      %v811 = vpack.c.b16 %v807, %v806
      %816 = vst [vmem:[#allocation2 + $0x120] sm:$0xff] %v808
      %817 = vst [vmem:[#allocation2 + $0x128] sm:$0xff] %v809
      %818 = vst [vmem:[#allocation2 + $0x130] sm:$0xff] %v810
      %819 = vst [vmem:[#allocation2 + $0x138] sm:$0xff] %v811
      %820 = vrot.lane.b32.xlu0 %v200, 10
      %v821 = vpop.permute.xlu0 %820
      %822 = vrot.lane.b32.xlu0 %v201, 10
      %v823 = vpop.permute.xlu0 %822
      %824 = vrot.lane.b32.xlu0 %v202, 10
      %v825 = vpop.permute.xlu0 %824
      %826 = vrot.lane.b32.xlu0 %v203, 10
      %v827 = vpop.permute.xlu0 %826
      %828 = vrot.lane.b32.xlu0 %v204, 10
      %v829 = vpop.permute.xlu0 %828
      %830 = vrot.lane.b32.xlu0 %v205, 10
      %v831 = vpop.permute.xlu0 %830
      %832 = vrot.lane.b32.xlu0 %v206, 10
      %v833 = vpop.permute.xlu0 %832
      %834 = vrot.lane.b32.xlu0 %v207, 10
      %v835 = vpop.permute.xlu0 %834
      %vm836 = vcmp.lt.s32.totalorder %v225, 10
      %v837 = vsel %vm836, %v833, %v835
      %v838 = vsel %vm836, %v831, %v833
      %v839 = vsel %vm836, %v829, %v831
      %v840 = vsel %vm836, %v827, %v829
      %v841 = vsel %vm836, %v825, %v827
      %v842 = vsel %vm836, %v823, %v825
      %v843 = vsel %vm836, %v821, %v823
      %v844 = vsel %vm836, %v835, %v821
      %v845 = vpack.c.bf16 %v844, %v844
      %v846 = vpack.c.bf16 %v843, %v843
      %v847 = vpack.c.bf16 %v842, %v842
      %v848 = vpack.c.bf16 %v841, %v841
      %v849 = vpack.c.bf16 %v840, %v840
      %v850 = vpack.c.bf16 %v839, %v839
      %v851 = vpack.c.bf16 %v838, %v838
      %v852 = vpack.c.bf16 %v837, %v837
      %v861 = vunpack.c.l.b16 %v845
      %v862 = vunpack.c.l.b16 %v846
      %v863 = vunpack.c.l.b16 %v847
      %v864 = vunpack.c.l.b16 %v848
      %v865 = vunpack.c.l.b16 %v849
      %v866 = vunpack.c.l.b16 %v850
      %v867 = vunpack.c.l.b16 %v851
      %v868 = vunpack.c.l.b16 %v852
      %v869 = vpack.c.b16 %v862, %v861
      %v870 = vpack.c.b16 %v864, %v863
      %v871 = vpack.c.b16 %v866, %v865
      %v872 = vpack.c.b16 %v868, %v867
      %877 = vst [vmem:[#allocation2 + $0x140] sm:$0xff] %v869
      %878 = vst [vmem:[#allocation2 + $0x148] sm:$0xff] %v870
      %879 = vst [vmem:[#allocation2 + $0x150] sm:$0xff] %v871
      %880 = vst [vmem:[#allocation2 + $0x158] sm:$0xff] %v872
      %881 = vrot.lane.b32.xlu0 %v200, 9
      %v882 = vpop.permute.xlu0 %881
      %883 = vrot.lane.b32.xlu0 %v201, 9
      %v884 = vpop.permute.xlu0 %883
      %885 = vrot.lane.b32.xlu0 %v202, 9
      %v886 = vpop.permute.xlu0 %885
      %887 = vrot.lane.b32.xlu0 %v203, 9
      %v888 = vpop.permute.xlu0 %887
      %889 = vrot.lane.b32.xlu0 %v204, 9
      %v890 = vpop.permute.xlu0 %889
      %891 = vrot.lane.b32.xlu0 %v205, 9
      %v892 = vpop.permute.xlu0 %891
      %893 = vrot.lane.b32.xlu0 %v206, 9
      %v894 = vpop.permute.xlu0 %893
      %895 = vrot.lane.b32.xlu0 %v207, 9
      %v896 = vpop.permute.xlu0 %895
      %vm897 = vcmp.lt.s32.totalorder %v225, 9
      %v898 = vsel %vm897, %v894, %v896
      %v899 = vsel %vm897, %v892, %v894
      %v900 = vsel %vm897, %v890, %v892
      %v901 = vsel %vm897, %v888, %v890
      %v902 = vsel %vm897, %v886, %v888
      %v903 = vsel %vm897, %v884, %v886
      %v904 = vsel %vm897, %v882, %v884
      %v905 = vsel %vm897, %v896, %v882
      %v906 = vpack.c.bf16 %v905, %v905
      %v907 = vpack.c.bf16 %v904, %v904
      %v908 = vpack.c.bf16 %v903, %v903
      %v909 = vpack.c.bf16 %v902, %v902
      %v910 = vpack.c.bf16 %v901, %v901
      %v911 = vpack.c.bf16 %v900, %v900
      %v912 = vpack.c.bf16 %v899, %v899
      %v913 = vpack.c.bf16 %v898, %v898
      %v922 = vunpack.c.l.b16 %v906
      %v923 = vunpack.c.l.b16 %v907
      %v924 = vunpack.c.l.b16 %v908
      %v925 = vunpack.c.l.b16 %v909
      %v926 = vunpack.c.l.b16 %v910
      %v927 = vunpack.c.l.b16 %v911
      %v928 = vunpack.c.l.b16 %v912
      %v929 = vunpack.c.l.b16 %v913
      %v930 = vpack.c.b16 %v923, %v922
      %v931 = vpack.c.b16 %v925, %v924
      %v932 = vpack.c.b16 %v927, %v926
      %v933 = vpack.c.b16 %v929, %v928
      %938 = vst [vmem:[#allocation2 + $0x160] sm:$0xff] %v930
      %939 = vst [vmem:[#allocation2 + $0x168] sm:$0xff] %v931
      %940 = vst [vmem:[#allocation2 + $0x170] sm:$0xff] %v932
      %941 = vst [vmem:[#allocation2 + $0x178] sm:$0xff] %v933
      %942 = vrot.lane.b32.xlu0 %v200, 1
      %v943 = vpop.permute.xlu0 %942
      %944 = vrot.lane.b32.xlu0 %v201, 1
      %v945 = vpop.permute.xlu0 %944
      %946 = vrot.lane.b32.xlu0 %v202, 1
      %v947 = vpop.permute.xlu0 %946
      %948 = vrot.lane.b32.xlu0 %v203, 1
      %v949 = vpop.permute.xlu0 %948
      %950 = vrot.lane.b32.xlu0 %v204, 1
      %v951 = vpop.permute.xlu0 %950
      %952 = vrot.lane.b32.xlu0 %v205, 1
      %v953 = vpop.permute.xlu0 %952
      %954 = vrot.lane.b32.xlu0 %v206, 1
      %v955 = vpop.permute.xlu0 %954
      %956 = vrot.lane.b32.xlu0 %v207, 1
      %v957 = vpop.permute.xlu0 %956
      %vm958 = vcmp.lt.s32.totalorder %v225, 1
      %v959 = vsel %vm958, %v955, %v957
      %v960 = vsel %vm958, %v953, %v955
      %v961 = vsel %vm958, %v951, %v953
      %v962 = vsel %vm958, %v949, %v951
      %v963 = vsel %vm958, %v947, %v949
      %v964 = vsel %vm958, %v945, %v947
      %v965 = vsel %vm958, %v943, %v945
      %v966 = vsel %vm958, %v957, %v943
      %v967 = vpack.c.bf16 %v966, %v966
      %v968 = vpack.c.bf16 %v965, %v965
      %v969 = vpack.c.bf16 %v964, %v964
      %v970 = vpack.c.bf16 %v963, %v963
      %v971 = vpack.c.bf16 %v962, %v962
      %v972 = vpack.c.bf16 %v961, %v961
      %v973 = vpack.c.bf16 %v960, %v960
      %v974 = vpack.c.bf16 %v959, %v959
      %v983 = vunpack.c.l.b16 %v967
      %v984 = vunpack.c.l.b16 %v968
      %v985 = vunpack.c.l.b16 %v969
      %v986 = vunpack.c.l.b16 %v970
      %v987 = vunpack.c.l.b16 %v971
      %v988 = vunpack.c.l.b16 %v972
      %v989 = vunpack.c.l.b16 %v973
      %v990 = vunpack.c.l.b16 %v974
      %v991 = vpack.c.b16 %v984, %v983
      %v992 = vpack.c.b16 %v986, %v985
      %v993 = vpack.c.b16 %v988, %v987
      %v994 = vpack.c.b16 %v990, %v989
      %999 = vst [vmem:[#allocation2 + $0x180] sm:$0xff] %v991
      %1000 = vst [vmem:[#allocation2 + $0x188] sm:$0xff] %v992
      %1001 = vst [vmem:[#allocation2 + $0x190] sm:$0xff] %v993
      %1002 = vst [vmem:[#allocation2 + $0x198] sm:$0xff] %v994
      %v1003 = vpack.c.bf16 %v200, %v200
      %v1004 = vpack.c.bf16 %v201, %v201
      %v1005 = vpack.c.bf16 %v202, %v202
      %v1006 = vpack.c.bf16 %v203, %v203
      %v1007 = vpack.c.bf16 %v204, %v204
      %v1008 = vpack.c.bf16 %v205, %v205
      %v1009 = vpack.c.bf16 %v206, %v206
      %v1010 = vpack.c.bf16 %v207, %v207
      %v1019 = vunpack.c.l.b16 %v1003
      %v1020 = vunpack.c.l.b16 %v1004
      %v1021 = vunpack.c.l.b16 %v1005
      %v1022 = vunpack.c.l.b16 %v1006
      %v1023 = vunpack.c.l.b16 %v1007
      %v1024 = vunpack.c.l.b16 %v1008
      %v1025 = vunpack.c.l.b16 %v1009
      %v1026 = vunpack.c.l.b16 %v1010
      %v1027 = vpack.c.b16 %v1020, %v1019
      %v1028 = vpack.c.b16 %v1022, %v1021
      %v1029 = vpack.c.b16 %v1024, %v1023
      %v1030 = vpack.c.b16 %v1026, %v1025
      %1035 = vst [vmem:[#allocation2 + $0x1a0] sm:$0xff] %v1027
      %1036 = vst [vmem:[#allocation2 + $0x1a8] sm:$0xff] %v1028
      %1037 = vst [vmem:[#allocation2 + $0x1b0] sm:$0xff] %v1029
      %1038 = vst [vmem:[#allocation2 + $0x1b8] sm:$0xff] %v1030
      %1039 = vrot.lane.b32.xlu0 %v200, 127
      %v1040 = vpop.permute.xlu0 %1039
      %1041 = vrot.lane.b32.xlu0 %v201, 127
      %v1042 = vpop.permute.xlu0 %1041
      %1043 = vrot.lane.b32.xlu0 %v202, 127
      %v1044 = vpop.permute.xlu0 %1043
      %1045 = vrot.lane.b32.xlu0 %v203, 127
      %v1046 = vpop.permute.xlu0 %1045
      %1047 = vrot.lane.b32.xlu0 %v204, 127
      %v1048 = vpop.permute.xlu0 %1047
      %1049 = vrot.lane.b32.xlu0 %v205, 127
      %v1050 = vpop.permute.xlu0 %1049
      %1051 = vrot.lane.b32.xlu0 %v206, 127
      %v1052 = vpop.permute.xlu0 %1051
      %1053 = vrot.lane.b32.xlu0 %v207, 127
      %v1054 = vpop.permute.xlu0 %1053
      %vm1055 = vcmp.lt.s32.totalorder %v225, 127
      %v1056 = vsel %vm1055, %v1052, %v1054
      %v1057 = vsel %vm1055, %v1050, %v1052
      %v1058 = vsel %vm1055, %v1048, %v1050
      %v1059 = vsel %vm1055, %v1046, %v1048
      %v1060 = vsel %vm1055, %v1044, %v1046
      %v1061 = vsel %vm1055, %v1042, %v1044
      %v1062 = vsel %vm1055, %v1040, %v1042
      %v1063 = vsel %vm1055, %v1054, %v1040
      %v1064 = vpack.c.bf16 %v1062, %v1062
      %v1065 = vpack.c.bf16 %v1061, %v1061
      %v1066 = vpack.c.bf16 %v1060, %v1060
      %v1067 = vpack.c.bf16 %v1059, %v1059
      %v1068 = vpack.c.bf16 %v1058, %v1058
      %v1069 = vpack.c.bf16 %v1057, %v1057
      %v1070 = vpack.c.bf16 %v1056, %v1056
      %v1071 = vpack.c.bf16 %v1063, %v1063
      %v1080 = vunpack.c.l.b16 %v1064
      %v1081 = vunpack.c.l.b16 %v1065
      %v1082 = vunpack.c.l.b16 %v1066
      %v1083 = vunpack.c.l.b16 %v1067
      %v1084 = vunpack.c.l.b16 %v1068
      %v1085 = vunpack.c.l.b16 %v1069
      %v1086 = vunpack.c.l.b16 %v1070
      %v1087 = vunpack.c.l.b16 %v1071
      %v1088 = vpack.c.b16 %v1081, %v1080
      %v1089 = vpack.c.b16 %v1083, %v1082
      %v1090 = vpack.c.b16 %v1085, %v1084
      %v1091 = vpack.c.b16 %v1087, %v1086
      %1096 = vst [vmem:[#allocation2 + $0x1c0] sm:$0xff] %v1088
      %1097 = vst [vmem:[#allocation2 + $0x1c8] sm:$0xff] %v1089
      %1098 = vst [vmem:[#allocation2 + $0x1d0] sm:$0xff] %v1090
      %1099 = vst [vmem:[#allocation2 + $0x1d8] sm:$0xff] %v1091
      %1100 = vrot.lane.b32.xlu0 %v200, 119
      %v1101 = vpop.permute.xlu0 %1100
      %1102 = vrot.lane.b32.xlu0 %v201, 119
      %v1103 = vpop.permute.xlu0 %1102
      %1104 = vrot.lane.b32.xlu0 %v202, 119
      %v1105 = vpop.permute.xlu0 %1104
      %1106 = vrot.lane.b32.xlu0 %v203, 119
      %v1107 = vpop.permute.xlu0 %1106
      %1108 = vrot.lane.b32.xlu0 %v204, 119
      %v1109 = vpop.permute.xlu0 %1108
      %1110 = vrot.lane.b32.xlu0 %v205, 119
      %v1111 = vpop.permute.xlu0 %1110
      %1112 = vrot.lane.b32.xlu0 %v206, 119
      %v1113 = vpop.permute.xlu0 %1112
      %1114 = vrot.lane.b32.xlu0 %v207, 119
      %v1115 = vpop.permute.xlu0 %1114
      %vm1116 = vcmp.lt.s32.totalorder %v225, 119
      %v1117 = vsel %vm1116, %v1113, %v1115
      %v1118 = vsel %vm1116, %v1111, %v1113
      %v1119 = vsel %vm1116, %v1109, %v1111
      %v1120 = vsel %vm1116, %v1107, %v1109
      %v1121 = vsel %vm1116, %v1105, %v1107
      %v1122 = vsel %vm1116, %v1103, %v1105
      %v1123 = vsel %vm1116, %v1101, %v1103
      %v1124 = vsel %vm1116, %v1115, %v1101
      %v1125 = vpack.c.bf16 %v1123, %v1123
      %v1126 = vpack.c.bf16 %v1122, %v1122
      %v1127 = vpack.c.bf16 %v1121, %v1121
      %v1128 = vpack.c.bf16 %v1120, %v1120
      %v1129 = vpack.c.bf16 %v1119, %v1119
      %v1130 = vpack.c.bf16 %v1118, %v1118
      %v1131 = vpack.c.bf16 %v1117, %v1117
      %v1132 = vpack.c.bf16 %v1124, %v1124
      %v1141 = vunpack.c.l.b16 %v1125
      %v1142 = vunpack.c.l.b16 %v1126
      %v1143 = vunpack.c.l.b16 %v1127
      %v1144 = vunpack.c.l.b16 %v1128
      %v1145 = vunpack.c.l.b16 %v1129
      %v1146 = vunpack.c.l.b16 %v1130
      %v1147 = vunpack.c.l.b16 %v1131
      %v1148 = vunpack.c.l.b16 %v1132
      %v1149 = vpack.c.b16 %v1142, %v1141
      %v1150 = vpack.c.b16 %v1144, %v1143
      %v1151 = vpack.c.b16 %v1146, %v1145
      %v1152 = vpack.c.b16 %v1148, %v1147
      %1157 = vst [vmem:[#allocation2 + $0x1e0] sm:$0xff] %v1149
      %1158 = vst [vmem:[#allocation2 + $0x1e8] sm:$0xff] %v1150
      %1159 = vst [vmem:[#allocation2 + $0x1f0] sm:$0xff] %v1151
      %1160 = vst [vmem:[#allocation2 + $0x1f8] sm:$0xff] %v1152
      %1161 = vrot.lane.b32.xlu0 %v200, 118
      %v1162 = vpop.permute.xlu0 %1161
      %1163 = vrot.lane.b32.xlu0 %v201, 118
      %v1164 = vpop.permute.xlu0 %1163
      %1165 = vrot.lane.b32.xlu0 %v202, 118
      %v1166 = vpop.permute.xlu0 %1165
      %1167 = vrot.lane.b32.xlu0 %v203, 118
      %v1168 = vpop.permute.xlu0 %1167
      %1169 = vrot.lane.b32.xlu0 %v204, 118
      %v1170 = vpop.permute.xlu0 %1169
      %1171 = vrot.lane.b32.xlu0 %v205, 118
      %v1172 = vpop.permute.xlu0 %1171
      %1173 = vrot.lane.b32.xlu0 %v206, 118
      %v1174 = vpop.permute.xlu0 %1173
      %1175 = vrot.lane.b32.xlu0 %v207, 118
      %v1176 = vpop.permute.xlu0 %1175
      %vm1177 = vcmp.lt.s32.totalorder %v225, 118
      %v1178 = vsel %vm1177, %v1174, %v1176
      %v1179 = vsel %vm1177, %v1172, %v1174
      %v1180 = vsel %vm1177, %v1170, %v1172
      %v1181 = vsel %vm1177, %v1168, %v1170
      %v1182 = vsel %vm1177, %v1166, %v1168
      %v1183 = vsel %vm1177, %v1164, %v1166
      %v1184 = vsel %vm1177, %v1162, %v1164
      %v1185 = vsel %vm1177, %v1176, %v1162
      %v1186 = vpack.c.bf16 %v1184, %v1184
      %v1187 = vpack.c.bf16 %v1183, %v1183
      %v1188 = vpack.c.bf16 %v1182, %v1182
      %v1189 = vpack.c.bf16 %v1181, %v1181
      %v1190 = vpack.c.bf16 %v1180, %v1180
      %v1191 = vpack.c.bf16 %v1179, %v1179
      %v1192 = vpack.c.bf16 %v1178, %v1178
      %v1193 = vpack.c.bf16 %v1185, %v1185
      %v1202 = vunpack.c.l.b16 %v1186
      %v1203 = vunpack.c.l.b16 %v1187
      %v1204 = vunpack.c.l.b16 %v1188
      %v1205 = vunpack.c.l.b16 %v1189
      %v1206 = vunpack.c.l.b16 %v1190
      %v1207 = vunpack.c.l.b16 %v1191
      %v1208 = vunpack.c.l.b16 %v1192
      %v1209 = vunpack.c.l.b16 %v1193
      %v1210 = vpack.c.b16 %v1203, %v1202
      %v1211 = vpack.c.b16 %v1205, %v1204
      %v1212 = vpack.c.b16 %v1207, %v1206
      %v1213 = vpack.c.b16 %v1209, %v1208
      %1218 = vst [vmem:[#allocation2 + $0x200] sm:$0xff] %v1210
      %1219 = vst [vmem:[#allocation2 + $0x208] sm:$0xff] %v1211
      %1220 = vst [vmem:[#allocation2 + $0x210] sm:$0xff] %v1212
      %1221 = vst [vmem:[#allocation2 + $0x218] sm:$0xff] %v1213
      %1222 = vrot.lane.b32.xlu0 %v200, 117
      %v1223 = vpop.permute.xlu0 %1222
      %1224 = vrot.lane.b32.xlu0 %v201, 117
      %v1225 = vpop.permute.xlu0 %1224
      %1226 = vrot.lane.b32.xlu0 %v202, 117
      %v1227 = vpop.permute.xlu0 %1226
      %1228 = vrot.lane.b32.xlu0 %v203, 117
      %v1229 = vpop.permute.xlu0 %1228
      %1230 = vrot.lane.b32.xlu0 %v204, 117
      %v1231 = vpop.permute.xlu0 %1230
      %1232 = vrot.lane.b32.xlu0 %v205, 117
      %v1233 = vpop.permute.xlu0 %1232
      %1234 = vrot.lane.b32.xlu0 %v206, 117
      %v1235 = vpop.permute.xlu0 %1234
      %1236 = vrot.lane.b32.xlu0 %v207, 117
      %v1237 = vpop.permute.xlu0 %1236
      %vm1238 = vcmp.lt.s32.totalorder %v225, 117
      %v1239 = vsel %vm1238, %v1235, %v1237
      %v1240 = vsel %vm1238, %v1233, %v1235
      %v1241 = vsel %vm1238, %v1231, %v1233
      %v1242 = vsel %vm1238, %v1229, %v1231
      %v1243 = vsel %vm1238, %v1227, %v1229
      %v1244 = vsel %vm1238, %v1225, %v1227
      %v1245 = vsel %vm1238, %v1223, %v1225
      %v1246 = vsel %vm1238, %v1237, %v1223
      %v1247 = vpack.c.bf16 %v1245, %v1245
      %v1248 = vpack.c.bf16 %v1244, %v1244
      %v1249 = vpack.c.bf16 %v1243, %v1243
      %v1250 = vpack.c.bf16 %v1242, %v1242
      %v1251 = vpack.c.bf16 %v1241, %v1241
      %v1252 = vpack.c.bf16 %v1240, %v1240
      %v1253 = vpack.c.bf16 %v1239, %v1239
      %v1254 = vpack.c.bf16 %v1246, %v1246
      %v1263 = vunpack.c.l.b16 %v1247
      %v1264 = vunpack.c.l.b16 %v1248
      %v1265 = vunpack.c.l.b16 %v1249
      %v1266 = vunpack.c.l.b16 %v1250
      %v1267 = vunpack.c.l.b16 %v1251
      %v1268 = vunpack.c.l.b16 %v1252
      %v1269 = vunpack.c.l.b16 %v1253
      %v1270 = vunpack.c.l.b16 %v1254
      %v1271 = vpack.c.b16 %v1264, %v1263
      %v1272 = vpack.c.b16 %v1266, %v1265
      %v1273 = vpack.c.b16 %v1268, %v1267
      %v1274 = vpack.c.b16 %v1270, %v1269
      %1279 = vst [vmem:[#allocation2 + $0x220] sm:$0xff] %v1271
      %1280 = vst [vmem:[#allocation2 + $0x228] sm:$0xff] %v1272
      %1281 = vst [vmem:[#allocation2 + $0x230] sm:$0xff] %v1273
      %1282 = vst [vmem:[#allocation2 + $0x238] sm:$0xff] %v1274
      %1283 = vrot.lane.b32.xlu0 %v200, 39
      %v1284 = vpop.permute.xlu0 %1283
      %1285 = vrot.lane.b32.xlu0 %v201, 39
      %v1286 = vpop.permute.xlu0 %1285
      %1287 = vrot.lane.b32.xlu0 %v202, 39
      %v1288 = vpop.permute.xlu0 %1287
      %1289 = vrot.lane.b32.xlu0 %v203, 39
      %v1290 = vpop.permute.xlu0 %1289
      %1291 = vrot.lane.b32.xlu0 %v204, 39
      %v1292 = vpop.permute.xlu0 %1291
      %1293 = vrot.lane.b32.xlu0 %v205, 39
      %v1294 = vpop.permute.xlu0 %1293
      %1295 = vrot.lane.b32.xlu0 %v206, 39
      %v1296 = vpop.permute.xlu0 %1295
      %1297 = vrot.lane.b32.xlu0 %v207, 39
      %v1298 = vpop.permute.xlu0 %1297
      %vm1299 = vcmp.lt.s32.totalorder %v225, 39
      %v1300 = vsel %vm1299, %v1296, %v1298
      %v1301 = vsel %vm1299, %v1294, %v1296
      %v1302 = vsel %vm1299, %v1292, %v1294
      %v1303 = vsel %vm1299, %v1290, %v1292
      %v1304 = vsel %vm1299, %v1288, %v1290
      %v1305 = vsel %vm1299, %v1286, %v1288
      %v1306 = vsel %vm1299, %v1284, %v1286
      %v1307 = vsel %vm1299, %v1298, %v1284
      %v1308 = vpack.c.bf16 %v1306, %v1306
      %v1309 = vpack.c.bf16 %v1305, %v1305
      %v1310 = vpack.c.bf16 %v1304, %v1304
      %v1311 = vpack.c.bf16 %v1303, %v1303
      %v1312 = vpack.c.bf16 %v1302, %v1302
      %v1313 = vpack.c.bf16 %v1301, %v1301
      %v1314 = vpack.c.bf16 %v1300, %v1300
      %v1315 = vpack.c.bf16 %v1307, %v1307
      %v1324 = vunpack.c.l.b16 %v1308
      %v1325 = vunpack.c.l.b16 %v1309
      %v1326 = vunpack.c.l.b16 %v1310
      %v1327 = vunpack.c.l.b16 %v1311
      %v1328 = vunpack.c.l.b16 %v1312
      %v1329 = vunpack.c.l.b16 %v1313
      %v1330 = vunpack.c.l.b16 %v1314
      %v1331 = vunpack.c.l.b16 %v1315
      %v1332 = vpack.c.b16 %v1325, %v1324
      %v1333 = vpack.c.b16 %v1327, %v1326
      %v1334 = vpack.c.b16 %v1329, %v1328
      %v1335 = vpack.c.b16 %v1331, %v1330
      %1340 = vst [vmem:[#allocation2 + $0x240] sm:$0xff] %v1332
      %1341 = vst [vmem:[#allocation2 + $0x248] sm:$0xff] %v1333
      %1342 = vst [vmem:[#allocation2 + $0x250] sm:$0xff] %v1334
      %1343 = vst [vmem:[#allocation2 + $0x258] sm:$0xff] %v1335
      %1344 = vrot.lane.b32.xlu0 %v200, 38
      %v1345 = vpop.permute.xlu0 %1344
      %1346 = vrot.lane.b32.xlu0 %v201, 38
      %v1347 = vpop.permute.xlu0 %1346
      %1348 = vrot.lane.b32.xlu0 %v202, 38
      %v1349 = vpop.permute.xlu0 %1348
      %1350 = vrot.lane.b32.xlu0 %v203, 38
      %v1351 = vpop.permute.xlu0 %1350
      %1352 = vrot.lane.b32.xlu0 %v204, 38
      %v1353 = vpop.permute.xlu0 %1352
      %1354 = vrot.lane.b32.xlu0 %v205, 38
      %v1355 = vpop.permute.xlu0 %1354
      %1356 = vrot.lane.b32.xlu0 %v206, 38
      %v1357 = vpop.permute.xlu0 %1356
      %1358 = vrot.lane.b32.xlu0 %v207, 38
      %v1359 = vpop.permute.xlu0 %1358
      %vm1360 = vcmp.lt.s32.totalorder %v225, 38
      %v1361 = vsel %vm1360, %v1357, %v1359
      %v1362 = vsel %vm1360, %v1355, %v1357
      %v1363 = vsel %vm1360, %v1353, %v1355
      %v1364 = vsel %vm1360, %v1351, %v1353
      %v1365 = vsel %vm1360, %v1349, %v1351
      %v1366 = vsel %vm1360, %v1347, %v1349
      %v1367 = vsel %vm1360, %v1345, %v1347
      %v1368 = vsel %vm1360, %v1359, %v1345
      %v1369 = vpack.c.bf16 %v1367, %v1367
      %v1370 = vpack.c.bf16 %v1366, %v1366
      %v1371 = vpack.c.bf16 %v1365, %v1365
      %v1372 = vpack.c.bf16 %v1364, %v1364
      %v1373 = vpack.c.bf16 %v1363, %v1363
      %v1374 = vpack.c.bf16 %v1362, %v1362
      %v1375 = vpack.c.bf16 %v1361, %v1361
      %v1376 = vpack.c.bf16 %v1368, %v1368
      %v1385 = vunpack.c.l.b16 %v1369
      %v1386 = vunpack.c.l.b16 %v1370
      %v1387 = vunpack.c.l.b16 %v1371
      %v1388 = vunpack.c.l.b16 %v1372
      %v1389 = vunpack.c.l.b16 %v1373
      %v1390 = vunpack.c.l.b16 %v1374
      %v1391 = vunpack.c.l.b16 %v1375
      %v1392 = vunpack.c.l.b16 %v1376
      %v1393 = vpack.c.b16 %v1386, %v1385
      %v1394 = vpack.c.b16 %v1388, %v1387
      %v1395 = vpack.c.b16 %v1390, %v1389
      %v1396 = vpack.c.b16 %v1392, %v1391
      %1401 = vst [vmem:[#allocation2 + $0x260] sm:$0xff] %v1393
      %1402 = vst [vmem:[#allocation2 + $0x268] sm:$0xff] %v1394
      %1403 = vst [vmem:[#allocation2 + $0x270] sm:$0xff] %v1395
      %1404 = vst [vmem:[#allocation2 + $0x278] sm:$0xff] %v1396
      %1405 = vrot.lane.b32.xlu0 %v200, 37
      %v1406 = vpop.permute.xlu0 %1405
      %1407 = vrot.lane.b32.xlu0 %v201, 37
      %v1408 = vpop.permute.xlu0 %1407
      %1409 = vrot.lane.b32.xlu0 %v202, 37
      %v1410 = vpop.permute.xlu0 %1409
      %1411 = vrot.lane.b32.xlu0 %v203, 37
      %v1412 = vpop.permute.xlu0 %1411
      %1413 = vrot.lane.b32.xlu0 %v204, 37
      %v1414 = vpop.permute.xlu0 %1413
      %1415 = vrot.lane.b32.xlu0 %v205, 37
      %v1416 = vpop.permute.xlu0 %1415
      %1417 = vrot.lane.b32.xlu0 %v206, 37
      %v1418 = vpop.permute.xlu0 %1417
      %1419 = vrot.lane.b32.xlu0 %v207, 37
      %v1420 = vpop.permute.xlu0 %1419
      %vm1421 = vcmp.lt.s32.totalorder %v225, 37
      %v1422 = vsel %vm1421, %v1418, %v1420
      %v1423 = vsel %vm1421, %v1416, %v1418
      %v1424 = vsel %vm1421, %v1414, %v1416
      %v1425 = vsel %vm1421, %v1412, %v1414
      %v1426 = vsel %vm1421, %v1410, %v1412
      %v1427 = vsel %vm1421, %v1408, %v1410
      %v1428 = vsel %vm1421, %v1406, %v1408
      %v1429 = vsel %vm1421, %v1420, %v1406
      %v1430 = vpack.c.bf16 %v1428, %v1428
      %v1431 = vpack.c.bf16 %v1427, %v1427
      %v1432 = vpack.c.bf16 %v1426, %v1426
      %v1433 = vpack.c.bf16 %v1425, %v1425
      %v1434 = vpack.c.bf16 %v1424, %v1424
      %v1435 = vpack.c.bf16 %v1423, %v1423
      %v1436 = vpack.c.bf16 %v1422, %v1422
      %v1437 = vpack.c.bf16 %v1429, %v1429
      %v1446 = vunpack.c.l.b16 %v1430
      %v1447 = vunpack.c.l.b16 %v1431
      %v1448 = vunpack.c.l.b16 %v1432
      %v1449 = vunpack.c.l.b16 %v1433
      %v1450 = vunpack.c.l.b16 %v1434
      %v1451 = vunpack.c.l.b16 %v1435
      %v1452 = vunpack.c.l.b16 %v1436
      %v1453 = vunpack.c.l.b16 %v1437
      %v1454 = vpack.c.b16 %v1447, %v1446
      %v1455 = vpack.c.b16 %v1449, %v1448
      %v1456 = vpack.c.b16 %v1451, %v1450
      %v1457 = vpack.c.b16 %v1453, %v1452
      %1462 = vst [vmem:[#allocation2 + $0x280] sm:$0xff] %v1454
      %1463 = vst [vmem:[#allocation2 + $0x288] sm:$0xff] %v1455
      %1464 = vst [vmem:[#allocation2 + $0x290] sm:$0xff] %v1456
      %1465 = vst [vmem:[#allocation2 + $0x298] sm:$0xff] %v1457
      %1466 = vrot.lane.b32.xlu0 %v200, 29
      %v1467 = vpop.permute.xlu0 %1466
      %1468 = vrot.lane.b32.xlu0 %v201, 29
      %v1469 = vpop.permute.xlu0 %1468
      %1470 = vrot.lane.b32.xlu0 %v202, 29
      %v1471 = vpop.permute.xlu0 %1470
      %1472 = vrot.lane.b32.xlu0 %v203, 29
      %v1473 = vpop.permute.xlu0 %1472
      %1474 = vrot.lane.b32.xlu0 %v204, 29
      %v1475 = vpop.permute.xlu0 %1474
      %1476 = vrot.lane.b32.xlu0 %v205, 29
      %v1477 = vpop.permute.xlu0 %1476
      %1478 = vrot.lane.b32.xlu0 %v206, 29
      %v1479 = vpop.permute.xlu0 %1478
      %1480 = vrot.lane.b32.xlu0 %v207, 29
      %v1481 = vpop.permute.xlu0 %1480
      %vm1482 = vcmp.lt.s32.totalorder %v225, 29
      %v1483 = vsel %vm1482, %v1479, %v1481
      %v1484 = vsel %vm1482, %v1477, %v1479
      %v1485 = vsel %vm1482, %v1475, %v1477
      %v1486 = vsel %vm1482, %v1473, %v1475
      %v1487 = vsel %vm1482, %v1471, %v1473
      %v1488 = vsel %vm1482, %v1469, %v1471
      %v1489 = vsel %vm1482, %v1467, %v1469
      %v1490 = vsel %vm1482, %v1481, %v1467
      %v1491 = vpack.c.bf16 %v1489, %v1489
      %v1492 = vpack.c.bf16 %v1488, %v1488
      %v1493 = vpack.c.bf16 %v1487, %v1487
      %v1494 = vpack.c.bf16 %v1486, %v1486
      %v1495 = vpack.c.bf16 %v1485, %v1485
      %v1496 = vpack.c.bf16 %v1484, %v1484
      %v1497 = vpack.c.bf16 %v1483, %v1483
      %v1498 = vpack.c.bf16 %v1490, %v1490
      %v1507 = vunpack.c.l.b16 %v1491
      %v1508 = vunpack.c.l.b16 %v1492
      %v1509 = vunpack.c.l.b16 %v1493
      %v1510 = vunpack.c.l.b16 %v1494
      %v1511 = vunpack.c.l.b16 %v1495
      %v1512 = vunpack.c.l.b16 %v1496
      %v1513 = vunpack.c.l.b16 %v1497
      %v1514 = vunpack.c.l.b16 %v1498
      %v1515 = vpack.c.b16 %v1508, %v1507
      %v1516 = vpack.c.b16 %v1510, %v1509
      %v1517 = vpack.c.b16 %v1512, %v1511
      %v1518 = vpack.c.b16 %v1514, %v1513
      %1523 = vst [vmem:[#allocation2 + $0x2a0] sm:$0xff] %v1515
      %1524 = vst [vmem:[#allocation2 + $0x2a8] sm:$0xff] %v1516
      %1525 = vst [vmem:[#allocation2 + $0x2b0] sm:$0xff] %v1517
      %1526 = vst [vmem:[#allocation2 + $0x2b8] sm:$0xff] %v1518
      %1527 = vrot.lane.b32.xlu0 %v200, 28
      %v1528 = vpop.permute.xlu0 %1527
      %1529 = vrot.lane.b32.xlu0 %v201, 28
      %v1530 = vpop.permute.xlu0 %1529
      %1531 = vrot.lane.b32.xlu0 %v202, 28
      %v1532 = vpop.permute.xlu0 %1531
      %1533 = vrot.lane.b32.xlu0 %v203, 28
      %v1534 = vpop.permute.xlu0 %1533
      %1535 = vrot.lane.b32.xlu0 %v204, 28
      %v1536 = vpop.permute.xlu0 %1535
      %1537 = vrot.lane.b32.xlu0 %v205, 28
      %v1538 = vpop.permute.xlu0 %1537
      %1539 = vrot.lane.b32.xlu0 %v206, 28
      %v1540 = vpop.permute.xlu0 %1539
      %1541 = vrot.lane.b32.xlu0 %v207, 28
      %v1542 = vpop.permute.xlu0 %1541
      %vm1543 = vcmp.lt.s32.totalorder %v225, 28
      %v1544 = vsel %vm1543, %v1540, %v1542
      %v1545 = vsel %vm1543, %v1538, %v1540
      %v1546 = vsel %vm1543, %v1536, %v1538
      %v1547 = vsel %vm1543, %v1534, %v1536
      %v1548 = vsel %vm1543, %v1532, %v1534
      %v1549 = vsel %vm1543, %v1530, %v1532
      %v1550 = vsel %vm1543, %v1528, %v1530
      %v1551 = vsel %vm1543, %v1542, %v1528
      %v1552 = vpack.c.bf16 %v1550, %v1550
      %v1553 = vpack.c.bf16 %v1549, %v1549
      %v1554 = vpack.c.bf16 %v1548, %v1548
      %v1555 = vpack.c.bf16 %v1547, %v1547
      %v1556 = vpack.c.bf16 %v1546, %v1546
      %v1557 = vpack.c.bf16 %v1545, %v1545
      %v1558 = vpack.c.bf16 %v1544, %v1544
      %v1559 = vpack.c.bf16 %v1551, %v1551
      %v1568 = vunpack.c.l.b16 %v1552
      %v1569 = vunpack.c.l.b16 %v1553
      %v1570 = vunpack.c.l.b16 %v1554
      %v1571 = vunpack.c.l.b16 %v1555
      %v1572 = vunpack.c.l.b16 %v1556
      %v1573 = vunpack.c.l.b16 %v1557
      %v1574 = vunpack.c.l.b16 %v1558
      %v1575 = vunpack.c.l.b16 %v1559
      %v1576 = vpack.c.b16 %v1569, %v1568
      %v1577 = vpack.c.b16 %v1571, %v1570
      %v1578 = vpack.c.b16 %v1573, %v1572
      %v1579 = vpack.c.b16 %v1575, %v1574
      %1584 = vst [vmem:[#allocation2 + $0x2c0] sm:$0xff] %v1576
      %1585 = vst [vmem:[#allocation2 + $0x2c8] sm:$0xff] %v1577
      %1586 = vst [vmem:[#allocation2 + $0x2d0] sm:$0xff] %v1578
      %1587 = vst [vmem:[#allocation2 + $0x2d8] sm:$0xff] %v1579
      %1588 = vrot.lane.b32.xlu0 %v200, 27
      %v1589 = vpop.permute.xlu0 %1588
      %1590 = vrot.lane.b32.xlu0 %v201, 27
      %v1591 = vpop.permute.xlu0 %1590
      %1592 = vrot.lane.b32.xlu0 %v202, 27
      %v1593 = vpop.permute.xlu0 %1592
      %1594 = vrot.lane.b32.xlu0 %v203, 27
      %v1595 = vpop.permute.xlu0 %1594
      %1596 = vrot.lane.b32.xlu0 %v204, 27
      %v1597 = vpop.permute.xlu0 %1596
      %1598 = vrot.lane.b32.xlu0 %v205, 27
      %v1599 = vpop.permute.xlu0 %1598
      %1600 = vrot.lane.b32.xlu0 %v206, 27
      %v1601 = vpop.permute.xlu0 %1600
      %1602 = vrot.lane.b32.xlu0 %v207, 27
      %v1603 = vpop.permute.xlu0 %1602
      %vm1604 = vcmp.lt.s32.totalorder %v225, 27
      %v1605 = vsel %vm1604, %v1601, %v1603
      %v1606 = vsel %vm1604, %v1599, %v1601
      %v1607 = vsel %vm1604, %v1597, %v1599
      %v1608 = vsel %vm1604, %v1595, %v1597
      %v1609 = vsel %vm1604, %v1593, %v1595
      %v1610 = vsel %vm1604, %v1591, %v1593
      %v1611 = vsel %vm1604, %v1589, %v1591
      %v1612 = vsel %vm1604, %v1603, %v1589
      %v1613 = vpack.c.bf16 %v1611, %v1611
      %v1614 = vpack.c.bf16 %v1610, %v1610
      %v1615 = vpack.c.bf16 %v1609, %v1609
      %v1616 = vpack.c.bf16 %v1608, %v1608
      %v1617 = vpack.c.bf16 %v1607, %v1607
      %v1618 = vpack.c.bf16 %v1606, %v1606
      %v1619 = vpack.c.bf16 %v1605, %v1605
      %v1620 = vpack.c.bf16 %v1612, %v1612
      %v1629 = vunpack.c.l.b16 %v1613
      %v1630 = vunpack.c.l.b16 %v1614
      %v1631 = vunpack.c.l.b16 %v1615
      %v1632 = vunpack.c.l.b16 %v1616
      %v1633 = vunpack.c.l.b16 %v1617
      %v1634 = vunpack.c.l.b16 %v1618
      %v1635 = vunpack.c.l.b16 %v1619
      %v1636 = vunpack.c.l.b16 %v1620
      %v1637 = vpack.c.b16 %v1630, %v1629
      %v1638 = vpack.c.b16 %v1632, %v1631
      %v1639 = vpack.c.b16 %v1634, %v1633
      %v1640 = vpack.c.b16 %v1636, %v1635
      %1645 = vst [vmem:[#allocation2 + $0x2e0] sm:$0xff] %v1637
      %1646 = vst [vmem:[#allocation2 + $0x2e8] sm:$0xff] %v1638
      %1647 = vst [vmem:[#allocation2 + $0x2f0] sm:$0xff] %v1639
      %1648 = vst [vmem:[#allocation2 + $0x2f8] sm:$0xff] %v1640
      %1649 = vrot.lane.b32.xlu0 %v200, 19
      %v1650 = vpop.permute.xlu0 %1649
      %1651 = vrot.lane.b32.xlu0 %v201, 19
      %v1652 = vpop.permute.xlu0 %1651
      %1653 = vrot.lane.b32.xlu0 %v202, 19
      %v1654 = vpop.permute.xlu0 %1653
      %1655 = vrot.lane.b32.xlu0 %v203, 19
      %v1656 = vpop.permute.xlu0 %1655
      %1657 = vrot.lane.b32.xlu0 %v204, 19
      %v1658 = vpop.permute.xlu0 %1657
      %1659 = vrot.lane.b32.xlu0 %v205, 19
      %v1660 = vpop.permute.xlu0 %1659
      %1661 = vrot.lane.b32.xlu0 %v206, 19
      %v1662 = vpop.permute.xlu0 %1661
      %1663 = vrot.lane.b32.xlu0 %v207, 19
      %v1664 = vpop.permute.xlu0 %1663
      %vm1665 = vcmp.lt.s32.totalorder %v225, 19
      %v1666 = vsel %vm1665, %v1662, %v1664
      %v1667 = vsel %vm1665, %v1660, %v1662
      %v1668 = vsel %vm1665, %v1658, %v1660
      %v1669 = vsel %vm1665, %v1656, %v1658
      %v1670 = vsel %vm1665, %v1654, %v1656
      %v1671 = vsel %vm1665, %v1652, %v1654
      %v1672 = vsel %vm1665, %v1650, %v1652
      %v1673 = vsel %vm1665, %v1664, %v1650
      %v1674 = vpack.c.bf16 %v1672, %v1672
      %v1675 = vpack.c.bf16 %v1671, %v1671
      %v1676 = vpack.c.bf16 %v1670, %v1670
      %v1677 = vpack.c.bf16 %v1669, %v1669
      %v1678 = vpack.c.bf16 %v1668, %v1668
      %v1679 = vpack.c.bf16 %v1667, %v1667
      %v1680 = vpack.c.bf16 %v1666, %v1666
      %v1681 = vpack.c.bf16 %v1673, %v1673
      %v1690 = vunpack.c.l.b16 %v1674
      %v1691 = vunpack.c.l.b16 %v1675
      %v1692 = vunpack.c.l.b16 %v1676
      %v1693 = vunpack.c.l.b16 %v1677
      %v1694 = vunpack.c.l.b16 %v1678
      %v1695 = vunpack.c.l.b16 %v1679
      %v1696 = vunpack.c.l.b16 %v1680
      %v1697 = vunpack.c.l.b16 %v1681
      %v1698 = vpack.c.b16 %v1691, %v1690
      %v1699 = vpack.c.b16 %v1693, %v1692
      %v1700 = vpack.c.b16 %v1695, %v1694
      %v1701 = vpack.c.b16 %v1697, %v1696
      %1706 = vst [vmem:[#allocation2 + $0x300] sm:$0xff] %v1698
      %1707 = vst [vmem:[#allocation2 + $0x308] sm:$0xff] %v1699
      %1708 = vst [vmem:[#allocation2 + $0x310] sm:$0xff] %v1700
      %1709 = vst [vmem:[#allocation2 + $0x318] sm:$0xff] %v1701
      %1710 = vrot.lane.b32.xlu0 %v200, 18
      %v1711 = vpop.permute.xlu0 %1710
      %1712 = vrot.lane.b32.xlu0 %v201, 18
      %v1713 = vpop.permute.xlu0 %1712
      %1714 = vrot.lane.b32.xlu0 %v202, 18
      %v1715 = vpop.permute.xlu0 %1714
      %1716 = vrot.lane.b32.xlu0 %v203, 18
      %v1717 = vpop.permute.xlu0 %1716
      %1718 = vrot.lane.b32.xlu0 %v204, 18
      %v1719 = vpop.permute.xlu0 %1718
      %1720 = vrot.lane.b32.xlu0 %v205, 18
      %v1721 = vpop.permute.xlu0 %1720
      %1722 = vrot.lane.b32.xlu0 %v206, 18
      %v1723 = vpop.permute.xlu0 %1722
      %1724 = vrot.lane.b32.xlu0 %v207, 18
      %v1725 = vpop.permute.xlu0 %1724
      %vm1726 = vcmp.lt.s32.totalorder %v225, 18
      %v1727 = vsel %vm1726, %v1723, %v1725
      %v1728 = vsel %vm1726, %v1721, %v1723
      %v1729 = vsel %vm1726, %v1719, %v1721
      %v1730 = vsel %vm1726, %v1717, %v1719
      %v1731 = vsel %vm1726, %v1715, %v1717
      %v1732 = vsel %vm1726, %v1713, %v1715
      %v1733 = vsel %vm1726, %v1711, %v1713
      %v1734 = vsel %vm1726, %v1725, %v1711
      %v1735 = vpack.c.bf16 %v1733, %v1733
      %v1736 = vpack.c.bf16 %v1732, %v1732
      %v1737 = vpack.c.bf16 %v1731, %v1731
      %v1738 = vpack.c.bf16 %v1730, %v1730
      %v1739 = vpack.c.bf16 %v1729, %v1729
      %v1740 = vpack.c.bf16 %v1728, %v1728
      %v1741 = vpack.c.bf16 %v1727, %v1727
      %v1742 = vpack.c.bf16 %v1734, %v1734
      %v1751 = vunpack.c.l.b16 %v1735
      %v1752 = vunpack.c.l.b16 %v1736
      %v1753 = vunpack.c.l.b16 %v1737
      %v1754 = vunpack.c.l.b16 %v1738
      %v1755 = vunpack.c.l.b16 %v1739
      %v1756 = vunpack.c.l.b16 %v1740
      %v1757 = vunpack.c.l.b16 %v1741
      %v1758 = vunpack.c.l.b16 %v1742
      %v1759 = vpack.c.b16 %v1752, %v1751
      %v1760 = vpack.c.b16 %v1754, %v1753
      %v1761 = vpack.c.b16 %v1756, %v1755
      %v1762 = vpack.c.b16 %v1758, %v1757
      %1767 = vst [vmem:[#allocation2 + $0x320] sm:$0xff] %v1759
      %1768 = vst [vmem:[#allocation2 + $0x328] sm:$0xff] %v1760
      %1769 = vst [vmem:[#allocation2 + $0x330] sm:$0xff] %v1761
      %1770 = vst [vmem:[#allocation2 + $0x338] sm:$0xff] %v1762
      %1771 = vrot.lane.b32.xlu0 %v200, 17
      %v1772 = vpop.permute.xlu0 %1771
      %1773 = vrot.lane.b32.xlu0 %v201, 17
      %v1774 = vpop.permute.xlu0 %1773
      %1775 = vrot.lane.b32.xlu0 %v202, 17
      %v1776 = vpop.permute.xlu0 %1775
      %1777 = vrot.lane.b32.xlu0 %v203, 17
      %v1778 = vpop.permute.xlu0 %1777
      %1779 = vrot.lane.b32.xlu0 %v204, 17
      %v1780 = vpop.permute.xlu0 %1779
      %1781 = vrot.lane.b32.xlu0 %v205, 17
      %v1782 = vpop.permute.xlu0 %1781
      %1783 = vrot.lane.b32.xlu0 %v206, 17
      %v1784 = vpop.permute.xlu0 %1783
      %1785 = vrot.lane.b32.xlu0 %v207, 17
      %v1786 = vpop.permute.xlu0 %1785
      %vm1787 = vcmp.lt.s32.totalorder %v225, 17
      %v1788 = vsel %vm1787, %v1784, %v1786
      %v1789 = vsel %vm1787, %v1782, %v1784
      %v1790 = vsel %vm1787, %v1780, %v1782
      %v1791 = vsel %vm1787, %v1778, %v1780
      %v1792 = vsel %vm1787, %v1776, %v1778
      %v1793 = vsel %vm1787, %v1774, %v1776
      %v1794 = vsel %vm1787, %v1772, %v1774
      %v1795 = vsel %vm1787, %v1786, %v1772
      %v1796 = vpack.c.bf16 %v1794, %v1794
      %v1797 = vpack.c.bf16 %v1793, %v1793
      %v1798 = vpack.c.bf16 %v1792, %v1792
      %v1799 = vpack.c.bf16 %v1791, %v1791
      %v1800 = vpack.c.bf16 %v1790, %v1790
      %v1801 = vpack.c.bf16 %v1789, %v1789
      %v1802 = vpack.c.bf16 %v1788, %v1788
      %v1803 = vpack.c.bf16 %v1795, %v1795
      %v1812 = vunpack.c.l.b16 %v1796
      %v1813 = vunpack.c.l.b16 %v1797
      %v1814 = vunpack.c.l.b16 %v1798
      %v1815 = vunpack.c.l.b16 %v1799
      %v1816 = vunpack.c.l.b16 %v1800
      %v1817 = vunpack.c.l.b16 %v1801
      %v1818 = vunpack.c.l.b16 %v1802
      %v1819 = vunpack.c.l.b16 %v1803
      %v1820 = vpack.c.b16 %v1813, %v1812
      %v1821 = vpack.c.b16 %v1815, %v1814
      %v1822 = vpack.c.b16 %v1817, %v1816
      %v1823 = vpack.c.b16 %v1819, %v1818
      %1828 = vst [vmem:[#allocation2 + $0x340] sm:$0xff] %v1820
      %1829 = vst [vmem:[#allocation2 + $0x348] sm:$0xff] %v1821
      %1830 = vst [vmem:[#allocation2 + $0x350] sm:$0xff] %v1822
      %1831 = vst [vmem:[#allocation2 + $0x358] sm:$0xff] %v1823
      %v1832 = vld [vmem:[%s2] sm:$0xff]
      %v1833 = vld [vmem:[#allocation2] sm:$0xff]
      %v1834 = vld [vmem:[#allocation2 + $0x8] sm:$0xff]
      %v1835 = vld [vmem:[#allocation2 + $0x10] sm:$0xff]
      %v1836 = vld [vmem:[#allocation2 + $0x18] sm:$0xff]
      %v1837 = vld [vmem:[#allocation2 + $0x20] sm:$0xff]
      %v1838 = vld [vmem:[#allocation2 + $0x28] sm:$0xff]
      %v1839 = vld [vmem:[#allocation2 + $0x30] sm:$0xff]
      %v1840 = vld [vmem:[#allocation2 + $0x38] sm:$0xff]
      %v1841 = vld [vmem:[#allocation2 + $0x40] sm:$0xff]
      %v1842 = vld [vmem:[#allocation2 + $0x48] sm:$0xff]
      %v1843 = vld [vmem:[#allocation2 + $0x50] sm:$0xff]
      %v1844 = vld [vmem:[#allocation2 + $0x58] sm:$0xff]
      %v1845 = vld [vmem:[#allocation2 + $0x60] sm:$0xff]
      %v1846 = vld [vmem:[#allocation2 + $0x68] sm:$0xff]
      %v1847 = vld [vmem:[#allocation2 + $0x70] sm:$0xff]
      %v1848 = vld [vmem:[#allocation2 + $0x78] sm:$0xff]
      %v1849 = vld [vmem:[#allocation2 + $0x80] sm:$0xff]
      %v1850 = vld [vmem:[#allocation2 + $0x88] sm:$0xff]
      %v1851 = vld [vmem:[#allocation2 + $0x90] sm:$0xff]
      %v1852 = vld [vmem:[#allocation2 + $0x98] sm:$0xff]
      %v1853 = vld [vmem:[#allocation2 + $0xa0] sm:$0xff]
      %v1854 = vld [vmem:[#allocation2 + $0xa8] sm:$0xff]
      %v1855 = vld [vmem:[#allocation2 + $0xb0] sm:$0xff]
      %v1856 = vld [vmem:[#allocation2 + $0xb8] sm:$0xff]
      %v1857 = vld [vmem:[#allocation2 + $0xc0] sm:$0xff]
      %v1858 = vld [vmem:[#allocation2 + $0xc8] sm:$0xff]
      %v1859 = vld [vmem:[#allocation2 + $0xd0] sm:$0xff]
      %v1860 = vld [vmem:[#allocation2 + $0xd8] sm:$0xff]
      %v1861 = vld [vmem:[#allocation2 + $0xe0] sm:$0xff]
      %v1862 = vld [vmem:[#allocation2 + $0xe8] sm:$0xff]
      %v1863 = vld [vmem:[#allocation2 + $0xf0] sm:$0xff]
      %v1864 = vld [vmem:[#allocation2 + $0xf8] sm:$0xff]
      %v1865 = vld [vmem:[#allocation2 + $0x100] sm:$0xff]
      %v1866 = vld [vmem:[#allocation2 + $0x108] sm:$0xff]
      %v1867 = vld [vmem:[#allocation2 + $0x110] sm:$0xff]
      %v1868 = vld [vmem:[#allocation2 + $0x118] sm:$0xff]
      %v1869 = vld [vmem:[#allocation2 + $0x120] sm:$0xff]
      %v1870 = vld [vmem:[#allocation2 + $0x128] sm:$0xff]
      %v1871 = vld [vmem:[#allocation2 + $0x130] sm:$0xff]
      %v1872 = vld [vmem:[#allocation2 + $0x138] sm:$0xff]
      %v1873 = vld [vmem:[#allocation2 + $0x140] sm:$0xff]
      %v1874 = vld [vmem:[#allocation2 + $0x148] sm:$0xff]
      %v1875 = vld [vmem:[#allocation2 + $0x150] sm:$0xff]
      %v1876 = vld [vmem:[#allocation2 + $0x158] sm:$0xff]
      %v1877 = vld [vmem:[#allocation2 + $0x160] sm:$0xff]
      %v1878 = vld [vmem:[#allocation2 + $0x168] sm:$0xff]
      %v1879 = vld [vmem:[#allocation2 + $0x170] sm:$0xff]
      %v1880 = vld [vmem:[#allocation2 + $0x178] sm:$0xff]
      %v1881 = vld [vmem:[#allocation2 + $0x180] sm:$0xff]
      %v1882 = vld [vmem:[#allocation2 + $0x188] sm:$0xff]
      %v1883 = vld [vmem:[#allocation2 + $0x190] sm:$0xff]
      %v1884 = vld [vmem:[#allocation2 + $0x198] sm:$0xff]
      %v1885 = vld [vmem:[#allocation2 + $0x1a0] sm:$0xff]
      %v1886 = vld [vmem:[#allocation2 + $0x1a8] sm:$0xff]
      %v1887 = vld [vmem:[#allocation2 + $0x1b0] sm:$0xff]
      %v1888 = vld [vmem:[#allocation2 + $0x1b8] sm:$0xff]
      %v1889 = vld [vmem:[#allocation2 + $0x1c0] sm:$0xff]
      %v1890 = vld [vmem:[#allocation2 + $0x1c8] sm:$0xff]
      %v1891 = vld [vmem:[#allocation2 + $0x1d0] sm:$0xff]
      %v1892 = vld [vmem:[#allocation2 + $0x1d8] sm:$0xff]
      %v1893 = vld [vmem:[#allocation2 + $0x1e0] sm:$0xff]
      %v1894 = vld [vmem:[#allocation2 + $0x1e8] sm:$0xff]
      %v1895 = vld [vmem:[#allocation2 + $0x1f0] sm:$0xff]
      %v1896 = vld [vmem:[#allocation2 + $0x1f8] sm:$0xff]
      %v1897 = vld [vmem:[#allocation2 + $0x200] sm:$0xff]
      %v1898 = vld [vmem:[#allocation2 + $0x208] sm:$0xff]
      %v1899 = vld [vmem:[#allocation2 + $0x210] sm:$0xff]
      %v1900 = vld [vmem:[#allocation2 + $0x218] sm:$0xff]
      %v1901 = vld [vmem:[#allocation2 + $0x220] sm:$0xff]
      %v1902 = vld [vmem:[#allocation2 + $0x228] sm:$0xff]
      %v1903 = vld [vmem:[#allocation2 + $0x230] sm:$0xff]
      %v1904 = vld [vmem:[#allocation2 + $0x238] sm:$0xff]
      %v1905 = vld [vmem:[#allocation2 + $0x240] sm:$0xff]
      %v1906 = vld [vmem:[#allocation2 + $0x248] sm:$0xff]
      %v1907 = vld [vmem:[#allocation2 + $0x250] sm:$0xff]
      %v1908 = vld [vmem:[#allocation2 + $0x258] sm:$0xff]
      %v1909 = vld [vmem:[#allocation2 + $0x260] sm:$0xff]
      %v1910 = vld [vmem:[#allocation2 + $0x268] sm:$0xff]
      %v1911 = vld [vmem:[#allocation2 + $0x270] sm:$0xff]
      %v1912 = vld [vmem:[#allocation2 + $0x278] sm:$0xff]
      %v1913 = vld [vmem:[#allocation2 + $0x280] sm:$0xff]
      %v1914 = vld [vmem:[#allocation2 + $0x288] sm:$0xff]
      %v1915 = vld [vmem:[#allocation2 + $0x290] sm:$0xff]
      %v1916 = vld [vmem:[#allocation2 + $0x298] sm:$0xff]
      %v1917 = vld [vmem:[#allocation2 + $0x2a0] sm:$0xff]
      %v1918 = vld [vmem:[#allocation2 + $0x2a8] sm:$0xff]
      %v1919 = vld [vmem:[#allocation2 + $0x2b0] sm:$0xff]
      %v1920 = vld [vmem:[#allocation2 + $0x2b8] sm:$0xff]
      %v1921 = vld [vmem:[#allocation2 + $0x2c0] sm:$0xff]
      %v1922 = vld [vmem:[#allocation2 + $0x2c8] sm:$0xff]
      %v1923 = vld [vmem:[#allocation2 + $0x2d0] sm:$0xff]
      %v1924 = vld [vmem:[#allocation2 + $0x2d8] sm:$0xff]
      %v1925 = vld [vmem:[#allocation2 + $0x2e0] sm:$0xff]
      %v1926 = vld [vmem:[#allocation2 + $0x2e8] sm:$0xff]
      %v1927 = vld [vmem:[#allocation2 + $0x2f0] sm:$0xff]
      %v1928 = vld [vmem:[#allocation2 + $0x2f8] sm:$0xff]
      %v1929 = vld [vmem:[#allocation2 + $0x300] sm:$0xff]
      %v1930 = vld [vmem:[#allocation2 + $0x308] sm:$0xff]
      %v1931 = vld [vmem:[#allocation2 + $0x310] sm:$0xff]
      %v1932 = vld [vmem:[#allocation2 + $0x318] sm:$0xff]
      %v1933 = vld [vmem:[#allocation2 + $0x320] sm:$0xff]
      %v1934 = vld [vmem:[#allocation2 + $0x328] sm:$0xff]
      %v1935 = vld [vmem:[#allocation2 + $0x330] sm:$0xff]
      %v1936 = vld [vmem:[#allocation2 + $0x338] sm:$0xff]
      %v1937 = vld [vmem:[#allocation2 + $0x340] sm:$0xff]
      %v1938 = vld [vmem:[#allocation2 + $0x348] sm:$0xff]
      %v1939 = vld [vmem:[#allocation2 + $0x350] sm:$0xff]
      %v1940 = vld [vmem:[#allocation2 + $0x358] sm:$0xff]
      %v1942 = vunpack.c.l.b16 %v1832
      %v1943 = vunpack.c.h.b16 %v1832
      %v1944 = vpack.c.b16 %v1942, %v1942
      %v1945 = vpack.c.b16 %v1943, %v1943
      %v2055 = vunpack.c.l.b16 %v1833
      %v2056 = vunpack.c.h.b16 %v1833
      %v2057 = vunpack.c.l.b16 %v1834
      %v2058 = vunpack.c.h.b16 %v1834
      %v2059 = vunpack.c.l.b16 %v1835
      %v2060 = vunpack.c.h.b16 %v1835
      %v2061 = vunpack.c.l.b16 %v1836
      %v2062 = vunpack.c.h.b16 %v1836
      %v2063 = vunpack.c.l.b16 %v1837
      %v2064 = vunpack.c.h.b16 %v1837
      %v2065 = vunpack.c.l.b16 %v1838
      %v2066 = vunpack.c.h.b16 %v1838
      %v2067 = vunpack.c.l.b16 %v1839
      %v2068 = vunpack.c.h.b16 %v1839
      %v2069 = vunpack.c.l.b16 %v1840
      %v2070 = vunpack.c.h.b16 %v1840
      %v2071 = vunpack.c.l.b16 %v1841
      %v2072 = vunpack.c.h.b16 %v1841
      %v2073 = vunpack.c.l.b16 %v1842
      %v2074 = vunpack.c.h.b16 %v1842
      %v2075 = vunpack.c.l.b16 %v1843
      %v2076 = vunpack.c.h.b16 %v1843
      %v2077 = vunpack.c.l.b16 %v1844
      %v2078 = vunpack.c.h.b16 %v1844
      %v2079 = vunpack.c.l.b16 %v1845
      %v2080 = vunpack.c.h.b16 %v1845
      %v2081 = vunpack.c.l.b16 %v1846
      %v2082 = vunpack.c.h.b16 %v1846
      %v2083 = vunpack.c.l.b16 %v1847
      %v2084 = vunpack.c.h.b16 %v1847
      %v2085 = vunpack.c.l.b16 %v1848
      %v2086 = vunpack.c.h.b16 %v1848
      %v2087 = vunpack.c.l.b16 %v1849
      %v2088 = vunpack.c.h.b16 %v1849
      %v2089 = vunpack.c.l.b16 %v1850
      %v2090 = vunpack.c.h.b16 %v1850
      %v2091 = vunpack.c.l.b16 %v1851
      %v2092 = vunpack.c.h.b16 %v1851
      %v2093 = vunpack.c.l.b16 %v1852
      %v2094 = vunpack.c.h.b16 %v1852
      %v2095 = vunpack.c.l.b16 %v1853
      %v2096 = vunpack.c.h.b16 %v1853
      %v2097 = vunpack.c.l.b16 %v1854
      %v2098 = vunpack.c.h.b16 %v1854
      %v2099 = vunpack.c.l.b16 %v1855
      %v2100 = vunpack.c.h.b16 %v1855
      %v2101 = vunpack.c.l.b16 %v1856
      %v2102 = vunpack.c.h.b16 %v1856
      %v2103 = vunpack.c.l.b16 %v1857
      %v2104 = vunpack.c.h.b16 %v1857
      %v2105 = vunpack.c.l.b16 %v1858
      %v2106 = vunpack.c.h.b16 %v1858
      %v2107 = vunpack.c.l.b16 %v1859
      %v2108 = vunpack.c.h.b16 %v1859
      %v2109 = vunpack.c.l.b16 %v1860
      %v2110 = vunpack.c.h.b16 %v1860
      %v2111 = vunpack.c.l.b16 %v1861
      %v2112 = vunpack.c.h.b16 %v1861
      %v2113 = vunpack.c.l.b16 %v1862
      %v2114 = vunpack.c.h.b16 %v1862
      %v2115 = vunpack.c.l.b16 %v1863
      %v2116 = vunpack.c.h.b16 %v1863
      %v2117 = vunpack.c.l.b16 %v1864
      %v2118 = vunpack.c.h.b16 %v1864
      %v2119 = vunpack.c.l.b16 %v1865
      %v2120 = vunpack.c.h.b16 %v1865
      %v2121 = vunpack.c.l.b16 %v1866
      %v2122 = vunpack.c.h.b16 %v1866
      %v2123 = vunpack.c.l.b16 %v1867
      %v2124 = vunpack.c.h.b16 %v1867
      %v2125 = vunpack.c.l.b16 %v1868
      %v2126 = vunpack.c.h.b16 %v1868
      %v2127 = vunpack.c.l.b16 %v1869
      %v2128 = vunpack.c.h.b16 %v1869
      %v2129 = vunpack.c.l.b16 %v1870
      %v2130 = vunpack.c.h.b16 %v1870
      %v2131 = vunpack.c.l.b16 %v1871
      %v2132 = vunpack.c.h.b16 %v1871
      %v2133 = vunpack.c.l.b16 %v1872
      %v2134 = vunpack.c.h.b16 %v1872
      %v2135 = vunpack.c.l.b16 %v1873
      %v2136 = vunpack.c.h.b16 %v1873
      %v2137 = vunpack.c.l.b16 %v1874
      %v2138 = vunpack.c.h.b16 %v1874
      %v2139 = vunpack.c.l.b16 %v1875
      %v2140 = vunpack.c.h.b16 %v1875
      %v2141 = vunpack.c.l.b16 %v1876
      %v2142 = vunpack.c.h.b16 %v1876
      %v2143 = vunpack.c.l.b16 %v1877
      %v2144 = vunpack.c.h.b16 %v1877
      %v2145 = vunpack.c.l.b16 %v1878
      %v2146 = vunpack.c.h.b16 %v1878
      %v2147 = vunpack.c.l.b16 %v1879
      %v2148 = vunpack.c.h.b16 %v1879
      %v2149 = vunpack.c.l.b16 %v1880
      %v2150 = vunpack.c.h.b16 %v1880
      %v2151 = vunpack.c.l.b16 %v1881
      %v2152 = vunpack.c.h.b16 %v1881
      %v2153 = vunpack.c.l.b16 %v1882
      %v2154 = vunpack.c.h.b16 %v1882
      %v2155 = vunpack.c.l.b16 %v1883
      %v2156 = vunpack.c.h.b16 %v1883
      %v2157 = vunpack.c.l.b16 %v1884
      %v2158 = vunpack.c.h.b16 %v1884
      %v2159 = vunpack.c.l.b16 %v1885
      %v2160 = vunpack.c.h.b16 %v1885
      %v2161 = vunpack.c.l.b16 %v1886
      %v2162 = vunpack.c.h.b16 %v1886
      %v2163 = vunpack.c.l.b16 %v1887
      %v2164 = vunpack.c.h.b16 %v1887
      %v2165 = vunpack.c.l.b16 %v1888
      %v2166 = vunpack.c.h.b16 %v1888
      %v2167 = vunpack.c.l.b16 %v1889
      %v2168 = vunpack.c.h.b16 %v1889
      %v2169 = vunpack.c.l.b16 %v1890
      %v2170 = vunpack.c.h.b16 %v1890
      %v2171 = vunpack.c.l.b16 %v1891
      %v2172 = vunpack.c.h.b16 %v1891
      %v2173 = vunpack.c.l.b16 %v1892
      %v2174 = vunpack.c.h.b16 %v1892
      %v2175 = vunpack.c.l.b16 %v1893
      %v2176 = vunpack.c.h.b16 %v1893
      %v2177 = vunpack.c.l.b16 %v1894
      %v2178 = vunpack.c.h.b16 %v1894
      %v2179 = vunpack.c.l.b16 %v1895
      %v2180 = vunpack.c.h.b16 %v1895
      %v2181 = vunpack.c.l.b16 %v1896
      %v2182 = vunpack.c.h.b16 %v1896
      %v2183 = vunpack.c.l.b16 %v1897
      %v2184 = vunpack.c.h.b16 %v1897
      %v2185 = vunpack.c.l.b16 %v1898
      %v2186 = vunpack.c.h.b16 %v1898
      %v2187 = vunpack.c.l.b16 %v1899
      %v2188 = vunpack.c.h.b16 %v1899
      %v2189 = vunpack.c.l.b16 %v1900
      %v2190 = vunpack.c.h.b16 %v1900
      %v2191 = vunpack.c.l.b16 %v1901
      %v2192 = vunpack.c.h.b16 %v1901
      %v2193 = vunpack.c.l.b16 %v1902
      %v2194 = vunpack.c.h.b16 %v1902
      %v2195 = vunpack.c.l.b16 %v1903
      %v2196 = vunpack.c.h.b16 %v1903
      %v2197 = vunpack.c.l.b16 %v1904
      %v2198 = vunpack.c.h.b16 %v1904
      %v2199 = vunpack.c.l.b16 %v1905
      %v2200 = vunpack.c.h.b16 %v1905
      %v2201 = vunpack.c.l.b16 %v1906
      %v2202 = vunpack.c.h.b16 %v1906
      %v2203 = vunpack.c.l.b16 %v1907
      %v2204 = vunpack.c.h.b16 %v1907
      %v2205 = vunpack.c.l.b16 %v1908
      %v2206 = vunpack.c.h.b16 %v1908
      %v2207 = vunpack.c.l.b16 %v1909
      %v2208 = vunpack.c.h.b16 %v1909
      %v2209 = vunpack.c.l.b16 %v1910
      %v2210 = vunpack.c.h.b16 %v1910
      %v2211 = vunpack.c.l.b16 %v1911
      %v2212 = vunpack.c.h.b16 %v1911
      %v2213 = vunpack.c.l.b16 %v1912
      %v2214 = vunpack.c.h.b16 %v1912
      %v2215 = vunpack.c.l.b16 %v1913
      %v2216 = vunpack.c.h.b16 %v1913
      %v2217 = vunpack.c.l.b16 %v1914
      %v2218 = vunpack.c.h.b16 %v1914
      %v2219 = vunpack.c.l.b16 %v1915
      %v2220 = vunpack.c.h.b16 %v1915
      %v2221 = vunpack.c.l.b16 %v1916
      %v2222 = vunpack.c.h.b16 %v1916
      %v2223 = vunpack.c.l.b16 %v1917
      %v2224 = vunpack.c.h.b16 %v1917
      %v2225 = vunpack.c.l.b16 %v1918
      %v2226 = vunpack.c.h.b16 %v1918
      %v2227 = vunpack.c.l.b16 %v1919
      %v2228 = vunpack.c.h.b16 %v1919
      %v2229 = vunpack.c.l.b16 %v1920
      %v2230 = vunpack.c.h.b16 %v1920
      %v2231 = vunpack.c.l.b16 %v1921
      %v2232 = vunpack.c.h.b16 %v1921
      %v2233 = vunpack.c.l.b16 %v1922
      %v2234 = vunpack.c.h.b16 %v1922
      %v2235 = vunpack.c.l.b16 %v1923
      %v2236 = vunpack.c.h.b16 %v1923
      %v2237 = vunpack.c.l.b16 %v1924
      %v2238 = vunpack.c.h.b16 %v1924
      %v2239 = vunpack.c.l.b16 %v1925
      %v2240 = vunpack.c.h.b16 %v1925
      %v2241 = vunpack.c.l.b16 %v1926
      %v2242 = vunpack.c.h.b16 %v1926
      %v2243 = vunpack.c.l.b16 %v1927
      %v2244 = vunpack.c.h.b16 %v1927
      %v2245 = vunpack.c.l.b16 %v1928
      %v2246 = vunpack.c.h.b16 %v1928
      %v2247 = vunpack.c.l.b16 %v1929
      %v2248 = vunpack.c.h.b16 %v1929
      %v2249 = vunpack.c.l.b16 %v1930
      %v2250 = vunpack.c.h.b16 %v1930
      %v2251 = vunpack.c.l.b16 %v1931
      %v2252 = vunpack.c.h.b16 %v1931
      %v2253 = vunpack.c.l.b16 %v1932
      %v2254 = vunpack.c.h.b16 %v1932
      %v2255 = vunpack.c.l.b16 %v1933
      %v2256 = vunpack.c.h.b16 %v1933
      %v2257 = vunpack.c.l.b16 %v1934
      %v2258 = vunpack.c.h.b16 %v1934
      %v2259 = vunpack.c.l.b16 %v1935
      %v2260 = vunpack.c.h.b16 %v1935
      %v2261 = vunpack.c.l.b16 %v1936
      %v2262 = vunpack.c.h.b16 %v1936
      %v2263 = vunpack.c.l.b16 %v1937
      %v2264 = vunpack.c.h.b16 %v1937
      %v2265 = vunpack.c.l.b16 %v1938
      %v2266 = vunpack.c.h.b16 %v1938
      %v2267 = vunpack.c.l.b16 %v1939
      %v2268 = vunpack.c.h.b16 %v1939
      %v2269 = vunpack.c.l.b16 %v1940
      %v2270 = vunpack.c.h.b16 %v1940
      %v2271 = vpack.c.b16 %v2063, %v2055
      %v2272 = vpack.c.b16 %v2064, %v2056
      %v2273 = vpack.c.b16 %v2065, %v2057
      %v2274 = vpack.c.b16 %v2066, %v2058
      %v2275 = vpack.c.b16 %v2067, %v2059
      %v2276 = vpack.c.b16 %v2068, %v2060
      %v2277 = vpack.c.b16 %v2069, %v2061
      %v2278 = vpack.c.b16 %v2070, %v2062
      %v2279 = vpack.c.b16 %v2079, %v2071
      %v2280 = vpack.c.b16 %v2080, %v2072
      %v2281 = vpack.c.b16 %v2081, %v2073
      %v2282 = vpack.c.b16 %v2082, %v2074
      %v2283 = vpack.c.b16 %v2083, %v2075
      %v2284 = vpack.c.b16 %v2084, %v2076
      %v2285 = vpack.c.b16 %v2085, %v2077
      %v2286 = vpack.c.b16 %v2086, %v2078
      %v2287 = vpack.c.b16 %v2095, %v2087
      %v2288 = vpack.c.b16 %v2096, %v2088
      %v2289 = vpack.c.b16 %v2097, %v2089
      %v2290 = vpack.c.b16 %v2098, %v2090
      %v2291 = vpack.c.b16 %v2099, %v2091
      %v2292 = vpack.c.b16 %v2100, %v2092
      %v2293 = vpack.c.b16 %v2101, %v2093
      %v2294 = vpack.c.b16 %v2102, %v2094
      %v2295 = vpack.c.b16 %v2111, %v2103
      %v2296 = vpack.c.b16 %v2112, %v2104
      %v2297 = vpack.c.b16 %v2113, %v2105
      %v2298 = vpack.c.b16 %v2114, %v2106
      %v2299 = vpack.c.b16 %v2115, %v2107
      %v2300 = vpack.c.b16 %v2116, %v2108
      %v2301 = vpack.c.b16 %v2117, %v2109
      %v2302 = vpack.c.b16 %v2118, %v2110
      %v2303 = vpack.c.b16 %v2127, %v2119
      %v2304 = vpack.c.b16 %v2128, %v2120
      %v2305 = vpack.c.b16 %v2129, %v2121
      %v2306 = vpack.c.b16 %v2130, %v2122
      %v2307 = vpack.c.b16 %v2131, %v2123
      %v2308 = vpack.c.b16 %v2132, %v2124
      %v2309 = vpack.c.b16 %v2133, %v2125
      %v2310 = vpack.c.b16 %v2134, %v2126
      %v2311 = vpack.c.b16 %v2143, %v2135
      %v2312 = vpack.c.b16 %v2144, %v2136
      %v2313 = vpack.c.b16 %v2145, %v2137
      %v2314 = vpack.c.b16 %v2146, %v2138
      %v2315 = vpack.c.b16 %v2147, %v2139
      %v2316 = vpack.c.b16 %v2148, %v2140
      %v2317 = vpack.c.b16 %v2149, %v2141
      %v2318 = vpack.c.b16 %v2150, %v2142
      %v2319 = vpack.c.b16 %v2159, %v2151
      %v2320 = vpack.c.b16 %v2160, %v2152
      %v2321 = vpack.c.b16 %v2161, %v2153
      %v2322 = vpack.c.b16 %v2162, %v2154
      %v2323 = vpack.c.b16 %v2163, %v2155
      %v2324 = vpack.c.b16 %v2164, %v2156
      %v2325 = vpack.c.b16 %v2165, %v2157
      %v2326 = vpack.c.b16 %v2166, %v2158
      %v2327 = vpack.c.b16 %v2175, %v2167
      %v2328 = vpack.c.b16 %v2176, %v2168
      %v2329 = vpack.c.b16 %v2177, %v2169
      %v2330 = vpack.c.b16 %v2178, %v2170
      %v2331 = vpack.c.b16 %v2179, %v2171
      %v2332 = vpack.c.b16 %v2180, %v2172
      %v2333 = vpack.c.b16 %v2181, %v2173
      %v2334 = vpack.c.b16 %v2182, %v2174
      %v2335 = vpack.c.b16 %v2191, %v2183
      %v2336 = vpack.c.b16 %v2192, %v2184
      %v2337 = vpack.c.b16 %v2193, %v2185
      %v2338 = vpack.c.b16 %v2194, %v2186
      %v2339 = vpack.c.b16 %v2195, %v2187
      %v2340 = vpack.c.b16 %v2196, %v2188
      %v2341 = vpack.c.b16 %v2197, %v2189
      %v2342 = vpack.c.b16 %v2198, %v2190
      %v2343 = vpack.c.b16 %v2207, %v2199
      %v2344 = vpack.c.b16 %v2208, %v2200
      %v2345 = vpack.c.b16 %v2209, %v2201
      %v2346 = vpack.c.b16 %v2210, %v2202
      %v2347 = vpack.c.b16 %v2211, %v2203
      %v2348 = vpack.c.b16 %v2212, %v2204
      %v2349 = vpack.c.b16 %v2213, %v2205
      %v2350 = vpack.c.b16 %v2214, %v2206
      %v2351 = vpack.c.b16 %v2223, %v2215
      %v2352 = vpack.c.b16 %v2224, %v2216
      %v2353 = vpack.c.b16 %v2225, %v2217
      %v2354 = vpack.c.b16 %v2226, %v2218
      %v2355 = vpack.c.b16 %v2227, %v2219
      %v2356 = vpack.c.b16 %v2228, %v2220
      %v2357 = vpack.c.b16 %v2229, %v2221
      %v2358 = vpack.c.b16 %v2230, %v2222
      %v2359 = vpack.c.b16 %v2239, %v2231
      %v2360 = vpack.c.b16 %v2240, %v2232
      %v2361 = vpack.c.b16 %v2241, %v2233
      %v2362 = vpack.c.b16 %v2242, %v2234
      %v2363 = vpack.c.b16 %v2243, %v2235
      %v2364 = vpack.c.b16 %v2244, %v2236
      %v2365 = vpack.c.b16 %v2245, %v2237
      %v2366 = vpack.c.b16 %v2246, %v2238
      %v2367 = vpack.c.b16 %v2255, %v2247
      %v2368 = vpack.c.b16 %v2256, %v2248
      %v2369 = vpack.c.b16 %v2257, %v2249
      %v2370 = vpack.c.b16 %v2258, %v2250
      %v2371 = vpack.c.b16 %v2259, %v2251
      %v2372 = vpack.c.b16 %v2260, %v2252
      %v2373 = vpack.c.b16 %v2261, %v2253
      %v2374 = vpack.c.b16 %v2262, %v2254
      %v2375 = vpack.c.b16 %v2263, %v2263
      %v2376 = vpack.c.b16 %v2264, %v2264
      %v2377 = vpack.c.b16 %v2265, %v2265
      %v2378 = vpack.c.b16 %v2266, %v2266
      %v2379 = vpack.c.b16 %v2267, %v2267
      %v2380 = vpack.c.b16 %v2268, %v2268
      %v2381 = vpack.c.b16 %v2269, %v2269
      %v2382 = vpack.c.b16 %v2270, %v2270
      %vm2487 = vcmask 719872
      %v2489 = vsel %vm2487, %v1945, 0
      %vm2491 = vcmask 1043456
      %v2493 = vsel %vm2491, %v2375, 0
      %v2496 = vsel %vm2491, %v2376, 0
      %v2499 = vsel %vm2491, %v2377, 0
      %v2502 = vsel %vm2491, %v2378, 0
      %v2505 = vsel %vm2491, %v2379, 0
      %v2508 = vsel %vm2491, %v2380, 0
      %v2511 = vsel %vm2491, %v2381, 0
      %v2514 = vsel %vm2491, %v2382, 0
      %2516 = vmatprep.subr.bf16.mxu0 %v2272
      %2517 = vmatpush1.bf16.msra.mxu0 %v2271
      %2518 = vmatprep.subr.bf16.mxu0 %v2280
      %2519 = vmatpush1.bf16.msra.mxu0 %v2279
      %2520 = vmatprep.subr.bf16.mxu0 %v2288
      %2521 = vmatpush1.bf16.msra.mxu0 %v2287
      %2522 = vmatprep.subr.bf16.mxu0 %v2296
      %2523 = vmatpush1.bf16.msra.mxu0 %v2295
      %2524 = vmatprep.subr.bf16.mxu0 %v2304
      %2525 = vmatpush1.bf16.msra.mxu0 %v2303
      %2526 = vmatprep.subr.bf16.mxu0 %v2312
      %2527 = vmatpush1.bf16.msra.mxu0 %v2311
      %2528 = vmatprep.subr.bf16.mxu0 %v2320
      %2529 = vmatpush1.bf16.msra.mxu0 %v2319
      %2530 = vmatprep.subr.bf16.mxu0 %v2328
      %2531 = vmatpush1.bf16.msra.mxu0 %v2327
      %2532 = vmatprep.subr.bf16.mxu0 %v2336
      %2533 = vmatpush1.bf16.msra.mxu0 %v2335
      %2534 = vmatprep.subr.bf16.mxu0 %v2344
      %2535 = vmatpush1.bf16.msra.mxu0 %v2343
      %2536 = vmatprep.subr.bf16.mxu0 %v2352
      %2537 = vmatpush1.bf16.msra.mxu0 %v2351
      %2538 = vmatprep.subr.bf16.mxu0 %v2360
      %2539 = vmatpush1.bf16.msra.mxu0 %v2359
      %2540 = vmatprep.subr.bf16.mxu0 %v2368
      %2541 = vmatpush1.bf16.msra.mxu0 %v2367
      %2542 = vmatprep.subr.bf16.mxu0 %v2496
      %2543 = vmatpush1.bf16.msra.mxu0 %v2493
      %2544 = vmatprep.subr.bf16.mxu0 0
      %2545 = vmatpush1.bf16.msra.mxu0 0
      %2546 = vmatprep.subr.bf16.mxu0 0
      %2547 = vmatpush1.bf16.msra.mxu0 0
      %2548 = vmatprep.mubr.bf16.mxu0 %v2489
      %2549 = vmatmul.mubr.bf16.gmra.mrb[0].mxu0 %v1944
      %v2550 = vpop.f32.mrb[0].mxu0
      %v2551 = vadd.f32 0.0, %v2550
      %v2552 = vpop.f32.mrb[0].mxu0
      %v2553 = vadd.f32 0.0, %v2552
      %v2554 = vpop.f32.mrb[0].mxu0
      %v2555 = vpop.f32.mrb[0].mxu0
      %2556 = vdwg.mxu0
      %2557 = vmatprep.subr.bf16.mxu0 %v2274
      %2558 = vmatpush1.bf16.msra.mxu0 %v2273
      %2559 = vmatprep.subr.bf16.mxu0 %v2282
      %2560 = vmatpush1.bf16.msra.mxu0 %v2281
      %2561 = vmatprep.subr.bf16.mxu0 %v2290
      %2562 = vmatpush1.bf16.msra.mxu0 %v2289
      %2563 = vmatprep.subr.bf16.mxu0 %v2298
      %2564 = vmatpush1.bf16.msra.mxu0 %v2297
      %2565 = vmatprep.subr.bf16.mxu0 %v2306
      %2566 = vmatpush1.bf16.msra.mxu0 %v2305
      %2567 = vmatprep.subr.bf16.mxu0 %v2314
      %2568 = vmatpush1.bf16.msra.mxu0 %v2313
      %2569 = vmatprep.subr.bf16.mxu0 %v2322
      %2570 = vmatpush1.bf16.msra.mxu0 %v2321
      %2571 = vmatprep.subr.bf16.mxu0 %v2330
      %2572 = vmatpush1.bf16.msra.mxu0 %v2329
      %2573 = vmatprep.subr.bf16.mxu0 %v2338
      %2574 = vmatpush1.bf16.msra.mxu0 %v2337
      %2575 = vmatprep.subr.bf16.mxu0 %v2346
      %2576 = vmatpush1.bf16.msra.mxu0 %v2345
      %2577 = vmatprep.subr.bf16.mxu0 %v2354
      %2578 = vmatpush1.bf16.msra.mxu0 %v2353
      %2579 = vmatprep.subr.bf16.mxu0 %v2362
      %2580 = vmatpush1.bf16.msra.mxu0 %v2361
      %2581 = vmatprep.subr.bf16.mxu0 %v2370
      %2582 = vmatpush1.bf16.msra.mxu0 %v2369
      %2583 = vmatprep.subr.bf16.mxu0 %v2502
      %2584 = vmatpush1.bf16.msra.mxu0 %v2499
      %2585 = vmatprep.subr.bf16.mxu0 0
      %2586 = vmatpush1.bf16.msra.mxu0 0
      %2587 = vmatprep.subr.bf16.mxu0 0
      %2588 = vmatpush1.bf16.msra.mxu0 0
      %2589 = vmatprep.mubr.bf16.mxu0 %v2489
      %2590 = vmatmul.mubr.bf16.gmra.mrb[0].mxu0 %v1944
      %v2591 = vpop.f32.mrb[0].mxu0
      %v2592 = vadd.f32 0.0, %v2591
      %v2593 = vpop.f32.mrb[0].mxu0
      %v2594 = vadd.f32 0.0, %v2593
      %v2595 = vpop.f32.mrb[0].mxu0
      %v2596 = vpop.f32.mrb[0].mxu0
      %2597 = vdwg.mxu0
      %2598 = vmatprep.subr.bf16.mxu0 %v2276
      %2599 = vmatpush1.bf16.msra.mxu0 %v2275
      %2600 = vmatprep.subr.bf16.mxu0 %v2284
      %2601 = vmatpush1.bf16.msra.mxu0 %v2283
      %2602 = vmatprep.subr.bf16.mxu0 %v2292
      %2603 = vmatpush1.bf16.msra.mxu0 %v2291
      %2604 = vmatprep.subr.bf16.mxu0 %v2300
      %2605 = vmatpush1.bf16.msra.mxu0 %v2299
      %2606 = vmatprep.subr.bf16.mxu0 %v2308
      %2607 = vmatpush1.bf16.msra.mxu0 %v2307
      %2608 = vmatprep.subr.bf16.mxu0 %v2316
      %2609 = vmatpush1.bf16.msra.mxu0 %v2315
      %2610 = vmatprep.subr.bf16.mxu0 %v2324
      %2611 = vmatpush1.bf16.msra.mxu0 %v2323
      %2612 = vmatprep.subr.bf16.mxu0 %v2332
      %2613 = vmatpush1.bf16.msra.mxu0 %v2331
      %2614 = vmatprep.subr.bf16.mxu0 %v2340
      %2615 = vmatpush1.bf16.msra.mxu0 %v2339
      %2616 = vmatprep.subr.bf16.mxu0 %v2348
      %2617 = vmatpush1.bf16.msra.mxu0 %v2347
      %2618 = vmatprep.subr.bf16.mxu0 %v2356
      %2619 = vmatpush1.bf16.msra.mxu0 %v2355
      %2620 = vmatprep.subr.bf16.mxu0 %v2364
      %2621 = vmatpush1.bf16.msra.mxu0 %v2363
      %2622 = vmatprep.subr.bf16.mxu0 %v2372
      %2623 = vmatpush1.bf16.msra.mxu0 %v2371
      %2624 = vmatprep.subr.bf16.mxu0 %v2508
      %2625 = vmatpush1.bf16.msra.mxu0 %v2505
      %2626 = vmatprep.subr.bf16.mxu0 0
      %2627 = vmatpush1.bf16.msra.mxu0 0
      %2628 = vmatprep.subr.bf16.mxu0 0
      %2629 = vmatpush1.bf16.msra.mxu0 0
      %2630 = vmatprep.mubr.bf16.mxu0 %v2489
      %2631 = vmatmul.mubr.bf16.gmra.mrb[0].mxu0 %v1944
      %v2632 = vpop.f32.mrb[0].mxu0
      %v2633 = vadd.f32 0.0, %v2632
      %v2634 = vpop.f32.mrb[0].mxu0
      %v2635 = vadd.f32 0.0, %v2634
      %v2636 = vpop.f32.mrb[0].mxu0
      %v2637 = vpop.f32.mrb[0].mxu0
      %2638 = vdwg.mxu0
      %2639 = vmatprep.subr.bf16.mxu0 %v2278
      %2640 = vmatpush1.bf16.msra.mxu0 %v2277
      %2641 = vmatprep.subr.bf16.mxu0 %v2286
      %2642 = vmatpush1.bf16.msra.mxu0 %v2285
      %2643 = vmatprep.subr.bf16.mxu0 %v2294
      %2644 = vmatpush1.bf16.msra.mxu0 %v2293
      %2645 = vmatprep.subr.bf16.mxu0 %v2302
      %2646 = vmatpush1.bf16.msra.mxu0 %v2301
      %2647 = vmatprep.subr.bf16.mxu0 %v2310
      %2648 = vmatpush1.bf16.msra.mxu0 %v2309
      %2649 = vmatprep.subr.bf16.mxu0 %v2318
      %2650 = vmatpush1.bf16.msra.mxu0 %v2317
      %2651 = vmatprep.subr.bf16.mxu0 %v2326
      %2652 = vmatpush1.bf16.msra.mxu0 %v2325
      %2653 = vmatprep.subr.bf16.mxu0 %v2334
      %2654 = vmatpush1.bf16.msra.mxu0 %v2333
      %2655 = vmatprep.subr.bf16.mxu0 %v2342
      %2656 = vmatpush1.bf16.msra.mxu0 %v2341
      %2657 = vmatprep.subr.bf16.mxu0 %v2350
      %2658 = vmatpush1.bf16.msra.mxu0 %v2349
      %2659 = vmatprep.subr.bf16.mxu0 %v2358
      %2660 = vmatpush1.bf16.msra.mxu0 %v2357
      %2661 = vmatprep.subr.bf16.mxu0 %v2366
      %2662 = vmatpush1.bf16.msra.mxu0 %v2365
      %2663 = vmatprep.subr.bf16.mxu0 %v2374
      %2664 = vmatpush1.bf16.msra.mxu0 %v2373
      %2665 = vmatprep.subr.bf16.mxu0 %v2514
      %2666 = vmatpush1.bf16.msra.mxu0 %v2511
      %2667 = vmatprep.subr.bf16.mxu0 0
      %2668 = vmatpush1.bf16.msra.mxu0 0
      %2669 = vmatprep.subr.bf16.mxu0 0
      %2670 = vmatpush1.bf16.msra.mxu0 0
      %2671 = vmatprep.mubr.bf16.mxu0 %v2489
      %2672 = vmatmul.mubr.bf16.gmra.mrb[0].mxu0 %v1944
      %v2673 = vpop.f32.mrb[0].mxu0
      %v2674 = vadd.f32 0.0, %v2673
      %v2675 = vpop.f32.mrb[0].mxu0
      %v2676 = vadd.f32 0.0, %v2675
      %v2677 = vpop.f32.mrb[0].mxu0
      %v2678 = vpop.f32.mrb[0].mxu0
      %2679 = vdwg.mxu0
      %v2681 = vlaneseq
      %v2682 = vshrl.u32 %v2681, 7
      %v2683 = vsub.s32 0, %v2682
      %v2684 = vrot.slane %v199, %v2683
      %v2685 = vlaneseq
      %v2686 = vshrl.u32 %v2685, 7
      %v2687 = vsub.s32 1, %v2686
      %v2688 = vrot.slane %v199, %v2687
      %v2689 = vlaneseq
      %v2690 = vshrl.u32 %v2689, 7
      %v2691 = vsub.s32 2, %v2690
      %v2692 = vrot.slane %v199, %v2691
      %v2693 = vlaneseq
      %v2694 = vshrl.u32 %v2693, 7
      %v2695 = vsub.s32 3, %v2694
      %v2696 = vrot.slane %v199, %v2695
      %v2697 = vlaneseq
      %v2698 = vshrl.u32 %v2697, 7
      %v2699 = vsub.s32 4, %v2698
      %v2700 = vrot.slane %v199, %v2699
      %v2701 = vlaneseq
      %v2702 = vshrl.u32 %v2701, 7
      %v2703 = vsub.s32 5, %v2702
      %v2704 = vrot.slane %v199, %v2703
      %v2705 = vlaneseq
      %v2706 = vshrl.u32 %v2705, 7
      %v2707 = vsub.s32 6, %v2706
      %v2708 = vrot.slane %v199, %v2707
      %v2709 = vlaneseq
      %v2710 = vshrl.u32 %v2709, 7
      %v2711 = vsub.s32 7, %v2710
      %v2712 = vrot.slane %v199, %v2711
      %v2721 = vmul.f32 %v2551, %v2684
      %v2722 = vmul.f32 %v2553, %v2688
      %v2723 = vmul.f32 %v2592, %v2692
      %v2724 = vmul.f32 %v2594, %v2696
      %v2725 = vmul.f32 %v2633, %v2700
      %v2726 = vmul.f32 %v2635, %v2704
      %v2727 = vmul.f32 %v2674, %v2708
      %v2728 = vmul.f32 %v2676, %v2712
      %v2729 = vadd.f32 %v2721, %v2722
      %v2730 = vadd.f32 %v2729, %v2723
      %v2731 = vadd.f32 %v2730, %v2724
      %v2732 = vadd.f32 %v2731, %v2725
      %v2733 = vadd.f32 %v2732, %v2726
      %v2734 = vadd.f32 %v2733, %v2727
      %v2735 = vadd.f32 %v2734, %v2728
      %2736 = vadd.xlane.f32.xlu0 %v2735
      %v2737 = vpop.xlane.xlu0 %2736
      %v2738 = vmul.f32 %v2737, 0.001953125
      %v2739 = vmul.f32 %v2721, %v2551
      %v2740 = vmul.f32 %v2722, %v2553
      %v2741 = vmul.f32 %v2723, %v2592
      %v2742 = vmul.f32 %v2724, %v2594
      %v2743 = vmul.f32 %v2725, %v2633
      %v2744 = vmul.f32 %v2726, %v2635
      %v2745 = vmul.f32 %v2727, %v2674
      %v2746 = vmul.f32 %v2728, %v2676
      %v2747 = vadd.f32 %v2739, %v2740
      %v2748 = vadd.f32 %v2747, %v2741
      %v2749 = vadd.f32 %v2748, %v2742
      %v2750 = vadd.f32 %v2749, %v2743
      %v2751 = vadd.f32 %v2750, %v2744
      %v2752 = vadd.f32 %v2751, %v2745
      %v2753 = vadd.f32 %v2752, %v2746
      %2754 = vadd.xlane.f32.xlu0 %v2753
      %v2755 = vpop.xlane.xlu0 %2754
      %v2756 = vmul.f32 %v2755, 0.001953125
      %v2757 = vmul.f32 %v2738, %v2738
      %v2758 = vsub.f32 %v2756, %v2757
      %v2759 = vmax.f32 %v2758, 0.0
      %v2760 = vsub.f32 %v2551, %v2738
      %v2761 = vsub.f32 %v2553, %v2738
      %v2762 = vsub.f32 %v2592, %v2738
      %v2763 = vsub.f32 %v2594, %v2738
      %v2764 = vsub.f32 %v2633, %v2738
      %v2765 = vsub.f32 %v2635, %v2738
      %v2766 = vsub.f32 %v2674, %v2738
      %v2767 = vsub.f32 %v2676, %v2738
      %v2768 = vadd.f32 %v2759, 1e-05
      %v2769 = vrsqrt.pop %v2768
      %v2770 = vmul.f32 %v2760, %v2769
      %v2771 = vmul.f32 %v2761, %v2769
      %v2772 = vmul.f32 %v2762, %v2769
      %v2773 = vmul.f32 %v2763, %v2769
      %v2774 = vmul.f32 %v2764, %v2769
      %v2775 = vmul.f32 %v2765, %v2769
      %v2776 = vmul.f32 %v2766, %v2769
      %v2777 = vmul.f32 %v2767, %v2769
      %v2778 = vmax.f32 %v2770, 0.0
      %v2779 = vmax.f32 %v2771, 0.0
      %v2780 = vmax.f32 %v2772, 0.0
      %v2781 = vmax.f32 %v2773, 0.0
      %v2782 = vmax.f32 %v2774, 0.0
      %v2783 = vmax.f32 %v2775, 0.0
      %v2784 = vmax.f32 %v2776, 0.0
      %v2785 = vmax.f32 %v2777, 0.0
      %v2786 = vmul.f32 %v2778, %v2684
      %v2787 = vmul.f32 %v2779, %v2688
      %v2788 = vmul.f32 %v2780, %v2692
      %v2789 = vmul.f32 %v2781, %v2696
      %v2790 = vmul.f32 %v2782, %v2700
      %v2791 = vmul.f32 %v2783, %v2704
      %v2792 = vmul.f32 %v2784, %v2708
      %v2793 = vmul.f32 %v2785, %v2712
      %2794 = vrot.lane.b32.xlu0 %v2786, 111
      %v2795 = vpop.permute.xlu0 %2794
      %2796 = vrot.lane.b32.xlu0 %v2787, 111
      %v2797 = vpop.permute.xlu0 %2796
      %2798 = vrot.lane.b32.xlu0 %v2788, 111
      %v2799 = vpop.permute.xlu0 %2798
      %2800 = vrot.lane.b32.xlu0 %v2789, 111
      %v2801 = vpop.permute.xlu0 %2800
      %2802 = vrot.lane.b32.xlu0 %v2790, 111
      %v2803 = vpop.permute.xlu0 %2802
      %2804 = vrot.lane.b32.xlu0 %v2791, 111
      %v2805 = vpop.permute.xlu0 %2804
      %2806 = vrot.lane.b32.xlu0 %v2792, 111
      %v2807 = vpop.permute.xlu0 %2806
      %2808 = vrot.lane.b32.xlu0 %v2793, 111
      %v2809 = vpop.permute.xlu0 %2808
      %v2810 = vsel %vm226, %v2807, %v2809
      %v2811 = vsel %vm226, %v2805, %v2807
      %v2812 = vsel %vm226, %v2803, %v2805
      %v2813 = vsel %vm226, %v2801, %v2803
      %v2814 = vsel %vm226, %v2799, %v2801
      %v2815 = vsel %vm226, %v2797, %v2799
      %v2816 = vsel %vm226, %v2795, %v2797
      %v2817 = vsel %vm226, %v2809, %v2795
      %v2818 = vpack.c.bf16 %v2817, %v2817
      %v2819 = vpack.c.bf16 %v2816, %v2816
      %v2820 = vpack.c.bf16 %v2815, %v2815
      %v2821 = vpack.c.bf16 %v2814, %v2814
      %v2822 = vpack.c.bf16 %v2813, %v2813
      %v2823 = vpack.c.bf16 %v2812, %v2812
      %v2824 = vpack.c.bf16 %v2811, %v2811
      %v2825 = vpack.c.bf16 %v2810, %v2810
      %v2834 = vunpack.c.l.b16 %v2818
      %v2835 = vunpack.c.l.b16 %v2819
      %v2836 = vunpack.c.l.b16 %v2820
      %v2837 = vunpack.c.l.b16 %v2821
      %v2838 = vunpack.c.l.b16 %v2822
      %v2839 = vunpack.c.l.b16 %v2823
      %v2840 = vunpack.c.l.b16 %v2824
      %v2841 = vunpack.c.l.b16 %v2825
      %v2842 = vpack.c.b16 %v2835, %v2834
      %v2843 = vpack.c.b16 %v2837, %v2836
      %v2844 = vpack.c.b16 %v2839, %v2838
      %v2845 = vpack.c.b16 %v2841, %v2840
      %2850 = vst [vmem:[#allocation2] sm:$0xff] %v2842
      %2851 = vst [vmem:[#allocation2 + $0x8] sm:$0xff] %v2843
      %2852 = vst [vmem:[#allocation2 + $0x10] sm:$0xff] %v2844
      %2853 = vst [vmem:[#allocation2 + $0x18] sm:$0xff] %v2845
      %2854 = vrot.lane.b32.xlu0 %v2786, 110
      %v2855 = vpop.permute.xlu0 %2854
      %2856 = vrot.lane.b32.xlu0 %v2787, 110
      %v2857 = vpop.permute.xlu0 %2856
      %2858 = vrot.lane.b32.xlu0 %v2788, 110
      %v2859 = vpop.permute.xlu0 %2858
      %2860 = vrot.lane.b32.xlu0 %v2789, 110
      %v2861 = vpop.permute.xlu0 %2860
      %2862 = vrot.lane.b32.xlu0 %v2790, 110
      %v2863 = vpop.permute.xlu0 %2862
      %2864 = vrot.lane.b32.xlu0 %v2791, 110
      %v2865 = vpop.permute.xlu0 %2864
      %2866 = vrot.lane.b32.xlu0 %v2792, 110
      %v2867 = vpop.permute.xlu0 %2866
      %2868 = vrot.lane.b32.xlu0 %v2793, 110
      %v2869 = vpop.permute.xlu0 %2868
      %v2870 = vsel %vm287, %v2867, %v2869
      %v2871 = vsel %vm287, %v2865, %v2867
      %v2872 = vsel %vm287, %v2863, %v2865
      %v2873 = vsel %vm287, %v2861, %v2863
      %v2874 = vsel %vm287, %v2859, %v2861
      %v2875 = vsel %vm287, %v2857, %v2859
      %v2876 = vsel %vm287, %v2855, %v2857
      %v2877 = vsel %vm287, %v2869, %v2855
      %v2878 = vpack.c.bf16 %v2877, %v2877
      %v2879 = vpack.c.bf16 %v2876, %v2876
      %v2880 = vpack.c.bf16 %v2875, %v2875
      %v2881 = vpack.c.bf16 %v2874, %v2874
      %v2882 = vpack.c.bf16 %v2873, %v2873
      %v2883 = vpack.c.bf16 %v2872, %v2872
      %v2884 = vpack.c.bf16 %v2871, %v2871
      %v2885 = vpack.c.bf16 %v2870, %v2870
      %v2894 = vunpack.c.l.b16 %v2878
      %v2895 = vunpack.c.l.b16 %v2879
      %v2896 = vunpack.c.l.b16 %v2880
      %v2897 = vunpack.c.l.b16 %v2881
      %v2898 = vunpack.c.l.b16 %v2882
      %v2899 = vunpack.c.l.b16 %v2883
      %v2900 = vunpack.c.l.b16 %v2884
      %v2901 = vunpack.c.l.b16 %v2885
      %v2902 = vpack.c.b16 %v2895, %v2894
      %v2903 = vpack.c.b16 %v2897, %v2896
      %v2904 = vpack.c.b16 %v2899, %v2898
      %v2905 = vpack.c.b16 %v2901, %v2900
      %2910 = vst [vmem:[#allocation2 + $0x20] sm:$0xff] %v2902
      %2911 = vst [vmem:[#allocation2 + $0x28] sm:$0xff] %v2903
      %2912 = vst [vmem:[#allocation2 + $0x30] sm:$0xff] %v2904
      %2913 = vst [vmem:[#allocation2 + $0x38] sm:$0xff] %v2905
      %2914 = vrot.lane.b32.xlu0 %v2786, 109
      %v2915 = vpop.permute.xlu0 %2914
      %2916 = vrot.lane.b32.xlu0 %v2787, 109
      %v2917 = vpop.permute.xlu0 %2916
      %2918 = vrot.lane.b32.xlu0 %v2788, 109
      %v2919 = vpop.permute.xlu0 %2918
      %2920 = vrot.lane.b32.xlu0 %v2789, 109
      %v2921 = vpop.permute.xlu0 %2920
      %2922 = vrot.lane.b32.xlu0 %v2790, 109
      %v2923 = vpop.permute.xlu0 %2922
      %2924 = vrot.lane.b32.xlu0 %v2791, 109
      %v2925 = vpop.permute.xlu0 %2924
      %2926 = vrot.lane.b32.xlu0 %v2792, 109
      %v2927 = vpop.permute.xlu0 %2926
      %2928 = vrot.lane.b32.xlu0 %v2793, 109
      %v2929 = vpop.permute.xlu0 %2928
      %v2930 = vsel %vm348, %v2927, %v2929
      %v2931 = vsel %vm348, %v2925, %v2927
      %v2932 = vsel %vm348, %v2923, %v2925
      %v2933 = vsel %vm348, %v2921, %v2923
      %v2934 = vsel %vm348, %v2919, %v2921
      %v2935 = vsel %vm348, %v2917, %v2919
      %v2936 = vsel %vm348, %v2915, %v2917
      %v2937 = vsel %vm348, %v2929, %v2915
      %v2938 = vpack.c.bf16 %v2937, %v2937
      %v2939 = vpack.c.bf16 %v2936, %v2936
      %v2940 = vpack.c.bf16 %v2935, %v2935
      %v2941 = vpack.c.bf16 %v2934, %v2934
      %v2942 = vpack.c.bf16 %v2933, %v2933
      %v2943 = vpack.c.bf16 %v2932, %v2932
      %v2944 = vpack.c.bf16 %v2931, %v2931
      %v2945 = vpack.c.bf16 %v2930, %v2930
      %v2954 = vunpack.c.l.b16 %v2938
      %v2955 = vunpack.c.l.b16 %v2939
      %v2956 = vunpack.c.l.b16 %v2940
      %v2957 = vunpack.c.l.b16 %v2941
      %v2958 = vunpack.c.l.b16 %v2942
      %v2959 = vunpack.c.l.b16 %v2943
      %v2960 = vunpack.c.l.b16 %v2944
      %v2961 = vunpack.c.l.b16 %v2945
      %v2962 = vpack.c.b16 %v2955, %v2954
      %v2963 = vpack.c.b16 %v2957, %v2956
      %v2964 = vpack.c.b16 %v2959, %v2958
      %v2965 = vpack.c.b16 %v2961, %v2960
      %2970 = vst [vmem:[#allocation2 + $0x40] sm:$0xff] %v2962
      %2971 = vst [vmem:[#allocation2 + $0x48] sm:$0xff] %v2963
      %2972 = vst [vmem:[#allocation2 + $0x50] sm:$0xff] %v2964
      %2973 = vst [vmem:[#allocation2 + $0x58] sm:$0xff] %v2965
      %2974 = vrot.lane.b32.xlu0 %v2786, 101
      %v2975 = vpop.permute.xlu0 %2974
      %2976 = vrot.lane.b32.xlu0 %v2787, 101
      %v2977 = vpop.permute.xlu0 %2976
      %2978 = vrot.lane.b32.xlu0 %v2788, 101
      %v2979 = vpop.permute.xlu0 %2978
      %2980 = vrot.lane.b32.xlu0 %v2789, 101
      %v2981 = vpop.permute.xlu0 %2980
      %2982 = vrot.lane.b32.xlu0 %v2790, 101
      %v2983 = vpop.permute.xlu0 %2982
      %2984 = vrot.lane.b32.xlu0 %v2791, 101
      %v2985 = vpop.permute.xlu0 %2984
      %2986 = vrot.lane.b32.xlu0 %v2792, 101
      %v2987 = vpop.permute.xlu0 %2986
      %2988 = vrot.lane.b32.xlu0 %v2793, 101
      %v2989 = vpop.permute.xlu0 %2988
      %v2990 = vsel %vm409, %v2987, %v2989
      %v2991 = vsel %vm409, %v2985, %v2987
      %v2992 = vsel %vm409, %v2983, %v2985
      %v2993 = vsel %vm409, %v2981, %v2983
      %v2994 = vsel %vm409, %v2979, %v2981
      %v2995 = vsel %vm409, %v2977, %v2979
      %v2996 = vsel %vm409, %v2975, %v2977
      %v2997 = vsel %vm409, %v2989, %v2975
      %v2998 = vpack.c.bf16 %v2997, %v2997
      %v2999 = vpack.c.bf16 %v2996, %v2996
      %v3000 = vpack.c.bf16 %v2995, %v2995
      %v3001 = vpack.c.bf16 %v2994, %v2994
      %v3002 = vpack.c.bf16 %v2993, %v2993
      %v3003 = vpack.c.bf16 %v2992, %v2992
      %v3004 = vpack.c.bf16 %v2991, %v2991
      %v3005 = vpack.c.bf16 %v2990, %v2990
      %v3014 = vunpack.c.l.b16 %v2998
      %v3015 = vunpack.c.l.b16 %v2999
      %v3016 = vunpack.c.l.b16 %v3000
      %v3017 = vunpack.c.l.b16 %v3001
      %v3018 = vunpack.c.l.b16 %v3002
      %v3019 = vunpack.c.l.b16 %v3003
      %v3020 = vunpack.c.l.b16 %v3004
      %v3021 = vunpack.c.l.b16 %v3005
      %v3022 = vpack.c.b16 %v3015, %v3014
      %v3023 = vpack.c.b16 %v3017, %v3016
      %v3024 = vpack.c.b16 %v3019, %v3018
      %v3025 = vpack.c.b16 %v3021, %v3020
      %3030 = vst [vmem:[#allocation2 + $0x60] sm:$0xff] %v3022
      %3031 = vst [vmem:[#allocation2 + $0x68] sm:$0xff] %v3023
      %3032 = vst [vmem:[#allocation2 + $0x70] sm:$0xff] %v3024
      %3033 = vst [vmem:[#allocation2 + $0x78] sm:$0xff] %v3025
      %3034 = vrot.lane.b32.xlu0 %v2786, 100
      %v3035 = vpop.permute.xlu0 %3034
      %3036 = vrot.lane.b32.xlu0 %v2787, 100
      %v3037 = vpop.permute.xlu0 %3036
      %3038 = vrot.lane.b32.xlu0 %v2788, 100
      %v3039 = vpop.permute.xlu0 %3038
      %3040 = vrot.lane.b32.xlu0 %v2789, 100
      %v3041 = vpop.permute.xlu0 %3040
      %3042 = vrot.lane.b32.xlu0 %v2790, 100
      %v3043 = vpop.permute.xlu0 %3042
      %3044 = vrot.lane.b32.xlu0 %v2791, 100
      %v3045 = vpop.permute.xlu0 %3044
      %3046 = vrot.lane.b32.xlu0 %v2792, 100
      %v3047 = vpop.permute.xlu0 %3046
      %3048 = vrot.lane.b32.xlu0 %v2793, 100
      %v3049 = vpop.permute.xlu0 %3048
      %v3050 = vsel %vm470, %v3047, %v3049
      %v3051 = vsel %vm470, %v3045, %v3047
      %v3052 = vsel %vm470, %v3043, %v3045
      %v3053 = vsel %vm470, %v3041, %v3043
      %v3054 = vsel %vm470, %v3039, %v3041
      %v3055 = vsel %vm470, %v3037, %v3039
      %v3056 = vsel %vm470, %v3035, %v3037
      %v3057 = vsel %vm470, %v3049, %v3035
      %v3058 = vpack.c.bf16 %v3057, %v3057
      %v3059 = vpack.c.bf16 %v3056, %v3056
      %v3060 = vpack.c.bf16 %v3055, %v3055
      %v3061 = vpack.c.bf16 %v3054, %v3054
      %v3062 = vpack.c.bf16 %v3053, %v3053
      %v3063 = vpack.c.bf16 %v3052, %v3052
      %v3064 = vpack.c.bf16 %v3051, %v3051
      %v3065 = vpack.c.bf16 %v3050, %v3050
      %v3074 = vunpack.c.l.b16 %v3058
      %v3075 = vunpack.c.l.b16 %v3059
      %v3076 = vunpack.c.l.b16 %v3060
      %v3077 = vunpack.c.l.b16 %v3061
      %v3078 = vunpack.c.l.b16 %v3062
      %v3079 = vunpack.c.l.b16 %v3063
      %v3080 = vunpack.c.l.b16 %v3064
      %v3081 = vunpack.c.l.b16 %v3065
      %v3082 = vpack.c.b16 %v3075, %v3074
      %v3083 = vpack.c.b16 %v3077, %v3076
      %v3084 = vpack.c.b16 %v3079, %v3078
      %v3085 = vpack.c.b16 %v3081, %v3080
      %3090 = vst [vmem:[#allocation2 + $0x80] sm:$0xff] %v3082
      %3091 = vst [vmem:[#allocation2 + $0x88] sm:$0xff] %v3083
      %3092 = vst [vmem:[#allocation2 + $0x90] sm:$0xff] %v3084
      %3093 = vst [vmem:[#allocation2 + $0x98] sm:$0xff] %v3085
      %3094 = vrot.lane.b32.xlu0 %v2786, 99
      %v3095 = vpop.permute.xlu0 %3094
      %3096 = vrot.lane.b32.xlu0 %v2787, 99
      %v3097 = vpop.permute.xlu0 %3096
      %3098 = vrot.lane.b32.xlu0 %v2788, 99
      %v3099 = vpop.permute.xlu0 %3098
      %3100 = vrot.lane.b32.xlu0 %v2789, 99
      %v3101 = vpop.permute.xlu0 %3100
      %3102 = vrot.lane.b32.xlu0 %v2790, 99
      %v3103 = vpop.permute.xlu0 %3102
      %3104 = vrot.lane.b32.xlu0 %v2791, 99
      %v3105 = vpop.permute.xlu0 %3104
      %3106 = vrot.lane.b32.xlu0 %v2792, 99
      %v3107 = vpop.permute.xlu0 %3106
      %3108 = vrot.lane.b32.xlu0 %v2793, 99
      %v3109 = vpop.permute.xlu0 %3108
      %v3110 = vsel %vm531, %v3107, %v3109
      %v3111 = vsel %vm531, %v3105, %v3107
      %v3112 = vsel %vm531, %v3103, %v3105
      %v3113 = vsel %vm531, %v3101, %v3103
      %v3114 = vsel %vm531, %v3099, %v3101
      %v3115 = vsel %vm531, %v3097, %v3099
      %v3116 = vsel %vm531, %v3095, %v3097
      %v3117 = vsel %vm531, %v3109, %v3095
      %v3118 = vpack.c.bf16 %v3117, %v3117
      %v3119 = vpack.c.bf16 %v3116, %v3116
      %v3120 = vpack.c.bf16 %v3115, %v3115
      %v3121 = vpack.c.bf16 %v3114, %v3114
      %v3122 = vpack.c.bf16 %v3113, %v3113
      %v3123 = vpack.c.bf16 %v3112, %v3112
      %v3124 = vpack.c.bf16 %v3111, %v3111
      %v3125 = vpack.c.bf16 %v3110, %v3110
      %v3134 = vunpack.c.l.b16 %v3118
      %v3135 = vunpack.c.l.b16 %v3119
      %v3136 = vunpack.c.l.b16 %v3120
      %v3137 = vunpack.c.l.b16 %v3121
      %v3138 = vunpack.c.l.b16 %v3122
      %v3139 = vunpack.c.l.b16 %v3123
      %v3140 = vunpack.c.l.b16 %v3124
      %v3141 = vunpack.c.l.b16 %v3125
      %v3142 = vpack.c.b16 %v3135, %v3134
      %v3143 = vpack.c.b16 %v3137, %v3136
      %v3144 = vpack.c.b16 %v3139, %v3138
      %v3145 = vpack.c.b16 %v3141, %v3140
      %3150 = vst [vmem:[#allocation2 + $0xa0] sm:$0xff] %v3142
      %3151 = vst [vmem:[#allocation2 + $0xa8] sm:$0xff] %v3143
      %3152 = vst [vmem:[#allocation2 + $0xb0] sm:$0xff] %v3144
      %3153 = vst [vmem:[#allocation2 + $0xb8] sm:$0xff] %v3145
      %3154 = vrot.lane.b32.xlu0 %v2786, 91
      %v3155 = vpop.permute.xlu0 %3154
      %3156 = vrot.lane.b32.xlu0 %v2787, 91
      %v3157 = vpop.permute.xlu0 %3156
      %3158 = vrot.lane.b32.xlu0 %v2788, 91
      %v3159 = vpop.permute.xlu0 %3158
      %3160 = vrot.lane.b32.xlu0 %v2789, 91
      %v3161 = vpop.permute.xlu0 %3160
      %3162 = vrot.lane.b32.xlu0 %v2790, 91
      %v3163 = vpop.permute.xlu0 %3162
      %3164 = vrot.lane.b32.xlu0 %v2791, 91
      %v3165 = vpop.permute.xlu0 %3164
      %3166 = vrot.lane.b32.xlu0 %v2792, 91
      %v3167 = vpop.permute.xlu0 %3166
      %3168 = vrot.lane.b32.xlu0 %v2793, 91
      %v3169 = vpop.permute.xlu0 %3168
      %v3170 = vsel %vm592, %v3167, %v3169
      %v3171 = vsel %vm592, %v3165, %v3167
      %v3172 = vsel %vm592, %v3163, %v3165
      %v3173 = vsel %vm592, %v3161, %v3163
      %v3174 = vsel %vm592, %v3159, %v3161
      %v3175 = vsel %vm592, %v3157, %v3159
      %v3176 = vsel %vm592, %v3155, %v3157
      %v3177 = vsel %vm592, %v3169, %v3155
      %v3178 = vpack.c.bf16 %v3177, %v3177
      %v3179 = vpack.c.bf16 %v3176, %v3176
      %v3180 = vpack.c.bf16 %v3175, %v3175
      %v3181 = vpack.c.bf16 %v3174, %v3174
      %v3182 = vpack.c.bf16 %v3173, %v3173
      %v3183 = vpack.c.bf16 %v3172, %v3172
      %v3184 = vpack.c.bf16 %v3171, %v3171
      %v3185 = vpack.c.bf16 %v3170, %v3170
      %v3194 = vunpack.c.l.b16 %v3178
      %v3195 = vunpack.c.l.b16 %v3179
      %v3196 = vunpack.c.l.b16 %v3180
      %v3197 = vunpack.c.l.b16 %v3181
      %v3198 = vunpack.c.l.b16 %v3182
      %v3199 = vunpack.c.l.b16 %v3183
      %v3200 = vunpack.c.l.b16 %v3184
      %v3201 = vunpack.c.l.b16 %v3185
      %v3202 = vpack.c.b16 %v3195, %v3194
      %v3203 = vpack.c.b16 %v3197, %v3196
      %v3204 = vpack.c.b16 %v3199, %v3198
      %v3205 = vpack.c.b16 %v3201, %v3200
      %3210 = vst [vmem:[#allocation2 + $0xc0] sm:$0xff] %v3202
      %3211 = vst [vmem:[#allocation2 + $0xc8] sm:$0xff] %v3203
      %3212 = vst [vmem:[#allocation2 + $0xd0] sm:$0xff] %v3204
      %3213 = vst [vmem:[#allocation2 + $0xd8] sm:$0xff] %v3205
      %3214 = vrot.lane.b32.xlu0 %v2786, 90
      %v3215 = vpop.permute.xlu0 %3214
      %3216 = vrot.lane.b32.xlu0 %v2787, 90
      %v3217 = vpop.permute.xlu0 %3216
      %3218 = vrot.lane.b32.xlu0 %v2788, 90
      %v3219 = vpop.permute.xlu0 %3218
      %3220 = vrot.lane.b32.xlu0 %v2789, 90
      %v3221 = vpop.permute.xlu0 %3220
      %3222 = vrot.lane.b32.xlu0 %v2790, 90
      %v3223 = vpop.permute.xlu0 %3222
      %3224 = vrot.lane.b32.xlu0 %v2791, 90
      %v3225 = vpop.permute.xlu0 %3224
      %3226 = vrot.lane.b32.xlu0 %v2792, 90
      %v3227 = vpop.permute.xlu0 %3226
      %3228 = vrot.lane.b32.xlu0 %v2793, 90
      %v3229 = vpop.permute.xlu0 %3228
      %v3230 = vsel %vm653, %v3227, %v3229
      %v3231 = vsel %vm653, %v3225, %v3227
      %v3232 = vsel %vm653, %v3223, %v3225
      %v3233 = vsel %vm653, %v3221, %v3223
      %v3234 = vsel %vm653, %v3219, %v3221
      %v3235 = vsel %vm653, %v3217, %v3219
      %v3236 = vsel %vm653, %v3215, %v3217
      %v3237 = vsel %vm653, %v3229, %v3215
      %v3238 = vpack.c.bf16 %v3237, %v3237
      %v3239 = vpack.c.bf16 %v3236, %v3236
      %v3240 = vpack.c.bf16 %v3235, %v3235
      %v3241 = vpack.c.bf16 %v3234, %v3234
      %v3242 = vpack.c.bf16 %v3233, %v3233
      %v3243 = vpack.c.bf16 %v3232, %v3232
      %v3244 = vpack.c.bf16 %v3231, %v3231
      %v3245 = vpack.c.bf16 %v3230, %v3230
      %v3254 = vunpack.c.l.b16 %v3238
      %v3255 = vunpack.c.l.b16 %v3239
      %v3256 = vunpack.c.l.b16 %v3240
      %v3257 = vunpack.c.l.b16 %v3241
      %v3258 = vunpack.c.l.b16 %v3242
      %v3259 = vunpack.c.l.b16 %v3243
      %v3260 = vunpack.c.l.b16 %v3244
      %v3261 = vunpack.c.l.b16 %v3245
      %v3262 = vpack.c.b16 %v3255, %v3254
      %v3263 = vpack.c.b16 %v3257, %v3256
      %v3264 = vpack.c.b16 %v3259, %v3258
      %v3265 = vpack.c.b16 %v3261, %v3260
      %3270 = vst [vmem:[#allocation2 + $0xe0] sm:$0xff] %v3262
      %3271 = vst [vmem:[#allocation2 + $0xe8] sm:$0xff] %v3263
      %3272 = vst [vmem:[#allocation2 + $0xf0] sm:$0xff] %v3264
      %3273 = vst [vmem:[#allocation2 + $0xf8] sm:$0xff] %v3265
      %3274 = vrot.lane.b32.xlu0 %v2786, 89
      %v3275 = vpop.permute.xlu0 %3274
      %3276 = vrot.lane.b32.xlu0 %v2787, 89
      %v3277 = vpop.permute.xlu0 %3276
      %3278 = vrot.lane.b32.xlu0 %v2788, 89
      %v3279 = vpop.permute.xlu0 %3278
      %3280 = vrot.lane.b32.xlu0 %v2789, 89
      %v3281 = vpop.permute.xlu0 %3280
      %3282 = vrot.lane.b32.xlu0 %v2790, 89
      %v3283 = vpop.permute.xlu0 %3282
      %3284 = vrot.lane.b32.xlu0 %v2791, 89
      %v3285 = vpop.permute.xlu0 %3284
      %3286 = vrot.lane.b32.xlu0 %v2792, 89
      %v3287 = vpop.permute.xlu0 %3286
      %3288 = vrot.lane.b32.xlu0 %v2793, 89
      %v3289 = vpop.permute.xlu0 %3288
      %v3290 = vsel %vm714, %v3287, %v3289
      %v3291 = vsel %vm714, %v3285, %v3287
      %v3292 = vsel %vm714, %v3283, %v3285
      %v3293 = vsel %vm714, %v3281, %v3283
      %v3294 = vsel %vm714, %v3279, %v3281
      %v3295 = vsel %vm714, %v3277, %v3279
      %v3296 = vsel %vm714, %v3275, %v3277
      %v3297 = vsel %vm714, %v3289, %v3275
      %v3298 = vpack.c.bf16 %v3297, %v3297
      %v3299 = vpack.c.bf16 %v3296, %v3296
      %v3300 = vpack.c.bf16 %v3295, %v3295
      %v3301 = vpack.c.bf16 %v3294, %v3294
      %v3302 = vpack.c.bf16 %v3293, %v3293
      %v3303 = vpack.c.bf16 %v3292, %v3292
      %v3304 = vpack.c.bf16 %v3291, %v3291
      %v3305 = vpack.c.bf16 %v3290, %v3290
      %v3314 = vunpack.c.l.b16 %v3298
      %v3315 = vunpack.c.l.b16 %v3299
      %v3316 = vunpack.c.l.b16 %v3300
      %v3317 = vunpack.c.l.b16 %v3301
      %v3318 = vunpack.c.l.b16 %v3302
      %v3319 = vunpack.c.l.b16 %v3303
      %v3320 = vunpack.c.l.b16 %v3304
      %v3321 = vunpack.c.l.b16 %v3305
      %v3322 = vpack.c.b16 %v3315, %v3314
      %v3323 = vpack.c.b16 %v3317, %v3316
      %v3324 = vpack.c.b16 %v3319, %v3318
      %v3325 = vpack.c.b16 %v3321, %v3320
      %3330 = vst [vmem:[#allocation2 + $0x100] sm:$0xff] %v3322
      %3331 = vst [vmem:[#allocation2 + $0x108] sm:$0xff] %v3323
      %3332 = vst [vmem:[#allocation2 + $0x110] sm:$0xff] %v3324
      %3333 = vst [vmem:[#allocation2 + $0x118] sm:$0xff] %v3325
      %3334 = vrot.lane.b32.xlu0 %v2786, 11
      %v3335 = vpop.permute.xlu0 %3334
      %3336 = vrot.lane.b32.xlu0 %v2787, 11
      %v3337 = vpop.permute.xlu0 %3336
      %3338 = vrot.lane.b32.xlu0 %v2788, 11
      %v3339 = vpop.permute.xlu0 %3338
      %3340 = vrot.lane.b32.xlu0 %v2789, 11
      %v3341 = vpop.permute.xlu0 %3340
      %3342 = vrot.lane.b32.xlu0 %v2790, 11
      %v3343 = vpop.permute.xlu0 %3342
      %3344 = vrot.lane.b32.xlu0 %v2791, 11
      %v3345 = vpop.permute.xlu0 %3344
      %3346 = vrot.lane.b32.xlu0 %v2792, 11
      %v3347 = vpop.permute.xlu0 %3346
      %3348 = vrot.lane.b32.xlu0 %v2793, 11
      %v3349 = vpop.permute.xlu0 %3348
      %v3350 = vsel %vm775, %v3347, %v3349
      %v3351 = vsel %vm775, %v3345, %v3347
      %v3352 = vsel %vm775, %v3343, %v3345
      %v3353 = vsel %vm775, %v3341, %v3343
      %v3354 = vsel %vm775, %v3339, %v3341
      %v3355 = vsel %vm775, %v3337, %v3339
      %v3356 = vsel %vm775, %v3335, %v3337
      %v3357 = vsel %vm775, %v3349, %v3335
      %v3358 = vpack.c.bf16 %v3357, %v3357
      %v3359 = vpack.c.bf16 %v3356, %v3356
      %v3360 = vpack.c.bf16 %v3355, %v3355
      %v3361 = vpack.c.bf16 %v3354, %v3354
      %v3362 = vpack.c.bf16 %v3353, %v3353
      %v3363 = vpack.c.bf16 %v3352, %v3352
      %v3364 = vpack.c.bf16 %v3351, %v3351
      %v3365 = vpack.c.bf16 %v3350, %v3350
      %v3374 = vunpack.c.l.b16 %v3358
      %v3375 = vunpack.c.l.b16 %v3359
      %v3376 = vunpack.c.l.b16 %v3360
      %v3377 = vunpack.c.l.b16 %v3361
      %v3378 = vunpack.c.l.b16 %v3362
      %v3379 = vunpack.c.l.b16 %v3363
      %v3380 = vunpack.c.l.b16 %v3364
      %v3381 = vunpack.c.l.b16 %v3365
      %v3382 = vpack.c.b16 %v3375, %v3374
      %v3383 = vpack.c.b16 %v3377, %v3376
      %v3384 = vpack.c.b16 %v3379, %v3378
      %v3385 = vpack.c.b16 %v3381, %v3380
      %3390 = vst [vmem:[#allocation2 + $0x120] sm:$0xff] %v3382
      %3391 = vst [vmem:[#allocation2 + $0x128] sm:$0xff] %v3383
      %3392 = vst [vmem:[#allocation2 + $0x130] sm:$0xff] %v3384
      %3393 = vst [vmem:[#allocation2 + $0x138] sm:$0xff] %v3385
      %3394 = vrot.lane.b32.xlu0 %v2786, 10
      %v3395 = vpop.permute.xlu0 %3394
      %3396 = vrot.lane.b32.xlu0 %v2787, 10
      %v3397 = vpop.permute.xlu0 %3396
      %3398 = vrot.lane.b32.xlu0 %v2788, 10
      %v3399 = vpop.permute.xlu0 %3398
      %3400 = vrot.lane.b32.xlu0 %v2789, 10
      %v3401 = vpop.permute.xlu0 %3400
      %3402 = vrot.lane.b32.xlu0 %v2790, 10
      %v3403 = vpop.permute.xlu0 %3402
      %3404 = vrot.lane.b32.xlu0 %v2791, 10
      %v3405 = vpop.permute.xlu0 %3404
      %3406 = vrot.lane.b32.xlu0 %v2792, 10
      %v3407 = vpop.permute.xlu0 %3406
      %3408 = vrot.lane.b32.xlu0 %v2793, 10
      %v3409 = vpop.permute.xlu0 %3408
      %v3410 = vsel %vm836, %v3407, %v3409
      %v3411 = vsel %vm836, %v3405, %v3407
      %v3412 = vsel %vm836, %v3403, %v3405
      %v3413 = vsel %vm836, %v3401, %v3403
      %v3414 = vsel %vm836, %v3399, %v3401
      %v3415 = vsel %vm836, %v3397, %v3399
      %v3416 = vsel %vm836, %v3395, %v3397
      %v3417 = vsel %vm836, %v3409, %v3395
      %v3418 = vpack.c.bf16 %v3417, %v3417
      %v3419 = vpack.c.bf16 %v3416, %v3416
      %v3420 = vpack.c.bf16 %v3415, %v3415
      %v3421 = vpack.c.bf16 %v3414, %v3414
      %v3422 = vpack.c.bf16 %v3413, %v3413
      %v3423 = vpack.c.bf16 %v3412, %v3412
      %v3424 = vpack.c.bf16 %v3411, %v3411
      %v3425 = vpack.c.bf16 %v3410, %v3410
      %v3434 = vunpack.c.l.b16 %v3418
      %v3435 = vunpack.c.l.b16 %v3419
      %v3436 = vunpack.c.l.b16 %v3420
      %v3437 = vunpack.c.l.b16 %v3421
      %v3438 = vunpack.c.l.b16 %v3422
      %v3439 = vunpack.c.l.b16 %v3423
      %v3440 = vunpack.c.l.b16 %v3424
      %v3441 = vunpack.c.l.b16 %v3425
      %v3442 = vpack.c.b16 %v3435, %v3434
      %v3443 = vpack.c.b16 %v3437, %v3436
      %v3444 = vpack.c.b16 %v3439, %v3438
      %v3445 = vpack.c.b16 %v3441, %v3440
      %3450 = vst [vmem:[#allocation2 + $0x140] sm:$0xff] %v3442
      %3451 = vst [vmem:[#allocation2 + $0x148] sm:$0xff] %v3443
      %3452 = vst [vmem:[#allocation2 + $0x150] sm:$0xff] %v3444
      %3453 = vst [vmem:[#allocation2 + $0x158] sm:$0xff] %v3445
      %3454 = vrot.lane.b32.xlu0 %v2786, 9
      %v3455 = vpop.permute.xlu0 %3454
      %3456 = vrot.lane.b32.xlu0 %v2787, 9
      %v3457 = vpop.permute.xlu0 %3456
      %3458 = vrot.lane.b32.xlu0 %v2788, 9
      %v3459 = vpop.permute.xlu0 %3458
      %3460 = vrot.lane.b32.xlu0 %v2789, 9
      %v3461 = vpop.permute.xlu0 %3460
      %3462 = vrot.lane.b32.xlu0 %v2790, 9
      %v3463 = vpop.permute.xlu0 %3462
      %3464 = vrot.lane.b32.xlu0 %v2791, 9
      %v3465 = vpop.permute.xlu0 %3464
      %3466 = vrot.lane.b32.xlu0 %v2792, 9
      %v3467 = vpop.permute.xlu0 %3466
      %3468 = vrot.lane.b32.xlu0 %v2793, 9
      %v3469 = vpop.permute.xlu0 %3468
      %v3470 = vsel %vm897, %v3467, %v3469
      %v3471 = vsel %vm897, %v3465, %v3467
      %v3472 = vsel %vm897, %v3463, %v3465
      %v3473 = vsel %vm897, %v3461, %v3463
      %v3474 = vsel %vm897, %v3459, %v3461
      %v3475 = vsel %vm897, %v3457, %v3459
      %v3476 = vsel %vm897, %v3455, %v3457
      %v3477 = vsel %vm897, %v3469, %v3455
      %v3478 = vpack.c.bf16 %v3477, %v3477
      %v3479 = vpack.c.bf16 %v3476, %v3476
      %v3480 = vpack.c.bf16 %v3475, %v3475
      %v3481 = vpack.c.bf16 %v3474, %v3474
      %v3482 = vpack.c.bf16 %v3473, %v3473
      %v3483 = vpack.c.bf16 %v3472, %v3472
      %v3484 = vpack.c.bf16 %v3471, %v3471
      %v3485 = vpack.c.bf16 %v3470, %v3470
      %v3494 = vunpack.c.l.b16 %v3478
      %v3495 = vunpack.c.l.b16 %v3479
      %v3496 = vunpack.c.l.b16 %v3480
      %v3497 = vunpack.c.l.b16 %v3481
      %v3498 = vunpack.c.l.b16 %v3482
      %v3499 = vunpack.c.l.b16 %v3483
      %v3500 = vunpack.c.l.b16 %v3484
      %v3501 = vunpack.c.l.b16 %v3485
      %v3502 = vpack.c.b16 %v3495, %v3494
      %v3503 = vpack.c.b16 %v3497, %v3496
      %v3504 = vpack.c.b16 %v3499, %v3498
      %v3505 = vpack.c.b16 %v3501, %v3500
      %3510 = vst [vmem:[#allocation2 + $0x160] sm:$0xff] %v3502
      %3511 = vst [vmem:[#allocation2 + $0x168] sm:$0xff] %v3503
      %3512 = vst [vmem:[#allocation2 + $0x170] sm:$0xff] %v3504
      %3513 = vst [vmem:[#allocation2 + $0x178] sm:$0xff] %v3505
      %3514 = vrot.lane.b32.xlu0 %v2786, 1
      %v3515 = vpop.permute.xlu0 %3514
      %3516 = vrot.lane.b32.xlu0 %v2787, 1
      %v3517 = vpop.permute.xlu0 %3516
      %3518 = vrot.lane.b32.xlu0 %v2788, 1
      %v3519 = vpop.permute.xlu0 %3518
      %3520 = vrot.lane.b32.xlu0 %v2789, 1
      %v3521 = vpop.permute.xlu0 %3520
      %3522 = vrot.lane.b32.xlu0 %v2790, 1
      %v3523 = vpop.permute.xlu0 %3522
      %3524 = vrot.lane.b32.xlu0 %v2791, 1
      %v3525 = vpop.permute.xlu0 %3524
      %3526 = vrot.lane.b32.xlu0 %v2792, 1
      %v3527 = vpop.permute.xlu0 %3526
      %3528 = vrot.lane.b32.xlu0 %v2793, 1
      %v3529 = vpop.permute.xlu0 %3528
      %v3530 = vsel %vm958, %v3527, %v3529
      %v3531 = vsel %vm958, %v3525, %v3527
      %v3532 = vsel %vm958, %v3523, %v3525
      %v3533 = vsel %vm958, %v3521, %v3523
      %v3534 = vsel %vm958, %v3519, %v3521
      %v3535 = vsel %vm958, %v3517, %v3519
      %v3536 = vsel %vm958, %v3515, %v3517
      %v3537 = vsel %vm958, %v3529, %v3515
      %v3538 = vpack.c.bf16 %v3537, %v3537
      %v3539 = vpack.c.bf16 %v3536, %v3536
      %v3540 = vpack.c.bf16 %v3535, %v3535
      %v3541 = vpack.c.bf16 %v3534, %v3534
      %v3542 = vpack.c.bf16 %v3533, %v3533
      %v3543 = vpack.c.bf16 %v3532, %v3532
      %v3544 = vpack.c.bf16 %v3531, %v3531
      %v3545 = vpack.c.bf16 %v3530, %v3530
      %v3554 = vunpack.c.l.b16 %v3538
      %v3555 = vunpack.c.l.b16 %v3539
      %v3556 = vunpack.c.l.b16 %v3540
      %v3557 = vunpack.c.l.b16 %v3541
      %v3558 = vunpack.c.l.b16 %v3542
      %v3559 = vunpack.c.l.b16 %v3543
      %v3560 = vunpack.c.l.b16 %v3544
      %v3561 = vunpack.c.l.b16 %v3545
      %v3562 = vpack.c.b16 %v3555, %v3554
      %v3563 = vpack.c.b16 %v3557, %v3556
      %v3564 = vpack.c.b16 %v3559, %v3558
      %v3565 = vpack.c.b16 %v3561, %v3560
      %3570 = vst [vmem:[#allocation2 + $0x180] sm:$0xff] %v3562
      %3571 = vst [vmem:[#allocation2 + $0x188] sm:$0xff] %v3563
      %3572 = vst [vmem:[#allocation2 + $0x190] sm:$0xff] %v3564
      %3573 = vst [vmem:[#allocation2 + $0x198] sm:$0xff] %v3565
      %v3574 = vpack.c.bf16 %v2786, %v2786
      %v3575 = vpack.c.bf16 %v2787, %v2787
      %v3576 = vpack.c.bf16 %v2788, %v2788
      %v3577 = vpack.c.bf16 %v2789, %v2789
      %v3578 = vpack.c.bf16 %v2790, %v2790
      %v3579 = vpack.c.bf16 %v2791, %v2791
      %v3580 = vpack.c.bf16 %v2792, %v2792
      %v3581 = vpack.c.bf16 %v2793, %v2793
      %v3590 = vunpack.c.l.b16 %v3574
      %v3591 = vunpack.c.l.b16 %v3575
      %v3592 = vunpack.c.l.b16 %v3576
      %v3593 = vunpack.c.l.b16 %v3577
      %v3594 = vunpack.c.l.b16 %v3578
      %v3595 = vunpack.c.l.b16 %v3579
      %v3596 = vunpack.c.l.b16 %v3580
      %v3597 = vunpack.c.l.b16 %v3581
      %v3598 = vpack.c.b16 %v3591, %v3590
      %v3599 = vpack.c.b16 %v3593, %v3592
      %v3600 = vpack.c.b16 %v3595, %v3594
      %v3601 = vpack.c.b16 %v3597, %v3596
      %3606 = vst [vmem:[#allocation2 + $0x1a0] sm:$0xff] %v3598
      %3607 = vst [vmem:[#allocation2 + $0x1a8] sm:$0xff] %v3599
      %3608 = vst [vmem:[#allocation2 + $0x1b0] sm:$0xff] %v3600
      %3609 = vst [vmem:[#allocation2 + $0x1b8] sm:$0xff] %v3601
      %3610 = vrot.lane.b32.xlu0 %v2786, 127
      %v3611 = vpop.permute.xlu0 %3610
      %3612 = vrot.lane.b32.xlu0 %v2787, 127
      %v3613 = vpop.permute.xlu0 %3612
      %3614 = vrot.lane.b32.xlu0 %v2788, 127
      %v3615 = vpop.permute.xlu0 %3614
      %3616 = vrot.lane.b32.xlu0 %v2789, 127
      %v3617 = vpop.permute.xlu0 %3616
      %3618 = vrot.lane.b32.xlu0 %v2790, 127
      %v3619 = vpop.permute.xlu0 %3618
      %3620 = vrot.lane.b32.xlu0 %v2791, 127
      %v3621 = vpop.permute.xlu0 %3620
      %3622 = vrot.lane.b32.xlu0 %v2792, 127
      %v3623 = vpop.permute.xlu0 %3622
      %3624 = vrot.lane.b32.xlu0 %v2793, 127
      %v3625 = vpop.permute.xlu0 %3624
      %v3626 = vsel %vm1055, %v3623, %v3625
      %v3627 = vsel %vm1055, %v3621, %v3623
      %v3628 = vsel %vm1055, %v3619, %v3621
      %v3629 = vsel %vm1055, %v3617, %v3619
      %v3630 = vsel %vm1055, %v3615, %v3617
      %v3631 = vsel %vm1055, %v3613, %v3615
      %v3632 = vsel %vm1055, %v3611, %v3613
      %v3633 = vsel %vm1055, %v3625, %v3611
      %v3634 = vpack.c.bf16 %v3632, %v3632
      %v3635 = vpack.c.bf16 %v3631, %v3631
      %v3636 = vpack.c.bf16 %v3630, %v3630
      %v3637 = vpack.c.bf16 %v3629, %v3629
      %v3638 = vpack.c.bf16 %v3628, %v3628
      %v3639 = vpack.c.bf16 %v3627, %v3627
      %v3640 = vpack.c.bf16 %v3626, %v3626
      %v3641 = vpack.c.bf16 %v3633, %v3633
      %v3650 = vunpack.c.l.b16 %v3634
      %v3651 = vunpack.c.l.b16 %v3635
      %v3652 = vunpack.c.l.b16 %v3636
      %v3653 = vunpack.c.l.b16 %v3637
      %v3654 = vunpack.c.l.b16 %v3638
      %v3655 = vunpack.c.l.b16 %v3639
      %v3656 = vunpack.c.l.b16 %v3640
      %v3657 = vunpack.c.l.b16 %v3641
      %v3658 = vpack.c.b16 %v3651, %v3650
      %v3659 = vpack.c.b16 %v3653, %v3652
      %v3660 = vpack.c.b16 %v3655, %v3654
      %v3661 = vpack.c.b16 %v3657, %v3656
      %3666 = vst [vmem:[#allocation2 + $0x1c0] sm:$0xff] %v3658
      %3667 = vst [vmem:[#allocation2 + $0x1c8] sm:$0xff] %v3659
      %3668 = vst [vmem:[#allocation2 + $0x1d0] sm:$0xff] %v3660
      %3669 = vst [vmem:[#allocation2 + $0x1d8] sm:$0xff] %v3661
      %3670 = vrot.lane.b32.xlu0 %v2786, 119
      %v3671 = vpop.permute.xlu0 %3670
      %3672 = vrot.lane.b32.xlu0 %v2787, 119
      %v3673 = vpop.permute.xlu0 %3672
      %3674 = vrot.lane.b32.xlu0 %v2788, 119
      %v3675 = vpop.permute.xlu0 %3674
      %3676 = vrot.lane.b32.xlu0 %v2789, 119
      %v3677 = vpop.permute.xlu0 %3676
      %3678 = vrot.lane.b32.xlu0 %v2790, 119
      %v3679 = vpop.permute.xlu0 %3678
      %3680 = vrot.lane.b32.xlu0 %v2791, 119
      %v3681 = vpop.permute.xlu0 %3680
      %3682 = vrot.lane.b32.xlu0 %v2792, 119
      %v3683 = vpop.permute.xlu0 %3682
      %3684 = vrot.lane.b32.xlu0 %v2793, 119
      %v3685 = vpop.permute.xlu0 %3684
      %v3686 = vsel %vm1116, %v3683, %v3685
      %v3687 = vsel %vm1116, %v3681, %v3683
      %v3688 = vsel %vm1116, %v3679, %v3681
      %v3689 = vsel %vm1116, %v3677, %v3679
      %v3690 = vsel %vm1116, %v3675, %v3677
      %v3691 = vsel %vm1116, %v3673, %v3675
      %v3692 = vsel %vm1116, %v3671, %v3673
      %v3693 = vsel %vm1116, %v3685, %v3671
      %v3694 = vpack.c.bf16 %v3692, %v3692
      %v3695 = vpack.c.bf16 %v3691, %v3691
      %v3696 = vpack.c.bf16 %v3690, %v3690
      %v3697 = vpack.c.bf16 %v3689, %v3689
      %v3698 = vpack.c.bf16 %v3688, %v3688
      %v3699 = vpack.c.bf16 %v3687, %v3687
      %v3700 = vpack.c.bf16 %v3686, %v3686
      %v3701 = vpack.c.bf16 %v3693, %v3693
      %v3710 = vunpack.c.l.b16 %v3694
      %v3711 = vunpack.c.l.b16 %v3695
      %v3712 = vunpack.c.l.b16 %v3696
      %v3713 = vunpack.c.l.b16 %v3697
      %v3714 = vunpack.c.l.b16 %v3698
      %v3715 = vunpack.c.l.b16 %v3699
      %v3716 = vunpack.c.l.b16 %v3700
      %v3717 = vunpack.c.l.b16 %v3701
      %v3718 = vpack.c.b16 %v3711, %v3710
      %v3719 = vpack.c.b16 %v3713, %v3712
      %v3720 = vpack.c.b16 %v3715, %v3714
      %v3721 = vpack.c.b16 %v3717, %v3716
      %3726 = vst [vmem:[#allocation2 + $0x1e0] sm:$0xff] %v3718
      %3727 = vst [vmem:[#allocation2 + $0x1e8] sm:$0xff] %v3719
      %3728 = vst [vmem:[#allocation2 + $0x1f0] sm:$0xff] %v3720
      %3729 = vst [vmem:[#allocation2 + $0x1f8] sm:$0xff] %v3721
      %3730 = vrot.lane.b32.xlu0 %v2786, 118
      %v3731 = vpop.permute.xlu0 %3730
      %3732 = vrot.lane.b32.xlu0 %v2787, 118
      %v3733 = vpop.permute.xlu0 %3732
      %3734 = vrot.lane.b32.xlu0 %v2788, 118
      %v3735 = vpop.permute.xlu0 %3734
      %3736 = vrot.lane.b32.xlu0 %v2789, 118
      %v3737 = vpop.permute.xlu0 %3736
      %3738 = vrot.lane.b32.xlu0 %v2790, 118
      %v3739 = vpop.permute.xlu0 %3738
      %3740 = vrot.lane.b32.xlu0 %v2791, 118
      %v3741 = vpop.permute.xlu0 %3740
      %3742 = vrot.lane.b32.xlu0 %v2792, 118
      %v3743 = vpop.permute.xlu0 %3742
      %3744 = vrot.lane.b32.xlu0 %v2793, 118
      %v3745 = vpop.permute.xlu0 %3744
      %v3746 = vsel %vm1177, %v3743, %v3745
      %v3747 = vsel %vm1177, %v3741, %v3743
      %v3748 = vsel %vm1177, %v3739, %v3741
      %v3749 = vsel %vm1177, %v3737, %v3739
      %v3750 = vsel %vm1177, %v3735, %v3737
      %v3751 = vsel %vm1177, %v3733, %v3735
      %v3752 = vsel %vm1177, %v3731, %v3733
      %v3753 = vsel %vm1177, %v3745, %v3731
      %v3754 = vpack.c.bf16 %v3752, %v3752
      %v3755 = vpack.c.bf16 %v3751, %v3751
      %v3756 = vpack.c.bf16 %v3750, %v3750
      %v3757 = vpack.c.bf16 %v3749, %v3749
      %v3758 = vpack.c.bf16 %v3748, %v3748
      %v3759 = vpack.c.bf16 %v3747, %v3747
      %v3760 = vpack.c.bf16 %v3746, %v3746
      %v3761 = vpack.c.bf16 %v3753, %v3753
      %v3770 = vunpack.c.l.b16 %v3754
      %v3771 = vunpack.c.l.b16 %v3755
      %v3772 = vunpack.c.l.b16 %v3756
      %v3773 = vunpack.c.l.b16 %v3757
      %v3774 = vunpack.c.l.b16 %v3758
      %v3775 = vunpack.c.l.b16 %v3759
      %v3776 = vunpack.c.l.b16 %v3760
      %v3777 = vunpack.c.l.b16 %v3761
      %v3778 = vpack.c.b16 %v3771, %v3770
      %v3779 = vpack.c.b16 %v3773, %v3772
      %v3780 = vpack.c.b16 %v3775, %v3774
      %v3781 = vpack.c.b16 %v3777, %v3776
      %3786 = vst [vmem:[#allocation2 + $0x200] sm:$0xff] %v3778
      %3787 = vst [vmem:[#allocation2 + $0x208] sm:$0xff] %v3779
      %3788 = vst [vmem:[#allocation2 + $0x210] sm:$0xff] %v3780
      %3789 = vst [vmem:[#allocation2 + $0x218] sm:$0xff] %v3781
      %3790 = vrot.lane.b32.xlu0 %v2786, 117
      %v3791 = vpop.permute.xlu0 %3790
      %3792 = vrot.lane.b32.xlu0 %v2787, 117
      %v3793 = vpop.permute.xlu0 %3792
      %3794 = vrot.lane.b32.xlu0 %v2788, 117
      %v3795 = vpop.permute.xlu0 %3794
      %3796 = vrot.lane.b32.xlu0 %v2789, 117
      %v3797 = vpop.permute.xlu0 %3796
      %3798 = vrot.lane.b32.xlu0 %v2790, 117
      %v3799 = vpop.permute.xlu0 %3798
      %3800 = vrot.lane.b32.xlu0 %v2791, 117
      %v3801 = vpop.permute.xlu0 %3800
      %3802 = vrot.lane.b32.xlu0 %v2792, 117
      %v3803 = vpop.permute.xlu0 %3802
      %3804 = vrot.lane.b32.xlu0 %v2793, 117
      %v3805 = vpop.permute.xlu0 %3804
      %v3806 = vsel %vm1238, %v3803, %v3805
      %v3807 = vsel %vm1238, %v3801, %v3803
      %v3808 = vsel %vm1238, %v3799, %v3801
      %v3809 = vsel %vm1238, %v3797, %v3799
      %v3810 = vsel %vm1238, %v3795, %v3797
      %v3811 = vsel %vm1238, %v3793, %v3795
      %v3812 = vsel %vm1238, %v3791, %v3793
      %v3813 = vsel %vm1238, %v3805, %v3791
      %v3814 = vpack.c.bf16 %v3812, %v3812
      %v3815 = vpack.c.bf16 %v3811, %v3811
      %v3816 = vpack.c.bf16 %v3810, %v3810
      %v3817 = vpack.c.bf16 %v3809, %v3809
      %v3818 = vpack.c.bf16 %v3808, %v3808
      %v3819 = vpack.c.bf16 %v3807, %v3807
      %v3820 = vpack.c.bf16 %v3806, %v3806
      %v3821 = vpack.c.bf16 %v3813, %v3813
      %v3830 = vunpack.c.l.b16 %v3814
      %v3831 = vunpack.c.l.b16 %v3815
      %v3832 = vunpack.c.l.b16 %v3816
      %v3833 = vunpack.c.l.b16 %v3817
      %v3834 = vunpack.c.l.b16 %v3818
      %v3835 = vunpack.c.l.b16 %v3819
      %v3836 = vunpack.c.l.b16 %v3820
      %v3837 = vunpack.c.l.b16 %v3821
      %v3838 = vpack.c.b16 %v3831, %v3830
      %v3839 = vpack.c.b16 %v3833, %v3832
      %v3840 = vpack.c.b16 %v3835, %v3834
      %v3841 = vpack.c.b16 %v3837, %v3836
      %3846 = vst [vmem:[#allocation2 + $0x220] sm:$0xff] %v3838
      %3847 = vst [vmem:[#allocation2 + $0x228] sm:$0xff] %v3839
      %3848 = vst [vmem:[#allocation2 + $0x230] sm:$0xff] %v3840
      %3849 = vst [vmem:[#allocation2 + $0x238] sm:$0xff] %v3841
      %3850 = vrot.lane.b32.xlu0 %v2786, 39
      %v3851 = vpop.permute.xlu0 %3850
      %3852 = vrot.lane.b32.xlu0 %v2787, 39
      %v3853 = vpop.permute.xlu0 %3852
      %3854 = vrot.lane.b32.xlu0 %v2788, 39
      %v3855 = vpop.permute.xlu0 %3854
      %3856 = vrot.lane.b32.xlu0 %v2789, 39
      %v3857 = vpop.permute.xlu0 %3856
      %3858 = vrot.lane.b32.xlu0 %v2790, 39
      %v3859 = vpop.permute.xlu0 %3858
      %3860 = vrot.lane.b32.xlu0 %v2791, 39
      %v3861 = vpop.permute.xlu0 %3860
      %3862 = vrot.lane.b32.xlu0 %v2792, 39
      %v3863 = vpop.permute.xlu0 %3862
      %3864 = vrot.lane.b32.xlu0 %v2793, 39
      %v3865 = vpop.permute.xlu0 %3864
      %v3866 = vsel %vm1299, %v3863, %v3865
      %v3867 = vsel %vm1299, %v3861, %v3863
      %v3868 = vsel %vm1299, %v3859, %v3861
      %v3869 = vsel %vm1299, %v3857, %v3859
      %v3870 = vsel %vm1299, %v3855, %v3857
      %v3871 = vsel %vm1299, %v3853, %v3855
      %v3872 = vsel %vm1299, %v3851, %v3853
      %v3873 = vsel %vm1299, %v3865, %v3851
      %v3874 = vpack.c.bf16 %v3872, %v3872
      %v3875 = vpack.c.bf16 %v3871, %v3871
      %v3876 = vpack.c.bf16 %v3870, %v3870
      %v3877 = vpack.c.bf16 %v3869, %v3869
      %v3878 = vpack.c.bf16 %v3868, %v3868
      %v3879 = vpack.c.bf16 %v3867, %v3867
      %v3880 = vpack.c.bf16 %v3866, %v3866
      %v3881 = vpack.c.bf16 %v3873, %v3873
      %v3890 = vunpack.c.l.b16 %v3874
      %v3891 = vunpack.c.l.b16 %v3875
      %v3892 = vunpack.c.l.b16 %v3876
      %v3893 = vunpack.c.l.b16 %v3877
      %v3894 = vunpack.c.l.b16 %v3878
      %v3895 = vunpack.c.l.b16 %v3879
      %v3896 = vunpack.c.l.b16 %v3880
      %v3897 = vunpack.c.l.b16 %v3881
      %v3898 = vpack.c.b16 %v3891, %v3890
      %v3899 = vpack.c.b16 %v3893, %v3892
      %v3900 = vpack.c.b16 %v3895, %v3894
      %v3901 = vpack.c.b16 %v3897, %v3896
      %3906 = vst [vmem:[#allocation2 + $0x240] sm:$0xff] %v3898
      %3907 = vst [vmem:[#allocation2 + $0x248] sm:$0xff] %v3899
      %3908 = vst [vmem:[#allocation2 + $0x250] sm:$0xff] %v3900
      %3909 = vst [vmem:[#allocation2 + $0x258] sm:$0xff] %v3901
      %3910 = vrot.lane.b32.xlu0 %v2786, 38
      %v3911 = vpop.permute.xlu0 %3910
      %3912 = vrot.lane.b32.xlu0 %v2787, 38
      %v3913 = vpop.permute.xlu0 %3912
      %3914 = vrot.lane.b32.xlu0 %v2788, 38
      %v3915 = vpop.permute.xlu0 %3914
      %3916 = vrot.lane.b32.xlu0 %v2789, 38
      %v3917 = vpop.permute.xlu0 %3916
      %3918 = vrot.lane.b32.xlu0 %v2790, 38
      %v3919 = vpop.permute.xlu0 %3918
      %3920 = vrot.lane.b32.xlu0 %v2791, 38
      %v3921 = vpop.permute.xlu0 %3920
      %3922 = vrot.lane.b32.xlu0 %v2792, 38
      %v3923 = vpop.permute.xlu0 %3922
      %3924 = vrot.lane.b32.xlu0 %v2793, 38
      %v3925 = vpop.permute.xlu0 %3924
      %v3926 = vsel %vm1360, %v3923, %v3925
      %v3927 = vsel %vm1360, %v3921, %v3923
      %v3928 = vsel %vm1360, %v3919, %v3921
      %v3929 = vsel %vm1360, %v3917, %v3919
      %v3930 = vsel %vm1360, %v3915, %v3917
      %v3931 = vsel %vm1360, %v3913, %v3915
      %v3932 = vsel %vm1360, %v3911, %v3913
      %v3933 = vsel %vm1360, %v3925, %v3911
      %v3934 = vpack.c.bf16 %v3932, %v3932
      %v3935 = vpack.c.bf16 %v3931, %v3931
      %v3936 = vpack.c.bf16 %v3930, %v3930
      %v3937 = vpack.c.bf16 %v3929, %v3929
      %v3938 = vpack.c.bf16 %v3928, %v3928
      %v3939 = vpack.c.bf16 %v3927, %v3927
      %v3940 = vpack.c.bf16 %v3926, %v3926
      %v3941 = vpack.c.bf16 %v3933, %v3933
      %v3950 = vunpack.c.l.b16 %v3934
      %v3951 = vunpack.c.l.b16 %v3935
      %v3952 = vunpack.c.l.b16 %v3936
      %v3953 = vunpack.c.l.b16 %v3937
      %v3954 = vunpack.c.l.b16 %v3938
      %v3955 = vunpack.c.l.b16 %v3939
      %v3956 = vunpack.c.l.b16 %v3940
      %v3957 = vunpack.c.l.b16 %v3941
      %v3958 = vpack.c.b16 %v3951, %v3950
      %v3959 = vpack.c.b16 %v3953, %v3952
      %v3960 = vpack.c.b16 %v3955, %v3954
      %v3961 = vpack.c.b16 %v3957, %v3956
      %3966 = vst [vmem:[#allocation2 + $0x260] sm:$0xff] %v3958
      %3967 = vst [vmem:[#allocation2 + $0x268] sm:$0xff] %v3959
      %3968 = vst [vmem:[#allocation2 + $0x270] sm:$0xff] %v3960
      %3969 = vst [vmem:[#allocation2 + $0x278] sm:$0xff] %v3961
      %3970 = vrot.lane.b32.xlu0 %v2786, 37
      %v3971 = vpop.permute.xlu0 %3970
      %3972 = vrot.lane.b32.xlu0 %v2787, 37
      %v3973 = vpop.permute.xlu0 %3972
      %3974 = vrot.lane.b32.xlu0 %v2788, 37
      %v3975 = vpop.permute.xlu0 %3974
      %3976 = vrot.lane.b32.xlu0 %v2789, 37
      %v3977 = vpop.permute.xlu0 %3976
      %3978 = vrot.lane.b32.xlu0 %v2790, 37
      %v3979 = vpop.permute.xlu0 %3978
      %3980 = vrot.lane.b32.xlu0 %v2791, 37
      %v3981 = vpop.permute.xlu0 %3980
      %3982 = vrot.lane.b32.xlu0 %v2792, 37
      %v3983 = vpop.permute.xlu0 %3982
      %3984 = vrot.lane.b32.xlu0 %v2793, 37
      %v3985 = vpop.permute.xlu0 %3984
      %v3986 = vsel %vm1421, %v3983, %v3985
      %v3987 = vsel %vm1421, %v3981, %v3983
      %v3988 = vsel %vm1421, %v3979, %v3981
      %v3989 = vsel %vm1421, %v3977, %v3979
      %v3990 = vsel %vm1421, %v3975, %v3977
      %v3991 = vsel %vm1421, %v3973, %v3975
      %v3992 = vsel %vm1421, %v3971, %v3973
      %v3993 = vsel %vm1421, %v3985, %v3971
      %v3994 = vpack.c.bf16 %v3992, %v3992
      %v3995 = vpack.c.bf16 %v3991, %v3991
      %v3996 = vpack.c.bf16 %v3990, %v3990
      %v3997 = vpack.c.bf16 %v3989, %v3989
      %v3998 = vpack.c.bf16 %v3988, %v3988
      %v3999 = vpack.c.bf16 %v3987, %v3987
      %v4000 = vpack.c.bf16 %v3986, %v3986
      %v4001 = vpack.c.bf16 %v3993, %v3993
      %v4010 = vunpack.c.l.b16 %v3994
      %v4011 = vunpack.c.l.b16 %v3995
      %v4012 = vunpack.c.l.b16 %v3996
      %v4013 = vunpack.c.l.b16 %v3997
      %v4014 = vunpack.c.l.b16 %v3998
      %v4015 = vunpack.c.l.b16 %v3999
      %v4016 = vunpack.c.l.b16 %v4000
      %v4017 = vunpack.c.l.b16 %v4001
      %v4018 = vpack.c.b16 %v4011, %v4010
      %v4019 = vpack.c.b16 %v4013, %v4012
      %v4020 = vpack.c.b16 %v4015, %v4014
      %v4021 = vpack.c.b16 %v4017, %v4016
      %4026 = vst [vmem:[#allocation2 + $0x280] sm:$0xff] %v4018
      %4027 = vst [vmem:[#allocation2 + $0x288] sm:$0xff] %v4019
      %4028 = vst [vmem:[#allocation2 + $0x290] sm:$0xff] %v4020
      %4029 = vst [vmem:[#allocation2 + $0x298] sm:$0xff] %v4021
      %4030 = vrot.lane.b32.xlu0 %v2786, 29
      %v4031 = vpop.permute.xlu0 %4030
      %4032 = vrot.lane.b32.xlu0 %v2787, 29
      %v4033 = vpop.permute.xlu0 %4032
      %4034 = vrot.lane.b32.xlu0 %v2788, 29
      %v4035 = vpop.permute.xlu0 %4034
      %4036 = vrot.lane.b32.xlu0 %v2789, 29
      %v4037 = vpop.permute.xlu0 %4036
      %4038 = vrot.lane.b32.xlu0 %v2790, 29
      %v4039 = vpop.permute.xlu0 %4038
      %4040 = vrot.lane.b32.xlu0 %v2791, 29
      %v4041 = vpop.permute.xlu0 %4040
      %4042 = vrot.lane.b32.xlu0 %v2792, 29
      %v4043 = vpop.permute.xlu0 %4042
      %4044 = vrot.lane.b32.xlu0 %v2793, 29
      %v4045 = vpop.permute.xlu0 %4044
      %v4046 = vsel %vm1482, %v4043, %v4045
      %v4047 = vsel %vm1482, %v4041, %v4043
      %v4048 = vsel %vm1482, %v4039, %v4041
      %v4049 = vsel %vm1482, %v4037, %v4039
      %v4050 = vsel %vm1482, %v4035, %v4037
      %v4051 = vsel %vm1482, %v4033, %v4035
      %v4052 = vsel %vm1482, %v4031, %v4033
      %v4053 = vsel %vm1482, %v4045, %v4031
      %v4054 = vpack.c.bf16 %v4052, %v4052
      %v4055 = vpack.c.bf16 %v4051, %v4051
      %v4056 = vpack.c.bf16 %v4050, %v4050
      %v4057 = vpack.c.bf16 %v4049, %v4049
      %v4058 = vpack.c.bf16 %v4048, %v4048
      %v4059 = vpack.c.bf16 %v4047, %v4047
      %v4060 = vpack.c.bf16 %v4046, %v4046
      %v4061 = vpack.c.bf16 %v4053, %v4053
      %v4070 = vunpack.c.l.b16 %v4054
      %v4071 = vunpack.c.l.b16 %v4055
      %v4072 = vunpack.c.l.b16 %v4056
      %v4073 = vunpack.c.l.b16 %v4057
      %v4074 = vunpack.c.l.b16 %v4058
      %v4075 = vunpack.c.l.b16 %v4059
      %v4076 = vunpack.c.l.b16 %v4060
      %v4077 = vunpack.c.l.b16 %v4061
      %v4078 = vpack.c.b16 %v4071, %v4070
      %v4079 = vpack.c.b16 %v4073, %v4072
      %v4080 = vpack.c.b16 %v4075, %v4074
      %v4081 = vpack.c.b16 %v4077, %v4076
      %4086 = vst [vmem:[#allocation2 + $0x2a0] sm:$0xff] %v4078
      %4087 = vst [vmem:[#allocation2 + $0x2a8] sm:$0xff] %v4079
      %4088 = vst [vmem:[#allocation2 + $0x2b0] sm:$0xff] %v4080
      %4089 = vst [vmem:[#allocation2 + $0x2b8] sm:$0xff] %v4081
      %4090 = vrot.lane.b32.xlu0 %v2786, 28
      %v4091 = vpop.permute.xlu0 %4090
      %4092 = vrot.lane.b32.xlu0 %v2787, 28
      %v4093 = vpop.permute.xlu0 %4092
      %4094 = vrot.lane.b32.xlu0 %v2788, 28
      %v4095 = vpop.permute.xlu0 %4094
      %4096 = vrot.lane.b32.xlu0 %v2789, 28
      %v4097 = vpop.permute.xlu0 %4096
      %4098 = vrot.lane.b32.xlu0 %v2790, 28
      %v4099 = vpop.permute.xlu0 %4098
      %4100 = vrot.lane.b32.xlu0 %v2791, 28
      %v4101 = vpop.permute.xlu0 %4100
      %4102 = vrot.lane.b32.xlu0 %v2792, 28
      %v4103 = vpop.permute.xlu0 %4102
      %4104 = vrot.lane.b32.xlu0 %v2793, 28
      %v4105 = vpop.permute.xlu0 %4104
      %v4106 = vsel %vm1543, %v4103, %v4105
      %v4107 = vsel %vm1543, %v4101, %v4103
      %v4108 = vsel %vm1543, %v4099, %v4101
      %v4109 = vsel %vm1543, %v4097, %v4099
      %v4110 = vsel %vm1543, %v4095, %v4097
      %v4111 = vsel %vm1543, %v4093, %v4095
      %v4112 = vsel %vm1543, %v4091, %v4093
      %v4113 = vsel %vm1543, %v4105, %v4091
      %v4114 = vpack.c.bf16 %v4112, %v4112
      %v4115 = vpack.c.bf16 %v4111, %v4111
      %v4116 = vpack.c.bf16 %v4110, %v4110
      %v4117 = vpack.c.bf16 %v4109, %v4109
      %v4118 = vpack.c.bf16 %v4108, %v4108
      %v4119 = vpack.c.bf16 %v4107, %v4107
      %v4120 = vpack.c.bf16 %v4106, %v4106
      %v4121 = vpack.c.bf16 %v4113, %v4113
      %v4130 = vunpack.c.l.b16 %v4114
      %v4131 = vunpack.c.l.b16 %v4115
      %v4132 = vunpack.c.l.b16 %v4116
      %v4133 = vunpack.c.l.b16 %v4117
      %v4134 = vunpack.c.l.b16 %v4118
      %v4135 = vunpack.c.l.b16 %v4119
      %v4136 = vunpack.c.l.b16 %v4120
      %v4137 = vunpack.c.l.b16 %v4121
      %v4138 = vpack.c.b16 %v4131, %v4130
      %v4139 = vpack.c.b16 %v4133, %v4132
      %v4140 = vpack.c.b16 %v4135, %v4134
      %v4141 = vpack.c.b16 %v4137, %v4136
      %4146 = vst [vmem:[#allocation2 + $0x2c0] sm:$0xff] %v4138
      %4147 = vst [vmem:[#allocation2 + $0x2c8] sm:$0xff] %v4139
      %4148 = vst [vmem:[#allocation2 + $0x2d0] sm:$0xff] %v4140
      %4149 = vst [vmem:[#allocation2 + $0x2d8] sm:$0xff] %v4141
      %4150 = vrot.lane.b32.xlu0 %v2786, 27
      %v4151 = vpop.permute.xlu0 %4150
      %4152 = vrot.lane.b32.xlu0 %v2787, 27
      %v4153 = vpop.permute.xlu0 %4152
      %4154 = vrot.lane.b32.xlu0 %v2788, 27
      %v4155 = vpop.permute.xlu0 %4154
      %4156 = vrot.lane.b32.xlu0 %v2789, 27
      %v4157 = vpop.permute.xlu0 %4156
      %4158 = vrot.lane.b32.xlu0 %v2790, 27
      %v4159 = vpop.permute.xlu0 %4158
      %4160 = vrot.lane.b32.xlu0 %v2791, 27
      %v4161 = vpop.permute.xlu0 %4160
      %4162 = vrot.lane.b32.xlu0 %v2792, 27
      %v4163 = vpop.permute.xlu0 %4162
      %4164 = vrot.lane.b32.xlu0 %v2793, 27
      %v4165 = vpop.permute.xlu0 %4164
      %v4166 = vsel %vm1604, %v4163, %v4165
      %v4167 = vsel %vm1604, %v4161, %v4163
      %v4168 = vsel %vm1604, %v4159, %v4161
      %v4169 = vsel %vm1604, %v4157, %v4159
      %v4170 = vsel %vm1604, %v4155, %v4157
      %v4171 = vsel %vm1604, %v4153, %v4155
      %v4172 = vsel %vm1604, %v4151, %v4153
      %v4173 = vsel %vm1604, %v4165, %v4151
      %v4174 = vpack.c.bf16 %v4172, %v4172
      %v4175 = vpack.c.bf16 %v4171, %v4171
      %v4176 = vpack.c.bf16 %v4170, %v4170
      %v4177 = vpack.c.bf16 %v4169, %v4169
      %v4178 = vpack.c.bf16 %v4168, %v4168
      %v4179 = vpack.c.bf16 %v4167, %v4167
      %v4180 = vpack.c.bf16 %v4166, %v4166
      %v4181 = vpack.c.bf16 %v4173, %v4173
      %v4190 = vunpack.c.l.b16 %v4174
      %v4191 = vunpack.c.l.b16 %v4175
      %v4192 = vunpack.c.l.b16 %v4176
      %v4193 = vunpack.c.l.b16 %v4177
      %v4194 = vunpack.c.l.b16 %v4178
      %v4195 = vunpack.c.l.b16 %v4179
      %v4196 = vunpack.c.l.b16 %v4180
      %v4197 = vunpack.c.l.b16 %v4181
      %v4198 = vpack.c.b16 %v4191, %v4190
      %v4199 = vpack.c.b16 %v4193, %v4192
      %v4200 = vpack.c.b16 %v4195, %v4194
      %v4201 = vpack.c.b16 %v4197, %v4196
      %4206 = vst [vmem:[#allocation2 + $0x2e0] sm:$0xff] %v4198
      %4207 = vst [vmem:[#allocation2 + $0x2e8] sm:$0xff] %v4199
      %4208 = vst [vmem:[#allocation2 + $0x2f0] sm:$0xff] %v4200
      %4209 = vst [vmem:[#allocation2 + $0x2f8] sm:$0xff] %v4201
      %4210 = vrot.lane.b32.xlu0 %v2786, 19
      %v4211 = vpop.permute.xlu0 %4210
      %4212 = vrot.lane.b32.xlu0 %v2787, 19
      %v4213 = vpop.permute.xlu0 %4212
      %4214 = vrot.lane.b32.xlu0 %v2788, 19
      %v4215 = vpop.permute.xlu0 %4214
      %4216 = vrot.lane.b32.xlu0 %v2789, 19
      %v4217 = vpop.permute.xlu0 %4216
      %4218 = vrot.lane.b32.xlu0 %v2790, 19
      %v4219 = vpop.permute.xlu0 %4218
      %4220 = vrot.lane.b32.xlu0 %v2791, 19
      %v4221 = vpop.permute.xlu0 %4220
      %4222 = vrot.lane.b32.xlu0 %v2792, 19
      %v4223 = vpop.permute.xlu0 %4222
      %4224 = vrot.lane.b32.xlu0 %v2793, 19
      %v4225 = vpop.permute.xlu0 %4224
      %v4226 = vsel %vm1665, %v4223, %v4225
      %v4227 = vsel %vm1665, %v4221, %v4223
      %v4228 = vsel %vm1665, %v4219, %v4221
      %v4229 = vsel %vm1665, %v4217, %v4219
      %v4230 = vsel %vm1665, %v4215, %v4217
      %v4231 = vsel %vm1665, %v4213, %v4215
      %v4232 = vsel %vm1665, %v4211, %v4213
      %v4233 = vsel %vm1665, %v4225, %v4211
      %v4234 = vpack.c.bf16 %v4232, %v4232
      %v4235 = vpack.c.bf16 %v4231, %v4231
      %v4236 = vpack.c.bf16 %v4230, %v4230
      %v4237 = vpack.c.bf16 %v4229, %v4229
      %v4238 = vpack.c.bf16 %v4228, %v4228
      %v4239 = vpack.c.bf16 %v4227, %v4227
      %v4240 = vpack.c.bf16 %v4226, %v4226
      %v4241 = vpack.c.bf16 %v4233, %v4233
      %v4250 = vunpack.c.l.b16 %v4234
      %v4251 = vunpack.c.l.b16 %v4235
      %v4252 = vunpack.c.l.b16 %v4236
      %v4253 = vunpack.c.l.b16 %v4237
      %v4254 = vunpack.c.l.b16 %v4238
      %v4255 = vunpack.c.l.b16 %v4239
      %v4256 = vunpack.c.l.b16 %v4240
      %v4257 = vunpack.c.l.b16 %v4241
      %v4258 = vpack.c.b16 %v4251, %v4250
      %v4259 = vpack.c.b16 %v4253, %v4252
      %v4260 = vpack.c.b16 %v4255, %v4254
      %v4261 = vpack.c.b16 %v4257, %v4256
      %4266 = vst [vmem:[#allocation2 + $0x300] sm:$0xff] %v4258
      %4267 = vst [vmem:[#allocation2 + $0x308] sm:$0xff] %v4259
      %4268 = vst [vmem:[#allocation2 + $0x310] sm:$0xff] %v4260
      %4269 = vst [vmem:[#allocation2 + $0x318] sm:$0xff] %v4261
      %4270 = vrot.lane.b32.xlu0 %v2786, 18
      %v4271 = vpop.permute.xlu0 %4270
      %4272 = vrot.lane.b32.xlu0 %v2787, 18
      %v4273 = vpop.permute.xlu0 %4272
      %4274 = vrot.lane.b32.xlu0 %v2788, 18
      %v4275 = vpop.permute.xlu0 %4274
      %4276 = vrot.lane.b32.xlu0 %v2789, 18
      %v4277 = vpop.permute.xlu0 %4276
      %4278 = vrot.lane.b32.xlu0 %v2790, 18
      %v4279 = vpop.permute.xlu0 %4278
      %4280 = vrot.lane.b32.xlu0 %v2791, 18
      %v4281 = vpop.permute.xlu0 %4280
      %4282 = vrot.lane.b32.xlu0 %v2792, 18
      %v4283 = vpop.permute.xlu0 %4282
      %4284 = vrot.lane.b32.xlu0 %v2793, 18
      %v4285 = vpop.permute.xlu0 %4284
      %v4286 = vsel %vm1726, %v4283, %v4285
      %v4287 = vsel %vm1726, %v4281, %v4283
      %v4288 = vsel %vm1726, %v4279, %v4281
      %v4289 = vsel %vm1726, %v4277, %v4279
      %v4290 = vsel %vm1726, %v4275, %v4277
      %v4291 = vsel %vm1726, %v4273, %v4275
      %v4292 = vsel %vm1726, %v4271, %v4273
      %v4293 = vsel %vm1726, %v4285, %v4271
      %v4294 = vpack.c.bf16 %v4292, %v4292
      %v4295 = vpack.c.bf16 %v4291, %v4291
      %v4296 = vpack.c.bf16 %v4290, %v4290
      %v4297 = vpack.c.bf16 %v4289, %v4289
      %v4298 = vpack.c.bf16 %v4288, %v4288
      %v4299 = vpack.c.bf16 %v4287, %v4287
      %v4300 = vpack.c.bf16 %v4286, %v4286
      %v4301 = vpack.c.bf16 %v4293, %v4293
      %v4310 = vunpack.c.l.b16 %v4294
      %v4311 = vunpack.c.l.b16 %v4295
      %v4312 = vunpack.c.l.b16 %v4296
      %v4313 = vunpack.c.l.b16 %v4297
      %v4314 = vunpack.c.l.b16 %v4298
      %v4315 = vunpack.c.l.b16 %v4299
      %v4316 = vunpack.c.l.b16 %v4300
      %v4317 = vunpack.c.l.b16 %v4301
      %v4318 = vpack.c.b16 %v4311, %v4310
      %v4319 = vpack.c.b16 %v4313, %v4312
      %v4320 = vpack.c.b16 %v4315, %v4314
      %v4321 = vpack.c.b16 %v4317, %v4316
      %4326 = vst [vmem:[#allocation2 + $0x320] sm:$0xff] %v4318
      %4327 = vst [vmem:[#allocation2 + $0x328] sm:$0xff] %v4319
      %4328 = vst [vmem:[#allocation2 + $0x330] sm:$0xff] %v4320
      %4329 = vst [vmem:[#allocation2 + $0x338] sm:$0xff] %v4321
      %4330 = vrot.lane.b32.xlu0 %v2786, 17
      %v4331 = vpop.permute.xlu0 %4330
      %4332 = vrot.lane.b32.xlu0 %v2787, 17
      %v4333 = vpop.permute.xlu0 %4332
      %4334 = vrot.lane.b32.xlu0 %v2788, 17
      %v4335 = vpop.permute.xlu0 %4334
      %4336 = vrot.lane.b32.xlu0 %v2789, 17
      %v4337 = vpop.permute.xlu0 %4336
      %4338 = vrot.lane.b32.xlu0 %v2790, 17
      %v4339 = vpop.permute.xlu0 %4338
      %4340 = vrot.lane.b32.xlu0 %v2791, 17
      %v4341 = vpop.permute.xlu0 %4340
      %4342 = vrot.lane.b32.xlu0 %v2792, 17
      %v4343 = vpop.permute.xlu0 %4342
      %4344 = vrot.lane.b32.xlu0 %v2793, 17
      %v4345 = vpop.permute.xlu0 %4344
      %v4346 = vsel %vm1787, %v4343, %v4345
      %v4347 = vsel %vm1787, %v4341, %v4343
      %v4348 = vsel %vm1787, %v4339, %v4341
      %v4349 = vsel %vm1787, %v4337, %v4339
      %v4350 = vsel %vm1787, %v4335, %v4337
      %v4351 = vsel %vm1787, %v4333, %v4335
      %v4352 = vsel %vm1787, %v4331, %v4333
      %v4353 = vsel %vm1787, %v4345, %v4331
      %v4354 = vpack.c.bf16 %v4352, %v4352
      %v4355 = vpack.c.bf16 %v4351, %v4351
      %v4356 = vpack.c.bf16 %v4350, %v4350
      %v4357 = vpack.c.bf16 %v4349, %v4349
      %v4358 = vpack.c.bf16 %v4348, %v4348
      %v4359 = vpack.c.bf16 %v4347, %v4347
      %v4360 = vpack.c.bf16 %v4346, %v4346
      %v4361 = vpack.c.bf16 %v4353, %v4353
      %v4370 = vunpack.c.l.b16 %v4354
      %v4371 = vunpack.c.l.b16 %v4355
      %v4372 = vunpack.c.l.b16 %v4356
      %v4373 = vunpack.c.l.b16 %v4357
      %v4374 = vunpack.c.l.b16 %v4358
      %v4375 = vunpack.c.l.b16 %v4359
      %v4376 = vunpack.c.l.b16 %v4360
      %v4377 = vunpack.c.l.b16 %v4361
      %v4378 = vpack.c.b16 %v4371, %v4370
      %v4379 = vpack.c.b16 %v4373, %v4372
      %v4380 = vpack.c.b16 %v4375, %v4374
      %v4381 = vpack.c.b16 %v4377, %v4376
      %4386 = vst [vmem:[#allocation2 + $0x340] sm:$0xff] %v4378
      %4387 = vst [vmem:[#allocation2 + $0x348] sm:$0xff] %v4379
      %4388 = vst [vmem:[#allocation2 + $0x350] sm:$0xff] %v4380
      %4389 = vst [vmem:[#allocation2 + $0x358] sm:$0xff] %v4381
      %v4390 = vld [vmem:[%s3] sm:$0xff]
      %v4391 = vld [vmem:[#allocation2] sm:$0xff]
      %v4392 = vld [vmem:[#allocation2 + $0x8] sm:$0xff]
      %v4393 = vld [vmem:[#allocation2 + $0x10] sm:$0xff]
      %v4394 = vld [vmem:[#allocation2 + $0x18] sm:$0xff]
      %v4395 = vld [vmem:[#allocation2 + $0x20] sm:$0xff]
      %v4396 = vld [vmem:[#allocation2 + $0x28] sm:$0xff]
      %v4397 = vld [vmem:[#allocation2 + $0x30] sm:$0xff]
      %v4398 = vld [vmem:[#allocation2 + $0x38] sm:$0xff]
      %v4399 = vld [vmem:[#allocation2 + $0x40] sm:$0xff]
      %v4400 = vld [vmem:[#allocation2 + $0x48] sm:$0xff]
      %v4401 = vld [vmem:[#allocation2 + $0x50] sm:$0xff]
      %v4402 = vld [vmem:[#allocation2 + $0x58] sm:$0xff]
      %v4403 = vld [vmem:[#allocation2 + $0x60] sm:$0xff]
      %v4404 = vld [vmem:[#allocation2 + $0x68] sm:$0xff]
      %v4405 = vld [vmem:[#allocation2 + $0x70] sm:$0xff]
      %v4406 = vld [vmem:[#allocation2 + $0x78] sm:$0xff]
      %v4407 = vld [vmem:[#allocation2 + $0x80] sm:$0xff]
      %v4408 = vld [vmem:[#allocation2 + $0x88] sm:$0xff]
      %v4409 = vld [vmem:[#allocation2 + $0x90] sm:$0xff]
      %v4410 = vld [vmem:[#allocation2 + $0x98] sm:$0xff]
      %v4411 = vld [vmem:[#allocation2 + $0xa0] sm:$0xff]
      %v4412 = vld [vmem:[#allocation2 + $0xa8] sm:$0xff]
      %v4413 = vld [vmem:[#allocation2 + $0xb0] sm:$0xff]
      %v4414 = vld [vmem:[#allocation2 + $0xb8] sm:$0xff]
      %v4415 = vld [vmem:[#allocation2 + $0xc0] sm:$0xff]
      %v4416 = vld [vmem:[#allocation2 + $0xc8] sm:$0xff]
      %v4417 = vld [vmem:[#allocation2 + $0xd0] sm:$0xff]
      %v4418 = vld [vmem:[#allocation2 + $0xd8] sm:$0xff]
      %v4419 = vld [vmem:[#allocation2 + $0xe0] sm:$0xff]
      %v4420 = vld [vmem:[#allocation2 + $0xe8] sm:$0xff]
      %v4421 = vld [vmem:[#allocation2 + $0xf0] sm:$0xff]
      %v4422 = vld [vmem:[#allocation2 + $0xf8] sm:$0xff]
      %v4423 = vld [vmem:[#allocation2 + $0x100] sm:$0xff]
      %v4424 = vld [vmem:[#allocation2 + $0x108] sm:$0xff]
      %v4425 = vld [vmem:[#allocation2 + $0x110] sm:$0xff]
      %v4426 = vld [vmem:[#allocation2 + $0x118] sm:$0xff]
      %v4427 = vld [vmem:[#allocation2 + $0x120] sm:$0xff]
      %v4428 = vld [vmem:[#allocation2 + $0x128] sm:$0xff]
      %v4429 = vld [vmem:[#allocation2 + $0x130] sm:$0xff]
      %v4430 = vld [vmem:[#allocation2 + $0x138] sm:$0xff]
      %v4431 = vld [vmem:[#allocation2 + $0x140] sm:$0xff]
      %v4432 = vld [vmem:[#allocation2 + $0x148] sm:$0xff]
      %v4433 = vld [vmem:[#allocation2 + $0x150] sm:$0xff]
      %v4434 = vld [vmem:[#allocation2 + $0x158] sm:$0xff]
      %v4435 = vld [vmem:[#allocation2 + $0x160] sm:$0xff]
      %v4436 = vld [vmem:[#allocation2 + $0x168] sm:$0xff]
      %v4437 = vld [vmem:[#allocation2 + $0x170] sm:$0xff]
      %v4438 = vld [vmem:[#allocation2 + $0x178] sm:$0xff]
      %v4439 = vld [vmem:[#allocation2 + $0x180] sm:$0xff]
      %v4440 = vld [vmem:[#allocation2 + $0x188] sm:$0xff]
      %v4441 = vld [vmem:[#allocation2 + $0x190] sm:$0xff]
      %v4442 = vld [vmem:[#allocation2 + $0x198] sm:$0xff]
      %v4443 = vld [vmem:[#allocation2 + $0x1a0] sm:$0xff]
      %v4444 = vld [vmem:[#allocation2 + $0x1a8] sm:$0xff]
      %v4445 = vld [vmem:[#allocation2 + $0x1b0] sm:$0xff]
      %v4446 = vld [vmem:[#allocation2 + $0x1b8] sm:$0xff]
      %v4447 = vld [vmem:[#allocation2 + $0x1c0] sm:$0xff]
      %v4448 = vld [vmem:[#allocation2 + $0x1c8] sm:$0xff]
      %v4449 = vld [vmem:[#allocation2 + $0x1d0] sm:$0xff]
      %v4450 = vld [vmem:[#allocation2 + $0x1d8] sm:$0xff]
      %v4451 = vld [vmem:[#allocation2 + $0x1e0] sm:$0xff]
      %v4452 = vld [vmem:[#allocation2 + $0x1e8] sm:$0xff]
      %v4453 = vld [vmem:[#allocation2 + $0x1f0] sm:$0xff]
      %v4454 = vld [vmem:[#allocation2 + $0x1f8] sm:$0xff]
      %v4455 = vld [vmem:[#allocation2 + $0x200] sm:$0xff]
      %v4456 = vld [vmem:[#allocation2 + $0x208] sm:$0xff]
      %v4457 = vld [vmem:[#allocation2 + $0x210] sm:$0xff]
      %v4458 = vld [vmem:[#allocation2 + $0x218] sm:$0xff]
      %v4459 = vld [vmem:[#allocation2 + $0x220] sm:$0xff]
      %v4460 = vld [vmem:[#allocation2 + $0x228] sm:$0xff]
      %v4461 = vld [vmem:[#allocation2 + $0x230] sm:$0xff]
      %v4462 = vld [vmem:[#allocation2 + $0x238] sm:$0xff]
      %v4463 = vld [vmem:[#allocation2 + $0x240] sm:$0xff]
      %v4464 = vld [vmem:[#allocation2 + $0x248] sm:$0xff]
      %v4465 = vld [vmem:[#allocation2 + $0x250] sm:$0xff]
      %v4466 = vld [vmem:[#allocation2 + $0x258] sm:$0xff]
      %v4467 = vld [vmem:[#allocation2 + $0x260] sm:$0xff]
      %v4468 = vld [vmem:[#allocation2 + $0x268] sm:$0xff]
      %v4469 = vld [vmem:[#allocation2 + $0x270] sm:$0xff]
      %v4470 = vld [vmem:[#allocation2 + $0x278] sm:$0xff]
      %v4471 = vld [vmem:[#allocation2 + $0x280] sm:$0xff]
      %v4472 = vld [vmem:[#allocation2 + $0x288] sm:$0xff]
      %v4473 = vld [vmem:[#allocation2 + $0x290] sm:$0xff]
      %v4474 = vld [vmem:[#allocation2 + $0x298] sm:$0xff]
      %v4475 = vld [vmem:[#allocation2 + $0x2a0] sm:$0xff]
      %v4476 = vld [vmem:[#allocation2 + $0x2a8] sm:$0xff]
      %v4477 = vld [vmem:[#allocation2 + $0x2b0] sm:$0xff]
      %v4478 = vld [vmem:[#allocation2 + $0x2b8] sm:$0xff]
      %v4479 = vld [vmem:[#allocation2 + $0x2c0] sm:$0xff]
      %v4480 = vld [vmem:[#allocation2 + $0x2c8] sm:$0xff]
      %v4481 = vld [vmem:[#allocation2 + $0x2d0] sm:$0xff]
      %v4482 = vld [vmem:[#allocation2 + $0x2d8] sm:$0xff]
      %v4483 = vld [vmem:[#allocation2 + $0x2e0] sm:$0xff]
      %v4484 = vld [vmem:[#allocation2 + $0x2e8] sm:$0xff]
      %v4485 = vld [vmem:[#allocation2 + $0x2f0] sm:$0xff]
      %v4486 = vld [vmem:[#allocation2 + $0x2f8] sm:$0xff]
      %v4487 = vld [vmem:[#allocation2 + $0x300] sm:$0xff]
      %v4488 = vld [vmem:[#allocation2 + $0x308] sm:$0xff]
      %v4489 = vld [vmem:[#allocation2 + $0x310] sm:$0xff]
      %v4490 = vld [vmem:[#allocation2 + $0x318] sm:$0xff]
      %v4491 = vld [vmem:[#allocation2 + $0x320] sm:$0xff]
      %v4492 = vld [vmem:[#allocation2 + $0x328] sm:$0xff]
      %v4493 = vld [vmem:[#allocation2 + $0x330] sm:$0xff]
      %v4494 = vld [vmem:[#allocation2 + $0x338] sm:$0xff]
      %v4495 = vld [vmem:[#allocation2 + $0x340] sm:$0xff]
      %v4496 = vld [vmem:[#allocation2 + $0x348] sm:$0xff]
      %v4497 = vld [vmem:[#allocation2 + $0x350] sm:$0xff]
      %v4498 = vld [vmem:[#allocation2 + $0x358] sm:$0xff]
      %v4500 = vunpack.c.l.b16 %v4390
      %v4501 = vunpack.c.h.b16 %v4390
      %v4502 = vpack.c.b16 %v4500, %v4500
      %v4503 = vpack.c.b16 %v4501, %v4501
      %v4613 = vunpack.c.l.b16 %v4391
      %v4614 = vunpack.c.h.b16 %v4391
      %v4615 = vunpack.c.l.b16 %v4392
      %v4616 = vunpack.c.h.b16 %v4392
      %v4617 = vunpack.c.l.b16 %v4393
      %v4618 = vunpack.c.h.b16 %v4393
      %v4619 = vunpack.c.l.b16 %v4394
      %v4620 = vunpack.c.h.b16 %v4394
      %v4621 = vunpack.c.l.b16 %v4395
      %v4622 = vunpack.c.h.b16 %v4395
      %v4623 = vunpack.c.l.b16 %v4396
      %v4624 = vunpack.c.h.b16 %v4396
      %v4625 = vunpack.c.l.b16 %v4397
      %v4626 = vunpack.c.h.b16 %v4397
      %v4627 = vunpack.c.l.b16 %v4398
      %v4628 = vunpack.c.h.b16 %v4398
      %v4629 = vunpack.c.l.b16 %v4399
      %v4630 = vunpack.c.h.b16 %v4399
      %v4631 = vunpack.c.l.b16 %v4400
      %v4632 = vunpack.c.h.b16 %v4400
      %v4633 = vunpack.c.l.b16 %v4401
      %v4634 = vunpack.c.h.b16 %v4401
      %v4635 = vunpack.c.l.b16 %v4402
      %v4636 = vunpack.c.h.b16 %v4402
      %v4637 = vunpack.c.l.b16 %v4403
      %v4638 = vunpack.c.h.b16 %v4403
      %v4639 = vunpack.c.l.b16 %v4404
      %v4640 = vunpack.c.h.b16 %v4404
      %v4641 = vunpack.c.l.b16 %v4405
      %v4642 = vunpack.c.h.b16 %v4405
      %v4643 = vunpack.c.l.b16 %v4406
      %v4644 = vunpack.c.h.b16 %v4406
      %v4645 = vunpack.c.l.b16 %v4407
      %v4646 = vunpack.c.h.b16 %v4407
      %v4647 = vunpack.c.l.b16 %v4408
      %v4648 = vunpack.c.h.b16 %v4408
      %v4649 = vunpack.c.l.b16 %v4409
      %v4650 = vunpack.c.h.b16 %v4409
      %v4651 = vunpack.c.l.b16 %v4410
      %v4652 = vunpack.c.h.b16 %v4410
      %v4653 = vunpack.c.l.b16 %v4411
      %v4654 = vunpack.c.h.b16 %v4411
      %v4655 = vunpack.c.l.b16 %v4412
      %v4656 = vunpack.c.h.b16 %v4412
      %v4657 = vunpack.c.l.b16 %v4413
      %v4658 = vunpack.c.h.b16 %v4413
      %v4659 = vunpack.c.l.b16 %v4414
      %v4660 = vunpack.c.h.b16 %v4414
      %v4661 = vunpack.c.l.b16 %v4415
      %v4662 = vunpack.c.h.b16 %v4415
      %v4663 = vunpack.c.l.b16 %v4416
      %v4664 = vunpack.c.h.b16 %v4416
      %v4665 = vunpack.c.l.b16 %v4417
      %v4666 = vunpack.c.h.b16 %v4417
      %v4667 = vunpack.c.l.b16 %v4418
      %v4668 = vunpack.c.h.b16 %v4418
      %v4669 = vunpack.c.l.b16 %v4419
      %v4670 = vunpack.c.h.b16 %v4419
      %v4671 = vunpack.c.l.b16 %v4420
      %v4672 = vunpack.c.h.b16 %v4420
      %v4673 = vunpack.c.l.b16 %v4421
      %v4674 = vunpack.c.h.b16 %v4421
      %v4675 = vunpack.c.l.b16 %v4422
      %v4676 = vunpack.c.h.b16 %v4422
      %v4677 = vunpack.c.l.b16 %v4423
      %v4678 = vunpack.c.h.b16 %v4423
      %v4679 = vunpack.c.l.b16 %v4424
      %v4680 = vunpack.c.h.b16 %v4424
      %v4681 = vunpack.c.l.b16 %v4425
      %v4682 = vunpack.c.h.b16 %v4425
      %v4683 = vunpack.c.l.b16 %v4426
      %v4684 = vunpack.c.h.b16 %v4426
      %v4685 = vunpack.c.l.b16 %v4427
      %v4686 = vunpack.c.h.b16 %v4427
      %v4687 = vunpack.c.l.b16 %v4428
      %v4688 = vunpack.c.h.b16 %v4428
      %v4689 = vunpack.c.l.b16 %v4429
      %v4690 = vunpack.c.h.b16 %v4429
      %v4691 = vunpack.c.l.b16 %v4430
      %v4692 = vunpack.c.h.b16 %v4430
      %v4693 = vunpack.c.l.b16 %v4431
      %v4694 = vunpack.c.h.b16 %v4431
      %v4695 = vunpack.c.l.b16 %v4432
      %v4696 = vunpack.c.h.b16 %v4432
      %v4697 = vunpack.c.l.b16 %v4433
      %v4698 = vunpack.c.h.b16 %v4433
      %v4699 = vunpack.c.l.b16 %v4434
      %v4700 = vunpack.c.h.b16 %v4434
      %v4701 = vunpack.c.l.b16 %v4435
      %v4702 = vunpack.c.h.b16 %v4435
      %v4703 = vunpack.c.l.b16 %v4436
      %v4704 = vunpack.c.h.b16 %v4436
      %v4705 = vunpack.c.l.b16 %v4437
      %v4706 = vunpack.c.h.b16 %v4437
      %v4707 = vunpack.c.l.b16 %v4438
      %v4708 = vunpack.c.h.b16 %v4438
      %v4709 = vunpack.c.l.b16 %v4439
      %v4710 = vunpack.c.h.b16 %v4439
      %v4711 = vunpack.c.l.b16 %v4440
      %v4712 = vunpack.c.h.b16 %v4440
      %v4713 = vunpack.c.l.b16 %v4441
      %v4714 = vunpack.c.h.b16 %v4441
      %v4715 = vunpack.c.l.b16 %v4442
      %v4716 = vunpack.c.h.b16 %v4442
      %v4717 = vunpack.c.l.b16 %v4443
      %v4718 = vunpack.c.h.b16 %v4443
      %v4719 = vunpack.c.l.b16 %v4444
      %v4720 = vunpack.c.h.b16 %v4444
      %v4721 = vunpack.c.l.b16 %v4445
      %v4722 = vunpack.c.h.b16 %v4445
      %v4723 = vunpack.c.l.b16 %v4446
      %v4724 = vunpack.c.h.b16 %v4446
      %v4725 = vunpack.c.l.b16 %v4447
      %v4726 = vunpack.c.h.b16 %v4447
      %v4727 = vunpack.c.l.b16 %v4448
      %v4728 = vunpack.c.h.b16 %v4448
      %v4729 = vunpack.c.l.b16 %v4449
      %v4730 = vunpack.c.h.b16 %v4449
      %v4731 = vunpack.c.l.b16 %v4450
      %v4732 = vunpack.c.h.b16 %v4450
      %v4733 = vunpack.c.l.b16 %v4451
      %v4734 = vunpack.c.h.b16 %v4451
      %v4735 = vunpack.c.l.b16 %v4452
      %v4736 = vunpack.c.h.b16 %v4452
      %v4737 = vunpack.c.l.b16 %v4453
      %v4738 = vunpack.c.h.b16 %v4453
      %v4739 = vunpack.c.l.b16 %v4454
      %v4740 = vunpack.c.h.b16 %v4454
      %v4741 = vunpack.c.l.b16 %v4455
      %v4742 = vunpack.c.h.b16 %v4455
      %v4743 = vunpack.c.l.b16 %v4456
      %v4744 = vunpack.c.h.b16 %v4456
      %v4745 = vunpack.c.l.b16 %v4457
      %v4746 = vunpack.c.h.b16 %v4457
      %v4747 = vunpack.c.l.b16 %v4458
      %v4748 = vunpack.c.h.b16 %v4458
      %v4749 = vunpack.c.l.b16 %v4459
      %v4750 = vunpack.c.h.b16 %v4459
      %v4751 = vunpack.c.l.b16 %v4460
      %v4752 = vunpack.c.h.b16 %v4460
      %v4753 = vunpack.c.l.b16 %v4461
      %v4754 = vunpack.c.h.b16 %v4461
      %v4755 = vunpack.c.l.b16 %v4462
      %v4756 = vunpack.c.h.b16 %v4462
      %v4757 = vunpack.c.l.b16 %v4463
      %v4758 = vunpack.c.h.b16 %v4463
      %v4759 = vunpack.c.l.b16 %v4464
      %v4760 = vunpack.c.h.b16 %v4464
      %v4761 = vunpack.c.l.b16 %v4465
      %v4762 = vunpack.c.h.b16 %v4465
      %v4763 = vunpack.c.l.b16 %v4466
      %v4764 = vunpack.c.h.b16 %v4466
      %v4765 = vunpack.c.l.b16 %v4467
      %v4766 = vunpack.c.h.b16 %v4467
      %v4767 = vunpack.c.l.b16 %v4468
      %v4768 = vunpack.c.h.b16 %v4468
      %v4769 = vunpack.c.l.b16 %v4469
      %v4770 = vunpack.c.h.b16 %v4469
      %v4771 = vunpack.c.l.b16 %v4470
      %v4772 = vunpack.c.h.b16 %v4470
      %v4773 = vunpack.c.l.b16 %v4471
      %v4774 = vunpack.c.h.b16 %v4471
      %v4775 = vunpack.c.l.b16 %v4472
      %v4776 = vunpack.c.h.b16 %v4472
      %v4777 = vunpack.c.l.b16 %v4473
      %v4778 = vunpack.c.h.b16 %v4473
      %v4779 = vunpack.c.l.b16 %v4474
      %v4780 = vunpack.c.h.b16 %v4474
      %v4781 = vunpack.c.l.b16 %v4475
      %v4782 = vunpack.c.h.b16 %v4475
      %v4783 = vunpack.c.l.b16 %v4476
      %v4784 = vunpack.c.h.b16 %v4476
      %v4785 = vunpack.c.l.b16 %v4477
      %v4786 = vunpack.c.h.b16 %v4477
      %v4787 = vunpack.c.l.b16 %v4478
      %v4788 = vunpack.c.h.b16 %v4478
      %v4789 = vunpack.c.l.b16 %v4479
      %v4790 = vunpack.c.h.b16 %v4479
      %v4791 = vunpack.c.l.b16 %v4480
      %v4792 = vunpack.c.h.b16 %v4480
      %v4793 = vunpack.c.l.b16 %v4481
      %v4794 = vunpack.c.h.b16 %v4481
      %v4795 = vunpack.c.l.b16 %v4482
      %v4796 = vunpack.c.h.b16 %v4482
      %v4797 = vunpack.c.l.b16 %v4483
      %v4798 = vunpack.c.h.b16 %v4483
      %v4799 = vunpack.c.l.b16 %v4484
      %v4800 = vunpack.c.h.b16 %v4484
      %v4801 = vunpack.c.l.b16 %v4485
      %v4802 = vunpack.c.h.b16 %v4485
      %v4803 = vunpack.c.l.b16 %v4486
      %v4804 = vunpack.c.h.b16 %v4486
      %v4805 = vunpack.c.l.b16 %v4487
      %v4806 = vunpack.c.h.b16 %v4487
      %v4807 = vunpack.c.l.b16 %v4488
      %v4808 = vunpack.c.h.b16 %v4488
      %v4809 = vunpack.c.l.b16 %v4489
      %v4810 = vunpack.c.h.b16 %v4489
      %v4811 = vunpack.c.l.b16 %v4490
      %v4812 = vunpack.c.h.b16 %v4490
      %v4813 = vunpack.c.l.b16 %v4491
      %v4814 = vunpack.c.h.b16 %v4491
      %v4815 = vunpack.c.l.b16 %v4492
      %v4816 = vunpack.c.h.b16 %v4492
      %v4817 = vunpack.c.l.b16 %v4493
      %v4818 = vunpack.c.h.b16 %v4493
      %v4819 = vunpack.c.l.b16 %v4494
      %v4820 = vunpack.c.h.b16 %v4494
      %v4821 = vunpack.c.l.b16 %v4495
      %v4822 = vunpack.c.h.b16 %v4495
      %v4823 = vunpack.c.l.b16 %v4496
      %v4824 = vunpack.c.h.b16 %v4496
      %v4825 = vunpack.c.l.b16 %v4497
      %v4826 = vunpack.c.h.b16 %v4497
      %v4827 = vunpack.c.l.b16 %v4498
      %v4828 = vunpack.c.h.b16 %v4498
      %v4829 = vpack.c.b16 %v4621, %v4613
      %v4830 = vpack.c.b16 %v4622, %v4614
      %v4831 = vpack.c.b16 %v4623, %v4615
      %v4832 = vpack.c.b16 %v4624, %v4616
      %v4833 = vpack.c.b16 %v4625, %v4617
      %v4834 = vpack.c.b16 %v4626, %v4618
      %v4835 = vpack.c.b16 %v4627, %v4619
      %v4836 = vpack.c.b16 %v4628, %v4620
      %v4837 = vpack.c.b16 %v4637, %v4629
      %v4838 = vpack.c.b16 %v4638, %v4630
      %v4839 = vpack.c.b16 %v4639, %v4631
      %v4840 = vpack.c.b16 %v4640, %v4632
      %v4841 = vpack.c.b16 %v4641, %v4633
      %v4842 = vpack.c.b16 %v4642, %v4634
      %v4843 = vpack.c.b16 %v4643, %v4635
      %v4844 = vpack.c.b16 %v4644, %v4636
      %v4845 = vpack.c.b16 %v4653, %v4645
      %v4846 = vpack.c.b16 %v4654, %v4646
      %v4847 = vpack.c.b16 %v4655, %v4647
      %v4848 = vpack.c.b16 %v4656, %v4648
      %v4849 = vpack.c.b16 %v4657, %v4649
      %v4850 = vpack.c.b16 %v4658, %v4650
      %v4851 = vpack.c.b16 %v4659, %v4651
      %v4852 = vpack.c.b16 %v4660, %v4652
      %v4853 = vpack.c.b16 %v4669, %v4661
      %v4854 = vpack.c.b16 %v4670, %v4662
      %v4855 = vpack.c.b16 %v4671, %v4663
      %v4856 = vpack.c.b16 %v4672, %v4664
      %v4857 = vpack.c.b16 %v4673, %v4665
      %v4858 = vpack.c.b16 %v4674, %v4666
      %v4859 = vpack.c.b16 %v4675, %v4667
      %v4860 = vpack.c.b16 %v4676, %v4668
      %v4861 = vpack.c.b16 %v4685, %v4677
      %v4862 = vpack.c.b16 %v4686, %v4678
      %v4863 = vpack.c.b16 %v4687, %v4679
      %v4864 = vpack.c.b16 %v4688, %v4680
      %v4865 = vpack.c.b16 %v4689, %v4681
      %v4866 = vpack.c.b16 %v4690, %v4682
      %v4867 = vpack.c.b16 %v4691, %v4683
      %v4868 = vpack.c.b16 %v4692, %v4684
      %v4869 = vpack.c.b16 %v4701, %v4693
      %v4870 = vpack.c.b16 %v4702, %v4694
      %v4871 = vpack.c.b16 %v4703, %v4695
      %v4872 = vpack.c.b16 %v4704, %v4696
      %v4873 = vpack.c.b16 %v4705, %v4697
      %v4874 = vpack.c.b16 %v4706, %v4698
      %v4875 = vpack.c.b16 %v4707, %v4699
      %v4876 = vpack.c.b16 %v4708, %v4700
      %v4877 = vpack.c.b16 %v4717, %v4709
      %v4878 = vpack.c.b16 %v4718, %v4710
      %v4879 = vpack.c.b16 %v4719, %v4711
      %v4880 = vpack.c.b16 %v4720, %v4712
      %v4881 = vpack.c.b16 %v4721, %v4713
      %v4882 = vpack.c.b16 %v4722, %v4714
      %v4883 = vpack.c.b16 %v4723, %v4715
      %v4884 = vpack.c.b16 %v4724, %v4716
      %v4885 = vpack.c.b16 %v4733, %v4725
      %v4886 = vpack.c.b16 %v4734, %v4726
      %v4887 = vpack.c.b16 %v4735, %v4727
      %v4888 = vpack.c.b16 %v4736, %v4728
      %v4889 = vpack.c.b16 %v4737, %v4729
      %v4890 = vpack.c.b16 %v4738, %v4730
      %v4891 = vpack.c.b16 %v4739, %v4731
      %v4892 = vpack.c.b16 %v4740, %v4732
      %v4893 = vpack.c.b16 %v4749, %v4741
      %v4894 = vpack.c.b16 %v4750, %v4742
      %v4895 = vpack.c.b16 %v4751, %v4743
      %v4896 = vpack.c.b16 %v4752, %v4744
      %v4897 = vpack.c.b16 %v4753, %v4745
      %v4898 = vpack.c.b16 %v4754, %v4746
      %v4899 = vpack.c.b16 %v4755, %v4747
      %v4900 = vpack.c.b16 %v4756, %v4748
      %v4901 = vpack.c.b16 %v4765, %v4757
      %v4902 = vpack.c.b16 %v4766, %v4758
      %v4903 = vpack.c.b16 %v4767, %v4759
      %v4904 = vpack.c.b16 %v4768, %v4760
      %v4905 = vpack.c.b16 %v4769, %v4761
      %v4906 = vpack.c.b16 %v4770, %v4762
      %v4907 = vpack.c.b16 %v4771, %v4763
      %v4908 = vpack.c.b16 %v4772, %v4764
      %v4909 = vpack.c.b16 %v4781, %v4773
      %v4910 = vpack.c.b16 %v4782, %v4774
      %v4911 = vpack.c.b16 %v4783, %v4775
      %v4912 = vpack.c.b16 %v4784, %v4776
      %v4913 = vpack.c.b16 %v4785, %v4777
      %v4914 = vpack.c.b16 %v4786, %v4778
      %v4915 = vpack.c.b16 %v4787, %v4779
      %v4916 = vpack.c.b16 %v4788, %v4780
      %v4917 = vpack.c.b16 %v4797, %v4789
      %v4918 = vpack.c.b16 %v4798, %v4790
      %v4919 = vpack.c.b16 %v4799, %v4791
      %v4920 = vpack.c.b16 %v4800, %v4792
      %v4921 = vpack.c.b16 %v4801, %v4793
      %v4922 = vpack.c.b16 %v4802, %v4794
      %v4923 = vpack.c.b16 %v4803, %v4795
      %v4924 = vpack.c.b16 %v4804, %v4796
      %v4925 = vpack.c.b16 %v4813, %v4805
      %v4926 = vpack.c.b16 %v4814, %v4806
      %v4927 = vpack.c.b16 %v4815, %v4807
      %v4928 = vpack.c.b16 %v4816, %v4808
      %v4929 = vpack.c.b16 %v4817, %v4809
      %v4930 = vpack.c.b16 %v4818, %v4810
      %v4931 = vpack.c.b16 %v4819, %v4811
      %v4932 = vpack.c.b16 %v4820, %v4812
      %v4933 = vpack.c.b16 %v4821, %v4821
      %v4934 = vpack.c.b16 %v4822, %v4822
      %v4935 = vpack.c.b16 %v4823, %v4823
      %v4936 = vpack.c.b16 %v4824, %v4824
      %v4937 = vpack.c.b16 %v4825, %v4825
      %v4938 = vpack.c.b16 %v4826, %v4826
      %v4939 = vpack.c.b16 %v4827, %v4827
      %v4940 = vpack.c.b16 %v4828, %v4828
      %v5046 = vsel %vm2487, %v4503, 0
      %v5049 = vsel %vm2491, %v4933, 0
      %v5052 = vsel %vm2491, %v4934, 0
      %v5055 = vsel %vm2491, %v4935, 0
      %v5058 = vsel %vm2491, %v4936, 0
      %v5061 = vsel %vm2491, %v4937, 0
      %v5064 = vsel %vm2491, %v4938, 0
      %v5067 = vsel %vm2491, %v4939, 0
      %v5070 = vsel %vm2491, %v4940, 0
      %5072 = vmatprep.subr.bf16.mxu0 %v4830
      %5073 = vmatpush1.bf16.msra.mxu0 %v4829
      %5074 = vmatprep.subr.bf16.mxu0 %v4838
      %5075 = vmatpush1.bf16.msra.mxu0 %v4837
      %5076 = vmatprep.subr.bf16.mxu0 %v4846
      %5077 = vmatpush1.bf16.msra.mxu0 %v4845
      %5078 = vmatprep.subr.bf16.mxu0 %v4854
      %5079 = vmatpush1.bf16.msra.mxu0 %v4853
      %5080 = vmatprep.subr.bf16.mxu0 %v4862
      %5081 = vmatpush1.bf16.msra.mxu0 %v4861
      %5082 = vmatprep.subr.bf16.mxu0 %v4870
      %5083 = vmatpush1.bf16.msra.mxu0 %v4869
      %5084 = vmatprep.subr.bf16.mxu0 %v4878
      %5085 = vmatpush1.bf16.msra.mxu0 %v4877
      %5086 = vmatprep.subr.bf16.mxu0 %v4886
      %5087 = vmatpush1.bf16.msra.mxu0 %v4885
      %5088 = vmatprep.subr.bf16.mxu0 %v4894
      %5089 = vmatpush1.bf16.msra.mxu0 %v4893
      %5090 = vmatprep.subr.bf16.mxu0 %v4902
      %5091 = vmatpush1.bf16.msra.mxu0 %v4901
      %5092 = vmatprep.subr.bf16.mxu0 %v4910
      %5093 = vmatpush1.bf16.msra.mxu0 %v4909
      %5094 = vmatprep.subr.bf16.mxu0 %v4918
      %5095 = vmatpush1.bf16.msra.mxu0 %v4917
      %5096 = vmatprep.subr.bf16.mxu0 %v4926
      %5097 = vmatpush1.bf16.msra.mxu0 %v4925
      %5098 = vmatprep.subr.bf16.mxu0 %v5052
      %5099 = vmatpush1.bf16.msra.mxu0 %v5049
      %5100 = vmatprep.subr.bf16.mxu0 0
      %5101 = vmatpush1.bf16.msra.mxu0 0
      %5102 = vmatprep.subr.bf16.mxu0 0
      %5103 = vmatpush1.bf16.msra.mxu0 0
      %5104 = vmatprep.mubr.bf16.mxu0 %v5046
      %5105 = vmatmul.mubr.bf16.gmra.mrb[0].mxu0 %v4502
      %v5106 = vpop.f32.mrb[0].mxu0
      %v5107 = vadd.f32 0.0, %v5106
      %v5108 = vpop.f32.mrb[0].mxu0
      %v5109 = vadd.f32 0.0, %v5108
      %v5110 = vpop.f32.mrb[0].mxu0
      %v5111 = vpop.f32.mrb[0].mxu0
      %5112 = vdwg.mxu0
      %5113 = vmatprep.subr.bf16.mxu0 %v4832
      %5114 = vmatpush1.bf16.msra.mxu0 %v4831
      %5115 = vmatprep.subr.bf16.mxu0 %v4840
      %5116 = vmatpush1.bf16.msra.mxu0 %v4839
      %5117 = vmatprep.subr.bf16.mxu0 %v4848
      %5118 = vmatpush1.bf16.msra.mxu0 %v4847
      %5119 = vmatprep.subr.bf16.mxu0 %v4856
      %5120 = vmatpush1.bf16.msra.mxu0 %v4855
      %5121 = vmatprep.subr.bf16.mxu0 %v4864
      %5122 = vmatpush1.bf16.msra.mxu0 %v4863
      %5123 = vmatprep.subr.bf16.mxu0 %v4872
      %5124 = vmatpush1.bf16.msra.mxu0 %v4871
      %5125 = vmatprep.subr.bf16.mxu0 %v4880
      %5126 = vmatpush1.bf16.msra.mxu0 %v4879
      %5127 = vmatprep.subr.bf16.mxu0 %v4888
      %5128 = vmatpush1.bf16.msra.mxu0 %v4887
      %5129 = vmatprep.subr.bf16.mxu0 %v4896
      %5130 = vmatpush1.bf16.msra.mxu0 %v4895
      %5131 = vmatprep.subr.bf16.mxu0 %v4904
      %5132 = vmatpush1.bf16.msra.mxu0 %v4903
      %5133 = vmatprep.subr.bf16.mxu0 %v4912
      %5134 = vmatpush1.bf16.msra.mxu0 %v4911
      %5135 = vmatprep.subr.bf16.mxu0 %v4920
      %5136 = vmatpush1.bf16.msra.mxu0 %v4919
      %5137 = vmatprep.subr.bf16.mxu0 %v4928
      %5138 = vmatpush1.bf16.msra.mxu0 %v4927
      %5139 = vmatprep.subr.bf16.mxu0 %v5058
      %5140 = vmatpush1.bf16.msra.mxu0 %v5055
      %5141 = vmatprep.subr.bf16.mxu0 0
      %5142 = vmatpush1.bf16.msra.mxu0 0
      %5143 = vmatprep.subr.bf16.mxu0 0
      %5144 = vmatpush1.bf16.msra.mxu0 0
      %5145 = vmatprep.mubr.bf16.mxu0 %v5046
      %5146 = vmatmul.mubr.bf16.gmra.mrb[0].mxu0 %v4502
      %v5147 = vpop.f32.mrb[0].mxu0
      %v5148 = vadd.f32 0.0, %v5147
      %v5149 = vpop.f32.mrb[0].mxu0
      %v5150 = vadd.f32 0.0, %v5149
      %v5151 = vpop.f32.mrb[0].mxu0
      %v5152 = vpop.f32.mrb[0].mxu0
      %5153 = vdwg.mxu0
      %5154 = vmatprep.subr.bf16.mxu0 %v4834
      %5155 = vmatpush1.bf16.msra.mxu0 %v4833
      %5156 = vmatprep.subr.bf16.mxu0 %v4842
      %5157 = vmatpush1.bf16.msra.mxu0 %v4841
      %5158 = vmatprep.subr.bf16.mxu0 %v4850
      %5159 = vmatpush1.bf16.msra.mxu0 %v4849
      %5160 = vmatprep.subr.bf16.mxu0 %v4858
      %5161 = vmatpush1.bf16.msra.mxu0 %v4857
      %5162 = vmatprep.subr.bf16.mxu0 %v4866
      %5163 = vmatpush1.bf16.msra.mxu0 %v4865
      %5164 = vmatprep.subr.bf16.mxu0 %v4874
      %5165 = vmatpush1.bf16.msra.mxu0 %v4873
      %5166 = vmatprep.subr.bf16.mxu0 %v4882
      %5167 = vmatpush1.bf16.msra.mxu0 %v4881
      %5168 = vmatprep.subr.bf16.mxu0 %v4890
      %5169 = vmatpush1.bf16.msra.mxu0 %v4889
      %5170 = vmatprep.subr.bf16.mxu0 %v4898
      %5171 = vmatpush1.bf16.msra.mxu0 %v4897
      %5172 = vmatprep.subr.bf16.mxu0 %v4906
      %5173 = vmatpush1.bf16.msra.mxu0 %v4905
      %5174 = vmatprep.subr.bf16.mxu0 %v4914
      %5175 = vmatpush1.bf16.msra.mxu0 %v4913
      %5176 = vmatprep.subr.bf16.mxu0 %v4922
      %5177 = vmatpush1.bf16.msra.mxu0 %v4921
      %5178 = vmatprep.subr.bf16.mxu0 %v4930
      %5179 = vmatpush1.bf16.msra.mxu0 %v4929
      %5180 = vmatprep.subr.bf16.mxu0 %v5064
      %5181 = vmatpush1.bf16.msra.mxu0 %v5061
      %5182 = vmatprep.subr.bf16.mxu0 0
      %5183 = vmatpush1.bf16.msra.mxu0 0
      %5184 = vmatprep.subr.bf16.mxu0 0
      %5185 = vmatpush1.bf16.msra.mxu0 0
      %5186 = vmatprep.mubr.bf16.mxu0 %v5046
      %5187 = vmatmul.mubr.bf16.gmra.mrb[0].mxu0 %v4502
      %v5188 = vpop.f32.mrb[0].mxu0
      %v5189 = vadd.f32 0.0, %v5188
      %v5190 = vpop.f32.mrb[0].mxu0
      %v5191 = vadd.f32 0.0, %v5190
      %v5192 = vpop.f32.mrb[0].mxu0
      %v5193 = vpop.f32.mrb[0].mxu0
      %5194 = vdwg.mxu0
      %5195 = vmatprep.subr.bf16.mxu0 %v4836
      %5196 = vmatpush1.bf16.msra.mxu0 %v4835
      %5197 = vmatprep.subr.bf16.mxu0 %v4844
      %5198 = vmatpush1.bf16.msra.mxu0 %v4843
      %5199 = vmatprep.subr.bf16.mxu0 %v4852
      %5200 = vmatpush1.bf16.msra.mxu0 %v4851
      %5201 = vmatprep.subr.bf16.mxu0 %v4860
      %5202 = vmatpush1.bf16.msra.mxu0 %v4859
      %5203 = vmatprep.subr.bf16.mxu0 %v4868
      %5204 = vmatpush1.bf16.msra.mxu0 %v4867
      %5205 = vmatprep.subr.bf16.mxu0 %v4876
      %5206 = vmatpush1.bf16.msra.mxu0 %v4875
      %5207 = vmatprep.subr.bf16.mxu0 %v4884
      %5208 = vmatpush1.bf16.msra.mxu0 %v4883
      %5209 = vmatprep.subr.bf16.mxu0 %v4892
      %5210 = vmatpush1.bf16.msra.mxu0 %v4891
      %5211 = vmatprep.subr.bf16.mxu0 %v4900
      %5212 = vmatpush1.bf16.msra.mxu0 %v4899
      %5213 = vmatprep.subr.bf16.mxu0 %v4908
      %5214 = vmatpush1.bf16.msra.mxu0 %v4907
      %5215 = vmatprep.subr.bf16.mxu0 %v4916
      %5216 = vmatpush1.bf16.msra.mxu0 %v4915
      %5217 = vmatprep.subr.bf16.mxu0 %v4924
      %5218 = vmatpush1.bf16.msra.mxu0 %v4923
      %5219 = vmatprep.subr.bf16.mxu0 %v4932
      %5220 = vmatpush1.bf16.msra.mxu0 %v4931
      %5221 = vmatprep.subr.bf16.mxu0 %v5070
      %5222 = vmatpush1.bf16.msra.mxu0 %v5067
      %5223 = vmatprep.subr.bf16.mxu0 0
      %5224 = vmatpush1.bf16.msra.mxu0 0
      %5225 = vmatprep.subr.bf16.mxu0 0
      %5226 = vmatpush1.bf16.msra.mxu0 0
      %5227 = vmatprep.mubr.bf16.mxu0 %v5046
      %5228 = vmatmul.mubr.bf16.gmra.mrb[0].mxu0 %v4502
      %v5229 = vpop.f32.mrb[0].mxu0
      %v5230 = vadd.f32 0.0, %v5229
      %v5231 = vpop.f32.mrb[0].mxu0
      %v5232 = vadd.f32 0.0, %v5231
      %v5233 = vpop.f32.mrb[0].mxu0
      %v5234 = vpop.f32.mrb[0].mxu0
      %5235 = vdwg.mxu0
      %v5236 = vmul.f32 %v5107, %v2684
      %v5237 = vmul.f32 %v5109, %v2688
      %v5238 = vmul.f32 %v5148, %v2692
      %v5239 = vmul.f32 %v5150, %v2696
      %v5240 = vmul.f32 %v5189, %v2700
      %v5241 = vmul.f32 %v5191, %v2704
      %v5242 = vmul.f32 %v5230, %v2708
      %v5243 = vmul.f32 %v5232, %v2712
      %v5244 = vadd.f32 %v5236, %v5237
      %v5245 = vadd.f32 %v5244, %v5238
      %v5246 = vadd.f32 %v5245, %v5239
      %v5247 = vadd.f32 %v5246, %v5240
      %v5248 = vadd.f32 %v5247, %v5241
      %v5249 = vadd.f32 %v5248, %v5242
      %v5250 = vadd.f32 %v5249, %v5243
      %5251 = vadd.xlane.f32.xlu0 %v5250
      %v5252 = vpop.xlane.xlu0 %5251
      %v5253 = vmul.f32 %v5252, 0.001953125
      %v5254 = vmul.f32 %v5236, %v5107
      %v5255 = vmul.f32 %v5237, %v5109
      %v5256 = vmul.f32 %v5238, %v5148
      %v5257 = vmul.f32 %v5239, %v5150
      %v5258 = vmul.f32 %v5240, %v5189
      %v5259 = vmul.f32 %v5241, %v5191
      %v5260 = vmul.f32 %v5242, %v5230
      %v5261 = vmul.f32 %v5243, %v5232
      %v5262 = vadd.f32 %v5254, %v5255
      %v5263 = vadd.f32 %v5262, %v5256
      %v5264 = vadd.f32 %v5263, %v5257
      %v5265 = vadd.f32 %v5264, %v5258
      %v5266 = vadd.f32 %v5265, %v5259
      %v5267 = vadd.f32 %v5266, %v5260
      %v5268 = vadd.f32 %v5267, %v5261
      %5269 = vadd.xlane.f32.xlu0 %v5268
      %v5270 = vpop.xlane.xlu0 %5269
      %v5271 = vmul.f32 %v5270, 0.001953125
      %v5272 = vmul.f32 %v5253, %v5253
      %v5273 = vsub.f32 %v5271, %v5272
      %v5274 = vmax.f32 %v5273, 0.0
      %v5275 = vsub.f32 %v5107, %v5253
      %v5276 = vsub.f32 %v5109, %v5253
      %v5277 = vsub.f32 %v5148, %v5253
      %v5278 = vsub.f32 %v5150, %v5253
      %v5279 = vsub.f32 %v5189, %v5253
      %v5280 = vsub.f32 %v5191, %v5253
      %v5281 = vsub.f32 %v5230, %v5253
      %v5282 = vsub.f32 %v5232, %v5253
      %v5283 = vadd.f32 %v5274, 1e-05
      %v5284 = vrsqrt.pop %v5283
      %v5285 = vmul.f32 %v5275, %v5284
      %v5286 = vmul.f32 %v5276, %v5284
      %v5287 = vmul.f32 %v5277, %v5284
      %v5288 = vmul.f32 %v5278, %v5284
      %v5289 = vmul.f32 %v5279, %v5284
      %v5290 = vmul.f32 %v5280, %v5284
      %v5291 = vmul.f32 %v5281, %v5284
      %v5292 = vmul.f32 %v5282, %v5284
      %v5293 = vmax.f32 %v5285, 0.0
      %v5294 = vmax.f32 %v5286, 0.0
      %v5295 = vmax.f32 %v5287, 0.0
      %v5296 = vmax.f32 %v5288, 0.0
      %v5297 = vmax.f32 %v5289, 0.0
      %v5298 = vmax.f32 %v5290, 0.0
      %v5299 = vmax.f32 %v5291, 0.0
      %v5300 = vmax.f32 %v5292, 0.0
      %v5301 = vmul.f32 %v5293, %v2684
      %v5302 = vmul.f32 %v5294, %v2688
      %v5303 = vmul.f32 %v5295, %v2692
      %v5304 = vmul.f32 %v5296, %v2696
      %v5305 = vmul.f32 %v5297, %v2700
      %v5306 = vmul.f32 %v5298, %v2704
      %v5307 = vmul.f32 %v5299, %v2708
      %v5308 = vmul.f32 %v5300, %v2712
      %5309 = vst [vmem:[%s197] sm:$0xff] %v5301
      %5310 = vst [vmem:[%s197 + $0x8] sm:$0xff] %v5302
      %5311 = vst [vmem:[%s197 + $0x10] sm:$0xff] %v5303
      %5312 = vst [vmem:[%s197 + $0x18] sm:$0xff] %v5304
      %5313 = vst [vmem:[%s197 + $0x20] sm:$0xff] %v5305
      %5314 = vst [vmem:[%s197 + $0x28] sm:$0xff] %v5306
      %5315 = vst [vmem:[%s197 + $0x30] sm:$0xff] %v5307
      %5316 = vst [vmem:[%s197 + $0x38] sm:$0xff] %v5308
      %p5317 = scmp.lt.s32.totalorder %s15, 1
      %s5318 = scalar_select %p5317, %s15, 1
      %s5319 = smul.addr %s5318, 8
      %s5320 = smul.addr %s5319, 8
      %s5321 = scalar_lea.vmem %s4, %s5320
      // Predicated region
      $region37: #{double_conv3d_pallas.1} parent=35 // pred_check
        %p5322 = pneg %p122
      $region38: #{double_conv3d_pallas.1} parent=35 // pred_check_branch
        %5324 = sbr.rel (%p5322) target = $region40
      $region39: #{double_conv3d_pallas.1} parent=35 // pred_region
        _
      $region40: #{double_conv3d_pallas.1} parent=35 // pred_fallthru
        _
    $region36: #{double_conv3d_pallas.1} parent=5 // pred_fallthru
      _
    %p5325 = scmp.le.s32.totalorder 2, %s10
    // Predicated region
    $region41: #{double_conv3d_pallas.1} parent=5 // pred_check
      %p5326 = pneg %p5325
    $region42: #{double_conv3d_pallas.1} parent=5 // pred_check_branch
      %5328 = sbr.rel (%p5326) target = $region44
    $region43: #{double_conv3d_pallas.1} parent=5 // pred_region
      %s5329 = ssub.s32 %s10, 2
      // Predicated region
      $region45: #{double_conv3d_pallas.1} parent=43 // pred_check
        %p5330 = pneg %p128
      $region46: #{double_conv3d_pallas.1} parent=43 // pred_check_branch
        %5332 = sbr.rel (%p5330) target = $region48
      $region47: #{double_conv3d_pallas.1} parent=43 // pred_region
        %p5333 = scmp.lt.s32.totalorder %s16, 1
        %s5334 = scalar_select %p5333, %s16, 1
        %s5335 = smul.addr %s5334, 8
        %s5336 = smul.addr %s5335, 8
        %s5337 = scalar_lea.vmem %s4, %s5336
      $region48: #{double_conv3d_pallas.1} parent=43 // pred_fallthru
        _
    $region44: #{double_conv3d_pallas.1} parent=5 // pred_fallthru
      _
  $region6: #{double_conv3d_pallas.1} parent=0 // loop_footer
    %s14 = sadd.s32 1, %s10
  $region7: #{double_conv3d_pallas.1} parent=0 // loop_footer_branch
    %9 = sbr.rel target = $region3
  $region8: #{double_conv3d_pallas.1} parent=0 // loop_exit
    _

</llo_original>
